<compile_context>
chip_gen: v6e
topology: v6e:2x2x1
jax: 0.10.0
libtpu: 0.0.40
codegen_flags: <defaults>
</compile_context>

<pallas_src>
import jax
import jax.numpy as jnp
import numpy as np
from jax import lax
from jax.experimental import pallas as pl
from jax.experimental.pallas import tpu as pltpu


def _encoder_kernel(x_ref, w1_ref, b1_ref, w2_ref, b2_ref, o_ref,
                    xpad_ref, p1_ref, ypad_ref, p2_ref):
    """Fused StructureEncoder forward for ONE batch element.

    x_ref   : (1, H, W, Cin)          NHWC input tile
    w1_ref  : (9*Cin, C1)             conv1 weights, tap-major im2col layout
    b1_ref  : (1, C1)
    w2_ref  : (9*C1, C2)              conv2 weights, tap-major im2col layout
    b2_ref  : (1, C2)
    o_ref   : (1, H//4 * W//4, C2)
    scratch : xpad (H+2, W+2, Cin), p1 (H*W, 9*Cin),
              ypad (H//2+2, W//2+2, C1), p2 (H//2*W//2, 9*C1)   -- all VMEM
    """
    h, w, cin = x_ref.shape[1], x_ref.shape[2], x_ref.shape[3]
    c1 = w1_ref.shape[1]
    c2 = w2_ref.shape[1]
    h2, w2 = h // 2, w // 2
    h4, w4 = h2 // 2, w2 // 2
    f32 = jnp.float32

    # ---------------- layer 1: conv3x3('same') + bias + ReLU ----------------
    # in-kernel zero padding into VMEM scratch (no wrapper pad / HBM copy)
    xpad_ref[...] = jnp.zeros(xpad_ref.shape, xpad_ref.dtype)
    xpad_ref[1:h + 1, 1:w + 1, :] = x_ref[0]

    # im2col: build (H*W, 9*Cin) patch matrix, then a single MXU matmul.
    for t in range(9):
        ky, kx = divmod(t, 3)
        p1_ref[:, t * cin:(t + 1) * cin] = (
            xpad_ref[ky:ky + h, kx:kx + w, :].reshape(h * w, cin))
    y1 = jnp.dot(p1_ref[...], w1_ref[...], preferred_element_type=f32)
    y1 = jnp.maximum(y1 + b1_ref[...], 0.0)                 # (H*W, C1)

    # 2x2 / stride-2 max-pool (reshapes keep the minor C axis -> no relayout)
    y1 = y1.reshape(h, w, c1)
    y1 = jnp.max(y1.reshape(h2, 2, w, c1), axis=1)
    y1 = jnp.max(y1.reshape(h2, w2, 2, c1), axis=2)         # (H/2, W/2, C1)

    # ---------------- layer 2: conv3x3('same') + bias + ReLU ----------------
    # intermediate stays in VMEM; pad it in place
    ypad_ref[...] = jnp.zeros(ypad_ref.shape, ypad_ref.dtype)
    ypad_ref[1:h2 + 1, 1:w2 + 1, :] = y1

    # im2col with K = 9*C1 = 144 -> much better MXU contraction fill,
    # one matmul instead of nine accumulating dots.
    for t in range(9):
        ky, kx = divmod(t, 3)
        p2_ref[:, t * c1:(t + 1) * c1] = (
            ypad_ref[ky:ky + h2, kx:kx + w2, :].reshape(h2 * w2, c1))
    y2 = jnp.dot(p2_ref[...], w2_ref[...], preferred_element_type=f32)
    y2 = jnp.maximum(y2 + b2_ref[...], 0.0)                 # (H/2*W/2, C2)

    # 2x2 / stride-2 max-pool
    y2 = y2.reshape(h2, w2, c2)
    y2 = jnp.max(y2.reshape(h4, 2, w2, c2), axis=1)
    y2 = jnp.max(y2.reshape(h4, w4, 2, c2), axis=2)         # (H/4, W/4, C2)

    o_ref[...] = y2.reshape(1, h4 * w4, c2).astype(o_ref.dtype)


def structure_encoder(x_nchw, params):
    """Forward pass matching the PyTorch StructureEncoder. NCHW in, NCHW out."""
    n, cin, h, w = x_nchw.shape
    assert h % 4 == 0 and w % 4 == 0, "two 2x2 max-pools require H, W % 4 == 0"
    c1 = params["w1"].shape[-1]
    c2 = params["w2"].shape[-1]
    h2, w2 = h // 2, w // 2
    h4, w4 = h2 // 2, w2 // 2

    # NCHW -> NHWC. For in_channels == 1 this is a pure (free) reshape.
    if cin == 1:
        x = x_nchw.reshape(n, h, w, 1)
    else:
        x = jnp.transpose(x_nchw, (0, 2, 3, 1))

    # weights in tap-major im2col layout (row-major flatten of HWIO)
    w1 = params["w1"].reshape(9 * cin, c1)
    b1 = params["b1"].reshape(1, c1)
    w2p = params["w2"].reshape(9 * c1, c2)
    b2 = params["b2"].reshape(1, c2)

    out = pl.pallas_call(
        _encoder_kernel,
        out_shape=jax.ShapeDtypeStruct((n, h4 * w4, c2), x_nchw.dtype),
        grid=(n,),
        in_specs=[
            pl.BlockSpec((1, h, w, cin), lambda i: (i, 0, 0, 0)),
            pl.BlockSpec((9 * cin, c1), lambda i: (0, 0)),
            pl.BlockSpec((1, c1), lambda i: (0, 0)),
            pl.BlockSpec((9 * c1, c2), lambda i: (0, 0)),
            pl.BlockSpec((1, c2), lambda i: (0, 0)),
        ],
        out_specs=pl.BlockSpec((1, h4 * w4, c2), lambda i: (i, 0, 0)),
        scratch_shapes=[
            pltpu.VMEM((h + 2, w + 2, cin), jnp.float32),    # padded input
            pltpu.VMEM((h * w, 9 * cin), jnp.float32),       # layer-1 im2col
            pltpu.VMEM((h2 + 2, w2 + 2, c1), jnp.float32),   # padded intermediate
            pltpu.VMEM((h2 * w2, 9 * c1), jnp.float32),      # layer-2 im2col
        ],
        compiler_params=pltpu.CompilerParams(
            dimension_semantics=("parallel",)),              # v7x megacore
    )(x, w1, b1, w2p, b2)

    # (N, H/4*W/4, C2) -> NCHW.  The output is only a few KB per batch element,
    # so one tiny wrapper transpose is cheaper than forcing a sub-128-lane
    # transpose/relayout inside the kernel.
    return jnp.transpose(out.reshape(n, h4, w4, c2), (0, 3, 1, 2))


def init_params(key, in_channels=1, out_channels=64):
    k1, k2, k3, k4 = jax.random.split(key, 4)
    return {
        "w1": 0.1 * jax.random.normal(k1, (3, 3, in_channels, 16), jnp.float32),
        "b1": 0.1 * jax.random.normal(k2, (16,), jnp.float32),
        "w2": 0.1 * jax.random.normal(k3, (3, 3, 16, out_channels), jnp.float32),
        "b2": 0.1 * jax.random.normal(k4, (out_channels,), jnp.float32),
    }


def _reference(x_nchw, params):
    """Pure-JAX reference (NHWC conv + reduce_window pool)."""
    x = jnp.transpose(x_nchw, (0, 2, 3, 1))

    def block(x, w, b):
        y = lax.conv_general_dilated(
            x, w, window_strides=(1, 1), padding=((1, 1), (1, 1)),
            dimension_numbers=("NHWC", "HWIO", "NHWC"))
        y = jnp.maximum(y + b[None, None, None, :], 0.0)
        return lax.reduce_window(y, -jnp.inf, lax.max,
                                 (1, 2, 2, 1), (1, 2, 2, 1), "VALID")

    x = block(x, params["w1"], params["b1"])
    x = block(x, params["w2"], params["b2"])
    return jnp.transpose(x, (0, 3, 1, 2))


if __name__ == "__main__":
    key = jax.random.PRNGKey(0)
    kx, kp = jax.random.split(key)

    # Small NCHW input consistent with the module: batch=2, in_channels=1, 16x16.
    x = jax.random.normal(kx, (2, 1, 16, 16), jnp.float32)
    params = init_params(kp, in_channels=1, out_channels=64)

    out = jax.block_until_ready(jax.jit(structure_encoder)(x, params))
    assert out.shape == (2, 64, 4, 4), out.shape

    ref = jax.block_until_ready(_reference(x, params))
    np.testing.assert_allclose(np.asarray(out), np.asarray(ref),
                               rtol=1e-5, atol=1e-5)

    print("KERNEL_OK")
</pallas_src>

<mosaic_0001>
module attributes {stable_mosaic.version = 11 : i64} {
  func.func @_encoder_kernel(%arg0: i32, %arg1: memref<1x16x16x1xf32, #tpu.memory_space<vmem>>, %arg2: memref<9x16xf32, #tpu.memory_space<vmem>>, %arg3: memref<1x16xf32, #tpu.memory_space<vmem>>, %arg4: memref<144x64xf32, #tpu.memory_space<vmem>>, %arg5: memref<1x64xf32, #tpu.memory_space<vmem>>, %arg6: memref<1x16x64xf32, #tpu.memory_space<vmem>>, %arg7: memref<18x18x1xf32, #tpu.memory_space<vmem>>, %arg8: memref<256x9xf32, #tpu.memory_space<vmem>>, %arg9: memref<10x10x16xf32, #tpu.memory_space<vmem>>, %arg10: memref<64x144xf32, #tpu.memory_space<vmem>>) attributes {dimension_semantics = [#tpu.dimension_semantics<parallel>], iteration_bounds = array<i64: 2>, scalar_prefetch = 0 : i64, scratch_operands = 4 : i64, tpu.core_type = #tpu.core_type<tc>, window_params = [{transform_indices = @transform_0, window_bounds = array<i64: 1, 16, 16, 1>}, {pipeline_mode = #tpu.pipeline_mode<synchronous>, transform_indices = @transform_1, window_bounds = array<i64: 9, 16>}, {pipeline_mode = #tpu.pipeline_mode<synchronous>, transform_indices = @transform_2, window_bounds = array<i64: 1, 16>}, {pipeline_mode = #tpu.pipeline_mode<synchronous>, transform_indices = @transform_3, window_bounds = array<i64: 144, 64>}, {pipeline_mode = #tpu.pipeline_mode<synchronous>, transform_indices = @transform_4, window_bounds = array<i64: 1, 64>}, {transform_indices = @transform_5, window_bounds = array<i64: 1, 16, 64>}]} {
    %cst = arith.constant 0.000000e+00 : f32
    %0 = vector.broadcast %cst : f32 to vector<18x18x1xf32>
    %c0 = arith.constant 0 : index
    %c0_0 = arith.constant 0 : index
    %c0_1 = arith.constant 0 : index
    %1 = vector.load %arg7[%c0, %c0_0, %c0_1] : memref<18x18x1xf32, #tpu.memory_space<vmem>>, vector<18x18x1xf32>
    tpu.vector_store %arg7[%c0, %c0_0, %c0_1], %0 {strides = array<i32>} : memref<18x18x1xf32, #tpu.memory_space<vmem>>, vector<18x18x1xf32>,
    %c0_2 = arith.constant 0 : index
    %c0_3 = arith.constant 0 : index
    %c0_4 = arith.constant 0 : index
    %c0_5 = arith.constant 0 : index
    %2 = vector.load %arg1[%c0_2, %c0_3, %c0_4, %c0_5] : memref<1x16x16x1xf32, #tpu.memory_space<vmem>>, vector<1x16x16x1xf32>
    %3 = vector.shape_cast %2 : vector<1x16x16x1xf32> to vector<16x16x1xf32>
    %c1 = arith.constant 1 : index
    %c1_6 = arith.constant 1 : index
    %c0_7 = arith.constant 0 : index
    %4 = vector.load %arg7[%c1, %c1_6, %c0_7] : memref<18x18x1xf32, #tpu.memory_space<vmem>>, vector<16x16x1xf32>
    tpu.vector_store %arg7[%c1, %c1_6, %c0_7], %3 {strides = array<i32>} : memref<18x18x1xf32, #tpu.memory_space<vmem>>, vector<16x16x1xf32>,
    %c0_8 = arith.constant 0 : index
    %c0_9 = arith.constant 0 : index
    %c0_10 = arith.constant 0 : index
    %5 = vector.load %arg7[%c0_8, %c0_9, %c0_10] : memref<18x18x1xf32, #tpu.memory_space<vmem>>, vector<16x16x1xf32>
    %6 = vector.shape_cast %5 : vector<16x16x1xf32> to vector<256x1xf32>
    %c0_11 = arith.constant 0 : index
    %c0_12 = arith.constant 0 : index
    %7 = vector.load %arg8[%c0_11, %c0_12] : memref<256x9xf32, #tpu.memory_space<vmem>>, vector<256x1xf32>
    tpu.vector_store %arg8[%c0_11, %c0_12], %6 {strides = array<i32>} : memref<256x9xf32, #tpu.memory_space<vmem>>, vector<256x1xf32>,
    %c0_13 = arith.constant 0 : index
    %c1_14 = arith.constant 1 : index
    %c0_15 = arith.constant 0 : index
    %8 = vector.load %arg7[%c0_13, %c1_14, %c0_15] : memref<18x18x1xf32, #tpu.memory_space<vmem>>, vector<16x16x1xf32>
    %9 = vector.shape_cast %8 : vector<16x16x1xf32> to vector<256x1xf32>
    %c0_16 = arith.constant 0 : index
    %c1_17 = arith.constant 1 : index
    %10 = vector.load %arg8[%c0_16, %c1_17] : memref<256x9xf32, #tpu.memory_space<vmem>>, vector<256x1xf32>
    tpu.vector_store %arg8[%c0_16, %c1_17], %9 {strides = array<i32>} : memref<256x9xf32, #tpu.memory_space<vmem>>, vector<256x1xf32>,
    %c0_18 = arith.constant 0 : index
    %c2 = arith.constant 2 : index
    %c0_19 = arith.constant 0 : index
    %11 = vector.load %arg7[%c0_18, %c2, %c0_19] : memref<18x18x1xf32, #tpu.memory_space<vmem>>, vector<16x16x1xf32>
    %12 = vector.shape_cast %11 : vector<16x16x1xf32> to vector<256x1xf32>
    %c0_20 = arith.constant 0 : index
    %c2_21 = arith.constant 2 : index
    %13 = vector.load %arg8[%c0_20, %c2_21] : memref<256x9xf32, #tpu.memory_space<vmem>>, vector<256x1xf32>
    tpu.vector_store %arg8[%c0_20, %c2_21], %12 {strides = array<i32>} : memref<256x9xf32, #tpu.memory_space<vmem>>, vector<256x1xf32>,
    %c1_22 = arith.constant 1 : index
    %c0_23 = arith.constant 0 : index
    %c0_24 = arith.constant 0 : index
    %14 = vector.load %arg7[%c1_22, %c0_23, %c0_24] : memref<18x18x1xf32, #tpu.memory_space<vmem>>, vector<16x16x1xf32>
    %15 = vector.shape_cast %14 : vector<16x16x1xf32> to vector<256x1xf32>
    %c0_25 = arith.constant 0 : index
    %c3 = arith.constant 3 : index
    %16 = vector.load %arg8[%c0_25, %c3] : memref<256x9xf32, #tpu.memory_space<vmem>>, vector<256x1xf32>
    tpu.vector_store %arg8[%c0_25, %c3], %15 {strides = array<i32>} : memref<256x9xf32, #tpu.memory_space<vmem>>, vector<256x1xf32>,
    %c1_26 = arith.constant 1 : index
    %c1_27 = arith.constant 1 : index
    %c0_28 = arith.constant 0 : index
    %17 = vector.load %arg7[%c1_26, %c1_27, %c0_28] : memref<18x18x1xf32, #tpu.memory_space<vmem>>, vector<16x16x1xf32>
    %18 = vector.shape_cast %17 : vector<16x16x1xf32> to vector<256x1xf32>
    %c0_29 = arith.constant 0 : index
    %c4 = arith.constant 4 : index
    %19 = vector.load %arg8[%c0_29, %c4] : memref<256x9xf32, #tpu.memory_space<vmem>>, vector<256x1xf32>
    tpu.vector_store %arg8[%c0_29, %c4], %18 {strides = array<i32>} : memref<256x9xf32, #tpu.memory_space<vmem>>, vector<256x1xf32>,
    %c1_30 = arith.constant 1 : index
    %c2_31 = arith.constant 2 : index
    %c0_32 = arith.constant 0 : index
    %20 = vector.load %arg7[%c1_30, %c2_31, %c0_32] : memref<18x18x1xf32, #tpu.memory_space<vmem>>, vector<16x16x1xf32>
    %21 = vector.shape_cast %20 : vector<16x16x1xf32> to vector<256x1xf32>
    %c0_33 = arith.constant 0 : index
    %c5 = arith.constant 5 : index
    %22 = vector.load %arg8[%c0_33, %c5] : memref<256x9xf32, #tpu.memory_space<vmem>>, vector<256x1xf32>
    tpu.vector_store %arg8[%c0_33, %c5], %21 {strides = array<i32>} : memref<256x9xf32, #tpu.memory_space<vmem>>, vector<256x1xf32>,
    %c2_34 = arith.constant 2 : index
    %c0_35 = arith.constant 0 : index
    %c0_36 = arith.constant 0 : index
    %23 = vector.load %arg7[%c2_34, %c0_35, %c0_36] : memref<18x18x1xf32, #tpu.memory_space<vmem>>, vector<16x16x1xf32>
    %24 = vector.shape_cast %23 : vector<16x16x1xf32> to vector<256x1xf32>
    %c0_37 = arith.constant 0 : index
    %c6 = arith.constant 6 : index
    %25 = vector.load %arg8[%c0_37, %c6] : memref<256x9xf32, #tpu.memory_space<vmem>>, vector<256x1xf32>
    tpu.vector_store %arg8[%c0_37, %c6], %24 {strides = array<i32>} : memref<256x9xf32, #tpu.memory_space<vmem>>, vector<256x1xf32>,
    %c2_38 = arith.constant 2 : index
    %c1_39 = arith.constant 1 : index
    %c0_40 = arith.constant 0 : index
    %26 = vector.load %arg7[%c2_38, %c1_39, %c0_40] : memref<18x18x1xf32, #tpu.memory_space<vmem>>, vector<16x16x1xf32>
    %27 = vector.shape_cast %26 : vector<16x16x1xf32> to vector<256x1xf32>
    %c0_41 = arith.constant 0 : index
    %c7 = arith.constant 7 : index
    %28 = vector.load %arg8[%c0_41, %c7] : memref<256x9xf32, #tpu.memory_space<vmem>>, vector<256x1xf32>
    tpu.vector_store %arg8[%c0_41, %c7], %27 {strides = array<i32>} : memref<256x9xf32, #tpu.memory_space<vmem>>, vector<256x1xf32>,
    %c2_42 = arith.constant 2 : index
    %c2_43 = arith.constant 2 : index
    %c0_44 = arith.constant 0 : index
    %29 = vector.load %arg7[%c2_42, %c2_43, %c0_44] : memref<18x18x1xf32, #tpu.memory_space<vmem>>, vector<16x16x1xf32>
    %30 = vector.shape_cast %29 : vector<16x16x1xf32> to vector<256x1xf32>
    %c0_45 = arith.constant 0 : index
    %c8 = arith.constant 8 : index
    %31 = vector.load %arg8[%c0_45, %c8] : memref<256x9xf32, #tpu.memory_space<vmem>>, vector<256x1xf32>
    tpu.vector_store %arg8[%c0_45, %c8], %30 {strides = array<i32>} : memref<256x9xf32, #tpu.memory_space<vmem>>, vector<256x1xf32>,
    %c0_46 = arith.constant 0 : index
    %c0_47 = arith.constant 0 : index
    %32 = vector.load %arg8[%c0_46, %c0_47] : memref<256x9xf32, #tpu.memory_space<vmem>>, vector<256x9xf32>
    %c0_48 = arith.constant 0 : index
    %c0_49 = arith.constant 0 : index
    %33 = vector.load %arg2[%c0_48, %c0_49] : memref<9x16xf32, #tpu.memory_space<vmem>>, vector<9x16xf32>
    %cst_50 = arith.constant dense<0.000000e+00> : vector<256x16xf32>
    %34 = tpu.matmul %32, %33, %cst_50 {dimension_numbers = #tpu.dot_dimension_numbers<[1], [0], [0], [1], [0, 0, 1, 1], [], []>} : vector<256x9xf32>, vector<9x16xf32>, vector<256x16xf32> -> vector<256x16xf32>
    %c0_51 = arith.constant 0 : index
    %c0_52 = arith.constant 0 : index
    %35 = vector.load %arg3[%c0_51, %c0_52] : memref<1x16xf32, #tpu.memory_space<vmem>>, vector<1x16xf32>
    %36 = vector.broadcast %35 : vector<1x16xf32> to vector<256x16xf32>
    %37 = arith.addf %34, %36 : vector<256x16xf32>
    %cst_53 = arith.constant 0.000000e+00 : f32
    %38 = vector.broadcast %cst_53 : f32 to vector<256x16xf32>
    %39 = arith.maximumf %37, %38 : vector<256x16xf32>
    %40 = vector.shape_cast %39 : vector<256x16xf32> to vector<16x16x16xf32>
    %41 = vector.shape_cast %40 : vector<16x16x16xf32> to vector<8x2x16x16xf32>
    %cst_54 = arith.constant dense<0xFF800000> : vector<8x16x16xf32>
    %42 = vector.multi_reduction <maximumf>, %41, %cst_54 [1] : vector<8x2x16x16xf32> to vector<8x16x16xf32>
    %43 = vector.shape_cast %42 : vector<8x16x16xf32> to vector<8x8x2x16xf32>
    %cst_55 = arith.constant dense<0xFF800000> : vector<8x8x16xf32>
    %44 = vector.multi_reduction <maximumf>, %43, %cst_55 [2] : vector<8x8x2x16xf32> to vector<8x8x16xf32>
    %cst_56 = arith.constant 0.000000e+00 : f32
    %45 = vector.broadcast %cst_56 : f32 to vector<10x10x16xf32>
    %c0_57 = arith.constant 0 : index
    %c0_58 = arith.constant 0 : index
    %c0_59 = arith.constant 0 : index
    %46 = vector.load %arg9[%c0_57, %c0_58, %c0_59] : memref<10x10x16xf32, #tpu.memory_space<vmem>>, vector<10x10x16xf32>
    tpu.vector_store %arg9[%c0_57, %c0_58, %c0_59], %45 {strides = array<i32>} : memref<10x10x16xf32, #tpu.memory_space<vmem>>, vector<10x10x16xf32>,
    %c1_60 = arith.constant 1 : index
    %c1_61 = arith.constant 1 : index
    %c0_62 = arith.constant 0 : index
    %47 = vector.load %arg9[%c1_60, %c1_61, %c0_62] : memref<10x10x16xf32, #tpu.memory_space<vmem>>, vector<8x8x16xf32>
    tpu.vector_store %arg9[%c1_60, %c1_61, %c0_62], %44 {strides = array<i32>} : memref<10x10x16xf32, #tpu.memory_space<vmem>>, vector<8x8x16xf32>,
    %c0_63 = arith.constant 0 : index
    %c0_64 = arith.constant 0 : index
    %c0_65 = arith.constant 0 : index
    %48 = vector.load %arg9[%c0_63, %c0_64, %c0_65] : memref<10x10x16xf32, #tpu.memory_space<vmem>>, vector<8x8x16xf32>
    %49 = vector.shape_cast %48 : vector<8x8x16xf32> to vector<64x16xf32>
    %c0_66 = arith.constant 0 : index
    %c0_67 = arith.constant 0 : index
    %50 = vector.load %arg10[%c0_66, %c0_67] : memref<64x144xf32, #tpu.memory_space<vmem>>, vector<64x16xf32>
    tpu.vector_store %arg10[%c0_66, %c0_67], %49 {strides = array<i32>} : memref<64x144xf32, #tpu.memory_space<vmem>>, vector<64x16xf32>,
    %c0_68 = arith.constant 0 : index
    %c1_69 = arith.constant 1 : index
    %c0_70 = arith.constant 0 : index
    %51 = vector.load %arg9[%c0_68, %c1_69, %c0_70] : memref<10x10x16xf32, #tpu.memory_space<vmem>>, vector<8x8x16xf32>
    %52 = vector.shape_cast %51 : vector<8x8x16xf32> to vector<64x16xf32>
    %c0_71 = arith.constant 0 : index
    %c16 = arith.constant 16 : index
    %53 = vector.load %arg10[%c0_71, %c16] : memref<64x144xf32, #tpu.memory_space<vmem>>, vector<64x16xf32>
    tpu.vector_store %arg10[%c0_71, %c16], %52 {strides = array<i32>} : memref<64x144xf32, #tpu.memory_space<vmem>>, vector<64x16xf32>,
    %c0_72 = arith.constant 0 : index
    %c2_73 = arith.constant 2 : index
    %c0_74 = arith.constant 0 : index
    %54 = vector.load %arg9[%c0_72, %c2_73, %c0_74] : memref<10x10x16xf32, #tpu.memory_space<vmem>>, vector<8x8x16xf32>
    %55 = vector.shape_cast %54 : vector<8x8x16xf32> to vector<64x16xf32>
    %c0_75 = arith.constant 0 : index
    %c32 = arith.constant 32 : index
    %56 = vector.load %arg10[%c0_75, %c32] : memref<64x144xf32, #tpu.memory_space<vmem>>, vector<64x16xf32>
    tpu.vector_store %arg10[%c0_75, %c32], %55 {strides = array<i32>} : memref<64x144xf32, #tpu.memory_space<vmem>>, vector<64x16xf32>,
    %c1_76 = arith.constant 1 : index
    %c0_77 = arith.constant 0 : index
    %c0_78 = arith.constant 0 : index
    %57 = vector.load %arg9[%c1_76, %c0_77, %c0_78] : memref<10x10x16xf32, #tpu.memory_space<vmem>>, vector<8x8x16xf32>
    %58 = vector.shape_cast %57 : vector<8x8x16xf32> to vector<64x16xf32>
    %c0_79 = arith.constant 0 : index
    %c48 = arith.constant 48 : index
    %59 = vector.load %arg10[%c0_79, %c48] : memref<64x144xf32, #tpu.memory_space<vmem>>, vector<64x16xf32>
    tpu.vector_store %arg10[%c0_79, %c48], %58 {strides = array<i32>} : memref<64x144xf32, #tpu.memory_space<vmem>>, vector<64x16xf32>,
    %c1_80 = arith.constant 1 : index
    %c1_81 = arith.constant 1 : index
    %c0_82 = arith.constant 0 : index
    %60 = vector.load %arg9[%c1_80, %c1_81, %c0_82] : memref<10x10x16xf32, #tpu.memory_space<vmem>>, vector<8x8x16xf32>
    %61 = vector.shape_cast %60 : vector<8x8x16xf32> to vector<64x16xf32>
    %c0_83 = arith.constant 0 : index
    %c64 = arith.constant 64 : index
    %62 = vector.load %arg10[%c0_83, %c64] : memref<64x144xf32, #tpu.memory_space<vmem>>, vector<64x16xf32>
    tpu.vector_store %arg10[%c0_83, %c64], %61 {strides = array<i32>} : memref<64x144xf32, #tpu.memory_space<vmem>>, vector<64x16xf32>,
    %c1_84 = arith.constant 1 : index
    %c2_85 = arith.constant 2 : index
    %c0_86 = arith.constant 0 : index
    %63 = vector.load %arg9[%c1_84, %c2_85, %c0_86] : memref<10x10x16xf32, #tpu.memory_space<vmem>>, vector<8x8x16xf32>
    %64 = vector.shape_cast %63 : vector<8x8x16xf32> to vector<64x16xf32>
    %c0_87 = arith.constant 0 : index
    %c80 = arith.constant 80 : index
    %65 = vector.load %arg10[%c0_87, %c80] : memref<64x144xf32, #tpu.memory_space<vmem>>, vector<64x16xf32>
    tpu.vector_store %arg10[%c0_87, %c80], %64 {strides = array<i32>} : memref<64x144xf32, #tpu.memory_space<vmem>>, vector<64x16xf32>,
    %c2_88 = arith.constant 2 : index
    %c0_89 = arith.constant 0 : index
    %c0_90 = arith.constant 0 : index
    %66 = vector.load %arg9[%c2_88, %c0_89, %c0_90] : memref<10x10x16xf32, #tpu.memory_space<vmem>>, vector<8x8x16xf32>
    %67 = vector.shape_cast %66 : vector<8x8x16xf32> to vector<64x16xf32>
    %c0_91 = arith.constant 0 : index
    %c96 = arith.constant 96 : index
    %68 = vector.load %arg10[%c0_91, %c96] : memref<64x144xf32, #tpu.memory_space<vmem>>, vector<64x16xf32>
    tpu.vector_store %arg10[%c0_91, %c96], %67 {strides = array<i32>} : memref<64x144xf32, #tpu.memory_space<vmem>>, vector<64x16xf32>,
    %c2_92 = arith.constant 2 : index
    %c1_93 = arith.constant 1 : index
    %c0_94 = arith.constant 0 : index
    %69 = vector.load %arg9[%c2_92, %c1_93, %c0_94] : memref<10x10x16xf32, #tpu.memory_space<vmem>>, vector<8x8x16xf32>
    %70 = vector.shape_cast %69 : vector<8x8x16xf32> to vector<64x16xf32>
    %c0_95 = arith.constant 0 : index
    %c112 = arith.constant 112 : index
    %71 = vector.load %arg10[%c0_95, %c112] : memref<64x144xf32, #tpu.memory_space<vmem>>, vector<64x16xf32>
    tpu.vector_store %arg10[%c0_95, %c112], %70 {strides = array<i32>} : memref<64x144xf32, #tpu.memory_space<vmem>>, vector<64x16xf32>,
    %c2_96 = arith.constant 2 : index
    %c2_97 = arith.constant 2 : index
    %c0_98 = arith.constant 0 : index
    %72 = vector.load %arg9[%c2_96, %c2_97, %c0_98] : memref<10x10x16xf32, #tpu.memory_space<vmem>>, vector<8x8x16xf32>
    %73 = vector.shape_cast %72 : vector<8x8x16xf32> to vector<64x16xf32>
    %c0_99 = arith.constant 0 : index
    %c128 = arith.constant 128 : index
    %74 = vector.load %arg10[%c0_99, %c128] : memref<64x144xf32, #tpu.memory_space<vmem>>, vector<64x16xf32>
    tpu.vector_store %arg10[%c0_99, %c128], %73 {strides = array<i32>} : memref<64x144xf32, #tpu.memory_space<vmem>>, vector<64x16xf32>,
    %c0_100 = arith.constant 0 : index
    %c0_101 = arith.constant 0 : index
    %75 = vector.load %arg10[%c0_100, %c0_101] : memref<64x144xf32, #tpu.memory_space<vmem>>, vector<64x144xf32>
    %c0_102 = arith.constant 0 : index
    %c0_103 = arith.constant 0 : index
    %76 = vector.load %arg4[%c0_102, %c0_103] : memref<144x64xf32, #tpu.memory_space<vmem>>, vector<144x64xf32>
    %cst_104 = arith.constant dense<0.000000e+00> : vector<64x64xf32>
    %77 = tpu.matmul %75, %76, %cst_104 {dimension_numbers = #tpu.dot_dimension_numbers<[1], [0], [0], [1], [0, 0, 1, 1], [], []>} : vector<64x144xf32>, vector<144x64xf32>, vector<64x64xf32> -> vector<64x64xf32>
    %c0_105 = arith.constant 0 : index
    %c0_106 = arith.constant 0 : index
    %78 = vector.load %arg5[%c0_105, %c0_106] : memref<1x64xf32, #tpu.memory_space<vmem>>, vector<1x64xf32>
    %79 = vector.broadcast %78 : vector<1x64xf32> to vector<64x64xf32>
    %80 = arith.addf %77, %79 : vector<64x64xf32>
    %cst_107 = arith.constant 0.000000e+00 : f32
    %81 = vector.broadcast %cst_107 : f32 to vector<64x64xf32>
    %82 = arith.maximumf %80, %81 : vector<64x64xf32>
    %83 = vector.shape_cast %82 : vector<64x64xf32> to vector<8x8x64xf32>
    %84 = vector.shape_cast %83 : vector<8x8x64xf32> to vector<4x2x8x64xf32>
    %cst_108 = arith.constant dense<0xFF800000> : vector<4x8x64xf32>
    %85 = vector.multi_reduction <maximumf>, %84, %cst_108 [1] : vector<4x2x8x64xf32> to vector<4x8x64xf32>
    %86 = vector.shape_cast %85 : vector<4x8x64xf32> to vector<4x4x2x64xf32>
    %cst_109 = arith.constant dense<0xFF800000> : vector<4x4x64xf32>
    %87 = vector.multi_reduction <maximumf>, %86, %cst_109 [2] : vector<4x4x2x64xf32> to vector<4x4x64xf32>
    %88 = vector.shape_cast %87 : vector<4x4x64xf32> to vector<1x16x64xf32>
    %c0_110 = arith.constant 0 : index
    %c0_111 = arith.constant 0 : index
    %c0_112 = arith.constant 0 : index
    %89 = vector.load %arg6[%c0_110, %c0_111, %c0_112] : memref<1x16x64xf32, #tpu.memory_space<vmem>>, vector<1x16x64xf32>
    tpu.vector_store %arg6[%c0_110, %c0_111, %c0_112], %88 {strides = array<i32>} : memref<1x16x64xf32, #tpu.memory_space<vmem>>, vector<1x16x64xf32>,
    return
  }
  func.func @transform_0(%arg0: i32) -> (i32, i32, i32, i32) {
    %c0_i32 = arith.constant 0 : i32
    %c0_i32_0 = arith.constant 0 : i32
    %c0_i32_1 = arith.constant 0 : i32
    %c0_i32_2 = arith.constant 0 : i32
    return %arg0, %c0_i32, %c0_i32_0, %c0_i32_1 : i32, i32, i32, i32
  }
  func.func @transform_1(%arg0: i32) -> (i32, i32) {
    %c0_i32 = arith.constant 0 : i32
    %c0_i32_0 = arith.constant 0 : i32
    %c0_i32_1 = arith.constant 0 : i32
    return %c0_i32, %c0_i32_0 : i32, i32
  }
  func.func @transform_2(%arg0: i32) -> (i32, i32) {
    %c0_i32 = arith.constant 0 : i32
    %c0_i32_0 = arith.constant 0 : i32
    %c0_i32_1 = arith.constant 0 : i32
    return %c0_i32, %c0_i32_0 : i32, i32
  }
  func.func @transform_3(%arg0: i32) -> (i32, i32) {
    %c0_i32 = arith.constant 0 : i32
    %c0_i32_0 = arith.constant 0 : i32
    %c0_i32_1 = arith.constant 0 : i32
    return %c0_i32, %c0_i32_0 : i32, i32
  }
  func.func @transform_4(%arg0: i32) -> (i32, i32) {
    %c0_i32 = arith.constant 0 : i32
    %c0_i32_0 = arith.constant 0 : i32
    %c0_i32_1 = arith.constant 0 : i32
    return %c0_i32, %c0_i32_0 : i32, i32
  }
  func.func @transform_5(%arg0: i32) -> (i32, i32, i32) {
    %c0_i32 = arith.constant 0 : i32
    %c0_i32_0 = arith.constant 0 : i32
    %c0_i32_1 = arith.constant 0 : i32
    return %arg0, %c0_i32, %c0_i32_0 : i32, i32, i32
  }
}

</mosaic_0001>

<llo_original>
// kernel: structure_encoder.1
$region0: #{structure_encoder.1}
  #allocation0 [shape = 'u32[]', space=smem, size = 0x4, offset = 0x4, fixed_abs, tag = 'smem constant byte address 0x4 - core index']
  #allocation1 [shape = 'u32[144,128]{1,0:T(1,128)}', space=vmem, size = 0x12000, scoped, tag = 'internal scratch']
  #allocation2 [shape = 'f32[18,18,1]{2,1,0:T(8,128)}', space=vmem, size = 0x36000, scoped, tag = 'scratch operand']
  #allocation3 [shape = 'f32[256,9]{1,0:T(8,128)}', space=vmem, size = 0x20000, scoped, tag = 'scratch operand']
  #allocation4 [shape = 'f32[10,10,16]{2,1,0:T(8,128)}', space=vmem, size = 0x14000, scoped, tag = 'scratch operand']
  #allocation5 [shape = 'f32[64,144]{1,0:T(8,128)}', space=vmem, size = 0x10000, scoped, tag = 'scratch operand']
  %s0 = inlined_call_operand.vmem [shape: f32[2,16,16,1], index: 0, kind: input, shape index: {}]
  %s1 = inlined_call_operand.vmem [shape: f32[9,16], index: 1, kind: input, shape index: {}]
  %s2 = inlined_call_operand.vmem [shape: f32[1,16], index: 2, kind: input, shape index: {}]
  %s3 = inlined_call_operand.vmem [shape: f32[144,64], index: 3, kind: input, shape index: {}]
  %s4 = inlined_call_operand.vmem [shape: f32[1,64], index: 4, kind: input, shape index: {}]
  %s5 = inlined_call_operand.hbm [shape: f32[2,16,64], index: 5, kind: output, shape index: {}]
  %s6 = sld [smem:[#allocation0]]
  $region53: #{structure_encoder.1} parent=0
    _
  %s8 = ssub.s32 1, %s6
  %s9 = scalar_select 0, %s8, %s6
  $region1: #{structure_encoder.1} parent=0
    #allocation6 [shape = 'u8[16384]{0}', space=vmem, size = 0x4000, scoped, tag = 'output window, operand 0']
    #allocation7 [shape = 's32[2]{0}', space=sflag, size = 0x8, scoped, tag = 'scoped memory for structure_encoder.1']
    %10 = vsyncpa [#allocation7], 0
    %s11 = scalar_lea.sflag [#allocation7], 1
    %12 = vsyncpa %s11, 0
    loop: start=0, step=1, limit=4
    $region2: #{structure_encoder.1} parent=1 // loop_pre_header
      _
    $region3: #{structure_encoder.1} parent=1 // loop_header
      %s14 = sphi 0, %s18
      %p15 = scmp.ge.s32.totalorder %s14, 4
      %s24 = sphi 0, %s26
      %s27 = sphi 0, %s24
      %s28 = sphi 0, %s27
      %s44 = sphi 0, %s28
      %s48 = sphi 0, %s48
      %s50 = sphi 0, %s48
      %s51 = sphi 0, %s50
      %s65 = sphi 0, %s51
      %s69 = sphi 0, %s69
      %s71 = sphi 0, %s69
      %s72 = sphi 0, %s71
      %s86 = sphi 0, %s72
      %s90 = sphi 0, %s90
      %s92 = sphi 0, %s90
      %s93 = sphi 0, %s92
      %s107 = sphi 0, %s93
      %s111 = sphi 0, %s111
      %s113 = sphi 0, %s111
      %s114 = sphi 0, %s113
      %s128 = sphi 0, %s114
      %s134 = sphi 0, %s136
      %s137 = sphi 0, %s134
      %s138 = sphi 0, %s137
      %s154 = sphi 0, %s138
    $region4: #{structure_encoder.1} parent=1 // loop_header_branch
      %17 = sbr.rel (%p15) target = $region8
    $region5: #{structure_encoder.1} parent=1 // loop_body
      %s19 = ssub.s32 %s14, 1
      %s20 = ssub.s32 %s14, 2
      %s21 = sadd.s32 %s14, 1
      %s22 = ssub.s32 %s14, %s21
      %p23 = scmp.eq.s32.totalorder %s22, 0
      %s25 = sadd.s32 %s24, 1
      %s26 = scalar_select %p23, %s24, %s25
      %p29 = pneg %p23
      %p30 = scmp.eq.s32.totalorder %s14, 1
      %p31 = por %p29, %p30
      %p32 = scmp.ne.s32.totalorder %s24, %s27
      %p33 = scmp.eq.s32.totalorder %s14, 0
      %p34 = por %p32, %p33
      %p35 = scmp.ne.s32.totalorder %s24, %s27
      %p36 = scmp.eq.s32.totalorder %s19, 1
      %p37 = por %p35, %p36
      %p38 = scmp.ne.s32.totalorder %s27, %s28
      %p39 = scmp.eq.s32.totalorder %s19, 0
      %p40 = por %p38, %p39
      %p41 = scmp.ne.s32.totalorder %s27, %s28
      %p42 = scmp.eq.s32.totalorder %s20, 1
      %p43 = por %p41, %p42
      %p45 = scmp.ne.s32.totalorder %s28, %s44
      %p46 = scmp.eq.s32.totalorder %s20, 0
      %p47 = por %p45, %p46
      %s49 = sadd.s32 %s48, 1
      %p52 = scmp.eq.s32.totalorder %s14, 1
      %p53 = scmp.ne.s32.totalorder %s48, %s50
      %p54 = scmp.eq.s32.totalorder %s14, 0
      %p55 = por %p53, %p54
      %p56 = scmp.ne.s32.totalorder %s48, %s50
      %p57 = scmp.eq.s32.totalorder %s19, 1
      %p58 = por %p56, %p57
      %p59 = scmp.ne.s32.totalorder %s50, %s51
      %p60 = scmp.eq.s32.totalorder %s19, 0
      %p61 = por %p59, %p60
      %p62 = scmp.ne.s32.totalorder %s50, %s51
      %p63 = scmp.eq.s32.totalorder %s20, 1
      %p64 = por %p62, %p63
      %p66 = scmp.ne.s32.totalorder %s51, %s65
      %p67 = scmp.eq.s32.totalorder %s20, 0
      %p68 = por %p66, %p67
      %s70 = sadd.s32 %s69, 1
      %p73 = scmp.eq.s32.totalorder %s14, 1
      %p74 = scmp.ne.s32.totalorder %s69, %s71
      %p75 = scmp.eq.s32.totalorder %s14, 0
      %p76 = por %p74, %p75
      %p77 = scmp.ne.s32.totalorder %s69, %s71
      %p78 = scmp.eq.s32.totalorder %s19, 1
      %p79 = por %p77, %p78
      %p80 = scmp.ne.s32.totalorder %s71, %s72
      %p81 = scmp.eq.s32.totalorder %s19, 0
      %p82 = por %p80, %p81
      %p83 = scmp.ne.s32.totalorder %s71, %s72
      %p84 = scmp.eq.s32.totalorder %s20, 1
      %p85 = por %p83, %p84
      %p87 = scmp.ne.s32.totalorder %s72, %s86
      %p88 = scmp.eq.s32.totalorder %s20, 0
      %p89 = por %p87, %p88
      %s91 = sadd.s32 %s90, 1
      %p94 = scmp.eq.s32.totalorder %s14, 1
      %p95 = scmp.ne.s32.totalorder %s90, %s92
      %p96 = scmp.eq.s32.totalorder %s14, 0
      %p97 = por %p95, %p96
      %p98 = scmp.ne.s32.totalorder %s90, %s92
      %p99 = scmp.eq.s32.totalorder %s19, 1
      %p100 = por %p98, %p99
      %p101 = scmp.ne.s32.totalorder %s92, %s93
      %p102 = scmp.eq.s32.totalorder %s19, 0
      %p103 = por %p101, %p102
      %p104 = scmp.ne.s32.totalorder %s92, %s93
      %p105 = scmp.eq.s32.totalorder %s20, 1
      %p106 = por %p104, %p105
      %p108 = scmp.ne.s32.totalorder %s93, %s107
      %p109 = scmp.eq.s32.totalorder %s20, 0
      %p110 = por %p108, %p109
      %s112 = sadd.s32 %s111, 1
      %p115 = scmp.eq.s32.totalorder %s14, 1
      %p116 = scmp.ne.s32.totalorder %s111, %s113
      %p117 = scmp.eq.s32.totalorder %s14, 0
      %p118 = por %p116, %p117
      %p119 = scmp.ne.s32.totalorder %s111, %s113
      %p120 = scmp.eq.s32.totalorder %s19, 1
      %p121 = por %p119, %p120
      %p122 = scmp.ne.s32.totalorder %s113, %s114
      %p123 = scmp.eq.s32.totalorder %s19, 0
      %p124 = por %p122, %p123
      %p125 = scmp.ne.s32.totalorder %s113, %s114
      %p126 = scmp.eq.s32.totalorder %s20, 1
      %p127 = por %p125, %p126
      %p129 = scmp.ne.s32.totalorder %s114, %s128
      %p130 = scmp.eq.s32.totalorder %s20, 0
      %p131 = por %p129, %p130
      %s132 = ssub.s32 %s14, %s21
      %p133 = scmp.eq.s32.totalorder %s132, 0
      %s135 = sadd.s32 %s134, 1
      %s136 = scalar_select %p133, %s134, %s135
      %p139 = pneg %p133
      %p140 = scmp.eq.s32.totalorder %s14, 1
      %p141 = por %p139, %p140
      %p142 = scmp.ne.s32.totalorder %s134, %s137
      %p143 = scmp.eq.s32.totalorder %s14, 0
      %p144 = por %p142, %p143
      %p145 = scmp.ne.s32.totalorder %s134, %s137
      %p146 = scmp.eq.s32.totalorder %s19, 1
      %p147 = por %p145, %p146
      %p148 = scmp.ne.s32.totalorder %s137, %s138
      %p149 = scmp.eq.s32.totalorder %s19, 0
      %p150 = por %p148, %p149
      %p151 = scmp.ne.s32.totalorder %s137, %s138
      %p152 = scmp.eq.s32.totalorder %s20, 1
      %p153 = por %p151, %p152
      %p155 = scmp.ne.s32.totalorder %s138, %s154
      %p156 = scmp.eq.s32.totalorder %s20, 0
      %p157 = por %p155, %p156
      %p158 = scmp.le.s32.totalorder 1, %s14
      %p159 = scmp.lt.s32.totalorder %s14, 3
      %p160 = pnand %p158, %p159
      %p161 = pneg %p160
      // Predicated region
      $region9: #{structure_encoder.1} parent=5 // pred_check
        _
      $region10: #{structure_encoder.1} parent=5 // pred_check_branch
        %163 = sbr.rel (%p160) target = $region12
      $region11: #{structure_encoder.1} parent=5 // pred_region
        %s164 = ssub.s32 %s14, 1
        // Predicated region
        $region13: #{structure_encoder.1} parent=11 // pred_check
          %p165 = pneg %p61
        $region14: #{structure_encoder.1} parent=11 // pred_check_branch
          %167 = sbr.rel (%p165) target = $region16
        $region15: #{structure_encoder.1} parent=11 // pred_region
          _
        $region16: #{structure_encoder.1} parent=11 // pred_fallthru
          _
        // Predicated region
        $region17: #{structure_encoder.1} parent=11 // pred_check
          %p168 = pneg %p82
        $region18: #{structure_encoder.1} parent=11 // pred_check_branch
          %170 = sbr.rel (%p168) target = $region20
        $region19: #{structure_encoder.1} parent=11 // pred_region
          _
        $region20: #{structure_encoder.1} parent=11 // pred_fallthru
          _
        // Predicated region
        $region21: #{structure_encoder.1} parent=11 // pred_check
          %p171 = pneg %p103
        $region22: #{structure_encoder.1} parent=11 // pred_check_branch
          %173 = sbr.rel (%p171) target = $region24
        $region23: #{structure_encoder.1} parent=11 // pred_region
          _
        $region24: #{structure_encoder.1} parent=11 // pred_fallthru
          _
        // Predicated region
        $region25: #{structure_encoder.1} parent=11 // pred_check
          %p174 = pneg %p124
        $region26: #{structure_encoder.1} parent=11 // pred_check_branch
          %176 = sbr.rel (%p174) target = $region28
        $region27: #{structure_encoder.1} parent=11 // pred_region
          _
        $region28: #{structure_encoder.1} parent=11 // pred_fallthru
          _
      $region12: #{structure_encoder.1} parent=5 // pred_fallthru
        _
      %p177 = scmp.lt.s32.totalorder %s14, 2
      // Predicated region
      $region29: #{structure_encoder.1} parent=5 // pred_check
        %p178 = pneg %p177
      $region30: #{structure_encoder.1} parent=5 // pred_check_branch
        %180 = sbr.rel (%p178) target = $region32
      $region31: #{structure_encoder.1} parent=5 // pred_region
        // Predicated region
        $region33: #{structure_encoder.1} parent=31 // pred_check
          %p181 = pneg %p34
        $region34: #{structure_encoder.1} parent=31 // pred_check_branch
          %183 = sbr.rel (%p181) target = $region36
        $region35: #{structure_encoder.1} parent=31 // pred_region
          %p184 = scmp.lt.s32.totalorder %s14, 1
          %s185 = scalar_select %p184, %s14, 1
          %s186 = smul.addr %s185, 32
          %s187 = smul.addr %s186, 8
          %s188 = scalar_lea.vmem %s0, %s187
        $region36: #{structure_encoder.1} parent=31 // pred_fallthru
          _
      $region32: #{structure_encoder.1} parent=5 // pred_fallthru
        _
      %p189 = scmp.le.s32.totalorder 1, %s14
      %p190 = scmp.lt.s32.totalorder %s14, 3
      %p191 = pnand %p189, %p190
      %p192 = pneg %p191
      // Predicated region
      $region37: #{structure_encoder.1} parent=5 // pred_check
        _
      $region38: #{structure_encoder.1} parent=5 // pred_check_branch
        %194 = sbr.rel (%p191) target = $region40
      $region39: #{structure_encoder.1} parent=5 // pred_region
        %s195 = ssub.s32 %s14, 1
        %p196 = scmp.lt.s32.totalorder %s19, 1
        %s197 = scalar_select %p196, %s19, 1
        %s198 = smul.addr %s197, 32
        %s199 = smul.addr %s198, 8
        %s200 = scalar_lea.vmem %s0, %s199
        %p201 = pneg %p40
        %p202 = pneg %p37
        %p203 = pneg %p61
        %p204 = pneg %p58
        %p205 = pneg %p82
        %p206 = pneg %p79
        %p207 = pneg %p103
        %p208 = pneg %p100
        %p209 = pneg %p124
        %p210 = pneg %p121
        %p211 = pneg %p150
        %p212 = pneg %p147
        %s213 = sand.u32 %s137, 1
        %s214 = scalar_lea.sflag [#allocation7], %s213
        %s215 = sand.u32 %s137, 1
        %s216 = smul.addr %s215, 16
        %s217 = scalar_lea.vmem [#allocation6], %s216
        %p218 = scmp.lt.s32.totalorder %s19, 1
        %s219 = scalar_select %p218, %s19, 1
        %s220 = smul.addr %s219, 32
        %s221 = smul.addr %s220, 8
        %s222 = scalar_lea.vmem %s0, %s221
        %vm223 = vcmask 7168
        %224 = vst.msk [vmem:[#allocation2] sm:$0xff] %vm223, 0.0
        %225 = vst.msk [vmem:[#allocation2 + $0x8] sm:$0xff] %vm223, 0.0
        %vm226 = vcmask 1024
        %227 = vst.msk [vmem:[#allocation2 + $0x10] sm:$0x3] %vm226, 0.0
        %228 = vst.msk [vmem:[#allocation2 + $0x18] sm:$0xff] %vm223, 0.0
        %229 = vst.msk [vmem:[#allocation2 + $0x20] sm:$0xff] %vm223, 0.0
        %230 = vst.msk [vmem:[#allocation2 + $0x28] sm:$0x3] %vm226, 0.0
        %231 = vst.msk [vmem:[#allocation2 + $0x30] sm:$0xff] %vm223, 0.0
        %232 = vst.msk [vmem:[#allocation2 + $0x38] sm:$0xff] %vm223, 0.0
        %233 = vst.msk [vmem:[#allocation2 + $0x40] sm:$0x3] %vm226, 0.0
        %234 = vst.msk [vmem:[#allocation2 + $0x48] sm:$0xff] %vm223, 0.0
        %235 = vst.msk [vmem:[#allocation2 + $0x50] sm:$0xff] %vm223, 0.0
        %236 = vst.msk [vmem:[#allocation2 + $0x58] sm:$0x3] %vm226, 0.0
        %237 = vst.msk [vmem:[#allocation2 + $0x60] sm:$0xff] %vm223, 0.0
        %238 = vst.msk [vmem:[#allocation2 + $0x68] sm:$0xff] %vm223, 0.0
        %239 = vst.msk [vmem:[#allocation2 + $0x70] sm:$0x3] %vm226, 0.0
        %240 = vst.msk [vmem:[#allocation2 + $0x78] sm:$0xff] %vm223, 0.0
        %241 = vst.msk [vmem:[#allocation2 + $0x80] sm:$0xff] %vm223, 0.0
        %242 = vst.msk [vmem:[#allocation2 + $0x88] sm:$0x3] %vm226, 0.0
        %243 = vst.msk [vmem:[#allocation2 + $0x90] sm:$0xff] %vm223, 0.0
        %244 = vst.msk [vmem:[#allocation2 + $0x98] sm:$0xff] %vm223, 0.0
        %245 = vst.msk [vmem:[#allocation2 + $0xa0] sm:$0x3] %vm226, 0.0
        %246 = vst.msk [vmem:[#allocation2 + $0xa8] sm:$0xff] %vm223, 0.0
        %247 = vst.msk [vmem:[#allocation2 + $0xb0] sm:$0xff] %vm223, 0.0
        %248 = vst.msk [vmem:[#allocation2 + $0xb8] sm:$0x3] %vm226, 0.0
        %249 = vst.msk [vmem:[#allocation2 + $0xc0] sm:$0xff] %vm223, 0.0
        %250 = vst.msk [vmem:[#allocation2 + $0xc8] sm:$0xff] %vm223, 0.0
        %251 = vst.msk [vmem:[#allocation2 + $0xd0] sm:$0x3] %vm226, 0.0
        %252 = vst.msk [vmem:[#allocation2 + $0xd8] sm:$0xff] %vm223, 0.0
        %253 = vst.msk [vmem:[#allocation2 + $0xe0] sm:$0xff] %vm223, 0.0
        %254 = vst.msk [vmem:[#allocation2 + $0xe8] sm:$0x3] %vm226, 0.0
        %255 = vst.msk [vmem:[#allocation2 + $0xf0] sm:$0xff] %vm223, 0.0
        %256 = vst.msk [vmem:[#allocation2 + $0xf8] sm:$0xff] %vm223, 0.0
        %257 = vst.msk [vmem:[#allocation2 + $0x100] sm:$0x3] %vm226, 0.0
        %258 = vst.msk [vmem:[#allocation2 + $0x108] sm:$0xff] %vm223, 0.0
        %259 = vst.msk [vmem:[#allocation2 + $0x110] sm:$0xff] %vm223, 0.0
        %260 = vst.msk [vmem:[#allocation2 + $0x118] sm:$0x3] %vm226, 0.0
        %261 = vst.msk [vmem:[#allocation2 + $0x120] sm:$0xff] %vm223, 0.0
        %262 = vst.msk [vmem:[#allocation2 + $0x128] sm:$0xff] %vm223, 0.0
        %263 = vst.msk [vmem:[#allocation2 + $0x130] sm:$0x3] %vm226, 0.0
        %264 = vst.msk [vmem:[#allocation2 + $0x138] sm:$0xff] %vm223, 0.0
        %265 = vst.msk [vmem:[#allocation2 + $0x140] sm:$0xff] %vm223, 0.0
        %266 = vst.msk [vmem:[#allocation2 + $0x148] sm:$0x3] %vm226, 0.0
        %267 = vst.msk [vmem:[#allocation2 + $0x150] sm:$0xff] %vm223, 0.0
        %268 = vst.msk [vmem:[#allocation2 + $0x158] sm:$0xff] %vm223, 0.0
        %269 = vst.msk [vmem:[#allocation2 + $0x160] sm:$0x3] %vm226, 0.0
        %270 = vst.msk [vmem:[#allocation2 + $0x168] sm:$0xff] %vm223, 0.0
        %271 = vst.msk [vmem:[#allocation2 + $0x170] sm:$0xff] %vm223, 0.0
        %272 = vst.msk [vmem:[#allocation2 + $0x178] sm:$0x3] %vm226, 0.0
        %273 = vst.msk [vmem:[#allocation2 + $0x180] sm:$0xff] %vm223, 0.0
        %274 = vst.msk [vmem:[#allocation2 + $0x188] sm:$0xff] %vm223, 0.0
        %275 = vst.msk [vmem:[#allocation2 + $0x190] sm:$0x3] %vm226, 0.0
        %276 = vst.msk [vmem:[#allocation2 + $0x198] sm:$0xff] %vm223, 0.0
        %277 = vst.msk [vmem:[#allocation2 + $0x1a0] sm:$0xff] %vm223, 0.0
        %278 = vst.msk [vmem:[#allocation2 + $0x1a8] sm:$0x3] %vm226, 0.0
        %v279 = vld [vmem:[%s222] sm:$0xff]
        %v280 = vld [vmem:[%s222 + $0x8] sm:$0xff]
        %v281 = vld [vmem:[%s222 + $0x10] sm:$0xff]
        %v282 = vld [vmem:[%s222 + $0x18] sm:$0xff]
        %v283 = vld [vmem:[%s222 + $0x20] sm:$0xff]
        %v284 = vld [vmem:[%s222 + $0x28] sm:$0xff]
        %v285 = vld [vmem:[%s222 + $0x30] sm:$0xff]
        %v286 = vld [vmem:[%s222 + $0x38] sm:$0xff]
        %v287 = vld [vmem:[%s222 + $0x40] sm:$0xff]
        %v288 = vld [vmem:[%s222 + $0x48] sm:$0xff]
        %v289 = vld [vmem:[%s222 + $0x50] sm:$0xff]
        %v290 = vld [vmem:[%s222 + $0x58] sm:$0xff]
        %v291 = vld [vmem:[%s222 + $0x60] sm:$0xff]
        %v292 = vld [vmem:[%s222 + $0x68] sm:$0xff]
        %v293 = vld [vmem:[%s222 + $0x70] sm:$0xff]
        %v294 = vld [vmem:[%s222 + $0x78] sm:$0xff]
        %v295 = vld [vmem:[%s222 + $0x80] sm:$0xff]
        %v296 = vld [vmem:[%s222 + $0x88] sm:$0xff]
        %v297 = vld [vmem:[%s222 + $0x90] sm:$0xff]
        %v298 = vld [vmem:[%s222 + $0x98] sm:$0xff]
        %v299 = vld [vmem:[%s222 + $0xa0] sm:$0xff]
        %v300 = vld [vmem:[%s222 + $0xa8] sm:$0xff]
        %v301 = vld [vmem:[%s222 + $0xb0] sm:$0xff]
        %v302 = vld [vmem:[%s222 + $0xb8] sm:$0xff]
        %v303 = vld [vmem:[%s222 + $0xc0] sm:$0xff]
        %v304 = vld [vmem:[%s222 + $0xc8] sm:$0xff]
        %v305 = vld [vmem:[%s222 + $0xd0] sm:$0xff]
        %v306 = vld [vmem:[%s222 + $0xd8] sm:$0xff]
        %v307 = vld [vmem:[%s222 + $0xe0] sm:$0xff]
        %v308 = vld [vmem:[%s222 + $0xe8] sm:$0xff]
        %v309 = vld [vmem:[%s222 + $0xf0] sm:$0xff]
        %v310 = vld [vmem:[%s222 + $0xf8] sm:$0xff]
        %s311 = scalar_lea.vmem [#allocation2], 24
        %312 = vst.msk [vmem:[%s311 + $0x1] sm:$0xff] %vm223, %v279
        %313 = vst.msk [vmem:[%s311 + $0x9] sm:$0xff] %vm223, %v280
        %314 = vst.msk [vmem:[%s311 + $0x19] sm:$0xff] %vm223, %v281
        %315 = vst.msk [vmem:[%s311 + $0x21] sm:$0xff] %vm223, %v282
        %316 = vst.msk [vmem:[%s311 + $0x31] sm:$0xff] %vm223, %v283
        %317 = vst.msk [vmem:[%s311 + $0x39] sm:$0xff] %vm223, %v284
        %318 = vst.msk [vmem:[%s311 + $0x49] sm:$0xff] %vm223, %v285
        %319 = vst.msk [vmem:[%s311 + $0x51] sm:$0xff] %vm223, %v286
        %320 = vst.msk [vmem:[%s311 + $0x61] sm:$0xff] %vm223, %v287
        %321 = vst.msk [vmem:[%s311 + $0x69] sm:$0xff] %vm223, %v288
        %322 = vst.msk [vmem:[%s311 + $0x79] sm:$0xff] %vm223, %v289
        %323 = vst.msk [vmem:[%s311 + $0x81] sm:$0xff] %vm223, %v290
        %324 = vst.msk [vmem:[%s311 + $0x91] sm:$0xff] %vm223, %v291
        %325 = vst.msk [vmem:[%s311 + $0x99] sm:$0xff] %vm223, %v292
        %326 = vst.msk [vmem:[%s311 + $0xa9] sm:$0xff] %vm223, %v293
        %327 = vst.msk [vmem:[%s311 + $0xb1] sm:$0xff] %vm223, %v294
        %328 = vst.msk [vmem:[%s311 + $0xc1] sm:$0xff] %vm223, %v295
        %329 = vst.msk [vmem:[%s311 + $0xc9] sm:$0xff] %vm223, %v296
        %330 = vst.msk [vmem:[%s311 + $0xd9] sm:$0xff] %vm223, %v297
        %331 = vst.msk [vmem:[%s311 + $0xe1] sm:$0xff] %vm223, %v298
        %332 = vst.msk [vmem:[%s311 + $0xf1] sm:$0xff] %vm223, %v299
        %333 = vst.msk [vmem:[%s311 + $0xf9] sm:$0xff] %vm223, %v300
        %334 = vst.msk [vmem:[%s311 + $0x109] sm:$0xff] %vm223, %v301
        %335 = vst.msk [vmem:[%s311 + $0x111] sm:$0xff] %vm223, %v302
        %336 = vst.msk [vmem:[%s311 + $0x121] sm:$0xff] %vm223, %v303
        %337 = vst.msk [vmem:[%s311 + $0x129] sm:$0xff] %vm223, %v304
        %338 = vst.msk [vmem:[%s311 + $0x139] sm:$0xff] %vm223, %v305
        %339 = vst.msk [vmem:[%s311 + $0x141] sm:$0xff] %vm223, %v306
        %340 = vst.msk [vmem:[%s311 + $0x151] sm:$0xff] %vm223, %v307
        %341 = vst.msk [vmem:[%s311 + $0x159] sm:$0xff] %vm223, %v308
        %342 = vst.msk [vmem:[%s311 + $0x169] sm:$0xff] %vm223, %v309
        %343 = vst.msk [vmem:[%s311 + $0x171] sm:$0xff] %vm223, %v310
        %v344 = vld [vmem:[#allocation2] sm:$0xff]
        %v345 = vld [vmem:[#allocation2 + $0x8] sm:$0xff]
        %v346 = vld [vmem:[#allocation2 + $0x18] sm:$0xff]
        %v347 = vld [vmem:[#allocation2 + $0x20] sm:$0xff]
        %v348 = vld [vmem:[#allocation2 + $0x30] sm:$0xff]
        %v349 = vld [vmem:[#allocation2 + $0x38] sm:$0xff]
        %v350 = vld [vmem:[#allocation2 + $0x48] sm:$0xff]
        %v351 = vld [vmem:[#allocation2 + $0x50] sm:$0xff]
        %v352 = vld [vmem:[#allocation2 + $0x60] sm:$0xff]
        %v353 = vld [vmem:[#allocation2 + $0x68] sm:$0xff]
        %v354 = vld [vmem:[#allocation2 + $0x78] sm:$0xff]
        %v355 = vld [vmem:[#allocation2 + $0x80] sm:$0xff]
        %v356 = vld [vmem:[#allocation2 + $0x90] sm:$0xff]
        %v357 = vld [vmem:[#allocation2 + $0x98] sm:$0xff]
        %v358 = vld [vmem:[#allocation2 + $0xa8] sm:$0xff]
        %v359 = vld [vmem:[#allocation2 + $0xb0] sm:$0xff]
        %v360 = vld [vmem:[#allocation2 + $0xc0] sm:$0xff]
        %v361 = vld [vmem:[#allocation2 + $0xc8] sm:$0xff]
        %v362 = vld [vmem:[#allocation2 + $0xd8] sm:$0xff]
        %v363 = vld [vmem:[#allocation2 + $0xe0] sm:$0xff]
        %v364 = vld [vmem:[#allocation2 + $0xf0] sm:$0xff]
        %v365 = vld [vmem:[#allocation2 + $0xf8] sm:$0xff]
        %v366 = vld [vmem:[#allocation2 + $0x108] sm:$0xff]
        %v367 = vld [vmem:[#allocation2 + $0x110] sm:$0xff]
        %v368 = vld [vmem:[#allocation2 + $0x120] sm:$0xff]
        %v369 = vld [vmem:[#allocation2 + $0x128] sm:$0xff]
        %v370 = vld [vmem:[#allocation2 + $0x138] sm:$0xff]
        %v371 = vld [vmem:[#allocation2 + $0x140] sm:$0xff]
        %v372 = vld [vmem:[#allocation2 + $0x150] sm:$0xff]
        %v373 = vld [vmem:[#allocation2 + $0x158] sm:$0xff]
        %v374 = vld [vmem:[#allocation2 + $0x168] sm:$0xff]
        %v375 = vld [vmem:[#allocation2 + $0x170] sm:$0xff]
        %376 = vst.msk [vmem:[#allocation3] sm:$0xff] %vm223, %v344
        %377 = vst.msk [vmem:[#allocation3 + $0x8] sm:$0xff] %vm223, %v345
        %378 = vst.msk [vmem:[#allocation3 + $0x10] sm:$0xff] %vm223, %v346
        %379 = vst.msk [vmem:[#allocation3 + $0x18] sm:$0xff] %vm223, %v347
        %380 = vst.msk [vmem:[#allocation3 + $0x20] sm:$0xff] %vm223, %v348
        %381 = vst.msk [vmem:[#allocation3 + $0x28] sm:$0xff] %vm223, %v349
        %382 = vst.msk [vmem:[#allocation3 + $0x30] sm:$0xff] %vm223, %v350
        %383 = vst.msk [vmem:[#allocation3 + $0x38] sm:$0xff] %vm223, %v351
        %384 = vst.msk [vmem:[#allocation3 + $0x40] sm:$0xff] %vm223, %v352
        %385 = vst.msk [vmem:[#allocation3 + $0x48] sm:$0xff] %vm223, %v353
        %386 = vst.msk [vmem:[#allocation3 + $0x50] sm:$0xff] %vm223, %v354
        %387 = vst.msk [vmem:[#allocation3 + $0x58] sm:$0xff] %vm223, %v355
        %388 = vst.msk [vmem:[#allocation3 + $0x60] sm:$0xff] %vm223, %v356
        %389 = vst.msk [vmem:[#allocation3 + $0x68] sm:$0xff] %vm223, %v357
        %390 = vst.msk [vmem:[#allocation3 + $0x70] sm:$0xff] %vm223, %v358
        %391 = vst.msk [vmem:[#allocation3 + $0x78] sm:$0xff] %vm223, %v359
        %392 = vst.msk [vmem:[#allocation3 + $0x80] sm:$0xff] %vm223, %v360
        %393 = vst.msk [vmem:[#allocation3 + $0x88] sm:$0xff] %vm223, %v361
        %394 = vst.msk [vmem:[#allocation3 + $0x90] sm:$0xff] %vm223, %v362
        %395 = vst.msk [vmem:[#allocation3 + $0x98] sm:$0xff] %vm223, %v363
        %396 = vst.msk [vmem:[#allocation3 + $0xa0] sm:$0xff] %vm223, %v364
        %397 = vst.msk [vmem:[#allocation3 + $0xa8] sm:$0xff] %vm223, %v365
        %398 = vst.msk [vmem:[#allocation3 + $0xb0] sm:$0xff] %vm223, %v366
        %399 = vst.msk [vmem:[#allocation3 + $0xb8] sm:$0xff] %vm223, %v367
        %400 = vst.msk [vmem:[#allocation3 + $0xc0] sm:$0xff] %vm223, %v368
        %401 = vst.msk [vmem:[#allocation3 + $0xc8] sm:$0xff] %vm223, %v369
        %402 = vst.msk [vmem:[#allocation3 + $0xd0] sm:$0xff] %vm223, %v370
        %403 = vst.msk [vmem:[#allocation3 + $0xd8] sm:$0xff] %vm223, %v371
        %404 = vst.msk [vmem:[#allocation3 + $0xe0] sm:$0xff] %vm223, %v372
        %405 = vst.msk [vmem:[#allocation3 + $0xe8] sm:$0xff] %vm223, %v373
        %406 = vst.msk [vmem:[#allocation3 + $0xf0] sm:$0xff] %vm223, %v374
        %407 = vst.msk [vmem:[#allocation3 + $0xf8] sm:$0xff] %vm223, %v375
        %v408 = vld [vmem:[#allocation2 + $0x1] sm:$0xff]
        %v409 = vld [vmem:[#allocation2 + $0x9] sm:$0xff]
        %v410 = vld [vmem:[#allocation2 + $0x19] sm:$0xff]
        %v411 = vld [vmem:[#allocation2 + $0x21] sm:$0xff]
        %v412 = vld [vmem:[#allocation2 + $0x31] sm:$0xff]
        %v413 = vld [vmem:[#allocation2 + $0x39] sm:$0xff]
        %v414 = vld [vmem:[#allocation2 + $0x49] sm:$0xff]
        %v415 = vld [vmem:[#allocation2 + $0x51] sm:$0xff]
        %v416 = vld [vmem:[#allocation2 + $0x61] sm:$0xff]
        %v417 = vld [vmem:[#allocation2 + $0x69] sm:$0xff]
        %v418 = vld [vmem:[#allocation2 + $0x79] sm:$0xff]
        %v419 = vld [vmem:[#allocation2 + $0x81] sm:$0xff]
        %v420 = vld [vmem:[#allocation2 + $0x91] sm:$0xff]
        %v421 = vld [vmem:[#allocation2 + $0x99] sm:$0xff]
        %v422 = vld [vmem:[#allocation2 + $0xa9] sm:$0xff]
        %v423 = vld [vmem:[#allocation2 + $0xb1] sm:$0xff]
        %v424 = vld [vmem:[#allocation2 + $0xc1] sm:$0xff]
        %v425 = vld [vmem:[#allocation2 + $0xc9] sm:$0xff]
        %v426 = vld [vmem:[#allocation2 + $0xd9] sm:$0xff]
        %v427 = vld [vmem:[#allocation2 + $0xe1] sm:$0xff]
        %v428 = vld [vmem:[#allocation2 + $0xf1] sm:$0xff]
        %v429 = vld [vmem:[#allocation2 + $0xf9] sm:$0xff]
        %v430 = vld [vmem:[#allocation2 + $0x109] sm:$0xff]
        %v431 = vld [vmem:[#allocation2 + $0x111] sm:$0xff]
        %v432 = vld [vmem:[#allocation2 + $0x121] sm:$0xff]
        %v433 = vld [vmem:[#allocation2 + $0x129] sm:$0xff]
        %v434 = vld [vmem:[#allocation2 + $0x139] sm:$0xff]
        %v435 = vld [vmem:[#allocation2 + $0x141] sm:$0xff]
        %v436 = vld [vmem:[#allocation2 + $0x151] sm:$0xff]
        %v437 = vld [vmem:[#allocation2 + $0x159] sm:$0xff]
        %v438 = vld [vmem:[#allocation2 + $0x169] sm:$0xff]
        %v439 = vld [vmem:[#allocation2 + $0x171] sm:$0xff]
        %472 = vrot.lane.b32.xlu0 %v408, 1
        %v473 = vpop.permute.xlu0 %472
        %474 = vrot.lane.b32.xlu0 %v409, 1
        %v475 = vpop.permute.xlu0 %474
        %476 = vrot.lane.b32.xlu0 %v410, 1
        %v477 = vpop.permute.xlu0 %476
        %478 = vrot.lane.b32.xlu0 %v411, 1
        %v479 = vpop.permute.xlu0 %478
        %480 = vrot.lane.b32.xlu0 %v412, 1
        %v481 = vpop.permute.xlu0 %480
        %482 = vrot.lane.b32.xlu0 %v413, 1
        %v483 = vpop.permute.xlu0 %482
        %484 = vrot.lane.b32.xlu0 %v414, 1
        %v485 = vpop.permute.xlu0 %484
        %486 = vrot.lane.b32.xlu0 %v415, 1
        %v487 = vpop.permute.xlu0 %486
        %488 = vrot.lane.b32.xlu0 %v416, 1
        %v489 = vpop.permute.xlu0 %488
        %490 = vrot.lane.b32.xlu0 %v417, 1
        %v491 = vpop.permute.xlu0 %490
        %492 = vrot.lane.b32.xlu0 %v418, 1
        %v493 = vpop.permute.xlu0 %492
        %494 = vrot.lane.b32.xlu0 %v419, 1
        %v495 = vpop.permute.xlu0 %494
        %496 = vrot.lane.b32.xlu0 %v420, 1
        %v497 = vpop.permute.xlu0 %496
        %498 = vrot.lane.b32.xlu0 %v421, 1
        %v499 = vpop.permute.xlu0 %498
        %500 = vrot.lane.b32.xlu0 %v422, 1
        %v501 = vpop.permute.xlu0 %500
        %502 = vrot.lane.b32.xlu0 %v423, 1
        %v503 = vpop.permute.xlu0 %502
        %504 = vrot.lane.b32.xlu0 %v424, 1
        %v505 = vpop.permute.xlu0 %504
        %506 = vrot.lane.b32.xlu0 %v425, 1
        %v507 = vpop.permute.xlu0 %506
        %508 = vrot.lane.b32.xlu0 %v426, 1
        %v509 = vpop.permute.xlu0 %508
        %510 = vrot.lane.b32.xlu0 %v427, 1
        %v511 = vpop.permute.xlu0 %510
        %512 = vrot.lane.b32.xlu0 %v428, 1
        %v513 = vpop.permute.xlu0 %512
        %514 = vrot.lane.b32.xlu0 %v429, 1
        %v515 = vpop.permute.xlu0 %514
        %516 = vrot.lane.b32.xlu0 %v430, 1
        %v517 = vpop.permute.xlu0 %516
        %518 = vrot.lane.b32.xlu0 %v431, 1
        %v519 = vpop.permute.xlu0 %518
        %520 = vrot.lane.b32.xlu0 %v432, 1
        %v521 = vpop.permute.xlu0 %520
        %522 = vrot.lane.b32.xlu0 %v433, 1
        %v523 = vpop.permute.xlu0 %522
        %524 = vrot.lane.b32.xlu0 %v434, 1
        %v525 = vpop.permute.xlu0 %524
        %526 = vrot.lane.b32.xlu0 %v435, 1
        %v527 = vpop.permute.xlu0 %526
        %528 = vrot.lane.b32.xlu0 %v436, 1
        %v529 = vpop.permute.xlu0 %528
        %530 = vrot.lane.b32.xlu0 %v437, 1
        %v531 = vpop.permute.xlu0 %530
        %532 = vrot.lane.b32.xlu0 %v438, 1
        %v533 = vpop.permute.xlu0 %532
        %534 = vrot.lane.b32.xlu0 %v439, 1
        %v535 = vpop.permute.xlu0 %534
        %vm568 = vcmask 15368
        %569 = vst.msk [vmem:[#allocation3] sm:$0xff] %vm568, %v473
        %570 = vst.msk [vmem:[#allocation3 + $0x8] sm:$0xff] %vm568, %v475
        %571 = vst.msk [vmem:[#allocation3 + $0x10] sm:$0xff] %vm568, %v477
        %572 = vst.msk [vmem:[#allocation3 + $0x18] sm:$0xff] %vm568, %v479
        %573 = vst.msk [vmem:[#allocation3 + $0x20] sm:$0xff] %vm568, %v481
        %574 = vst.msk [vmem:[#allocation3 + $0x28] sm:$0xff] %vm568, %v483
        %575 = vst.msk [vmem:[#allocation3 + $0x30] sm:$0xff] %vm568, %v485
        %576 = vst.msk [vmem:[#allocation3 + $0x38] sm:$0xff] %vm568, %v487
        %577 = vst.msk [vmem:[#allocation3 + $0x40] sm:$0xff] %vm568, %v489
        %578 = vst.msk [vmem:[#allocation3 + $0x48] sm:$0xff] %vm568, %v491
        %579 = vst.msk [vmem:[#allocation3 + $0x50] sm:$0xff] %vm568, %v493
        %580 = vst.msk [vmem:[#allocation3 + $0x58] sm:$0xff] %vm568, %v495
        %581 = vst.msk [vmem:[#allocation3 + $0x60] sm:$0xff] %vm568, %v497
        %582 = vst.msk [vmem:[#allocation3 + $0x68] sm:$0xff] %vm568, %v499
        %583 = vst.msk [vmem:[#allocation3 + $0x70] sm:$0xff] %vm568, %v501
        %584 = vst.msk [vmem:[#allocation3 + $0x78] sm:$0xff] %vm568, %v503
        %585 = vst.msk [vmem:[#allocation3 + $0x80] sm:$0xff] %vm568, %v505
        %586 = vst.msk [vmem:[#allocation3 + $0x88] sm:$0xff] %vm568, %v507
        %587 = vst.msk [vmem:[#allocation3 + $0x90] sm:$0xff] %vm568, %v509
        %588 = vst.msk [vmem:[#allocation3 + $0x98] sm:$0xff] %vm568, %v511
        %589 = vst.msk [vmem:[#allocation3 + $0xa0] sm:$0xff] %vm568, %v513
        %590 = vst.msk [vmem:[#allocation3 + $0xa8] sm:$0xff] %vm568, %v515
        %591 = vst.msk [vmem:[#allocation3 + $0xb0] sm:$0xff] %vm568, %v517
        %592 = vst.msk [vmem:[#allocation3 + $0xb8] sm:$0xff] %vm568, %v519
        %593 = vst.msk [vmem:[#allocation3 + $0xc0] sm:$0xff] %vm568, %v521
        %594 = vst.msk [vmem:[#allocation3 + $0xc8] sm:$0xff] %vm568, %v523
        %595 = vst.msk [vmem:[#allocation3 + $0xd0] sm:$0xff] %vm568, %v525
        %596 = vst.msk [vmem:[#allocation3 + $0xd8] sm:$0xff] %vm568, %v527
        %597 = vst.msk [vmem:[#allocation3 + $0xe0] sm:$0xff] %vm568, %v529
        %598 = vst.msk [vmem:[#allocation3 + $0xe8] sm:$0xff] %vm568, %v531
        %599 = vst.msk [vmem:[#allocation3 + $0xf0] sm:$0xff] %vm568, %v533
        %600 = vst.msk [vmem:[#allocation3 + $0xf8] sm:$0xff] %vm568, %v535
        %v601 = vld [vmem:[#allocation2 + $0x2] sm:$0xff]
        %v602 = vld [vmem:[#allocation2 + $0xa] sm:$0xff]
        %v603 = vld [vmem:[#allocation2 + $0x1a] sm:$0xff]
        %v604 = vld [vmem:[#allocation2 + $0x22] sm:$0xff]
        %v605 = vld [vmem:[#allocation2 + $0x32] sm:$0xff]
        %v606 = vld [vmem:[#allocation2 + $0x3a] sm:$0xff]
        %v607 = vld [vmem:[#allocation2 + $0x4a] sm:$0xff]
        %v608 = vld [vmem:[#allocation2 + $0x52] sm:$0xff]
        %v609 = vld [vmem:[#allocation2 + $0x62] sm:$0xff]
        %v610 = vld [vmem:[#allocation2 + $0x6a] sm:$0xff]
        %v611 = vld [vmem:[#allocation2 + $0x7a] sm:$0xff]
        %v612 = vld [vmem:[#allocation2 + $0x82] sm:$0xff]
        %v613 = vld [vmem:[#allocation2 + $0x92] sm:$0xff]
        %v614 = vld [vmem:[#allocation2 + $0x9a] sm:$0xff]
        %v615 = vld [vmem:[#allocation2 + $0xaa] sm:$0xff]
        %v616 = vld [vmem:[#allocation2 + $0xb2] sm:$0xff]
        %v617 = vld [vmem:[#allocation2 + $0xc2] sm:$0xff]
        %v618 = vld [vmem:[#allocation2 + $0xca] sm:$0xff]
        %v619 = vld [vmem:[#allocation2 + $0xda] sm:$0xff]
        %v620 = vld [vmem:[#allocation2 + $0xe2] sm:$0xff]
        %v621 = vld [vmem:[#allocation2 + $0xf2] sm:$0xff]
        %v622 = vld [vmem:[#allocation2 + $0xfa] sm:$0xff]
        %v623 = vld [vmem:[#allocation2 + $0x10a] sm:$0xff]
        %v624 = vld [vmem:[#allocation2 + $0x112] sm:$0xff]
        %v625 = vld [vmem:[#allocation2 + $0x122] sm:$0xff]
        %v626 = vld [vmem:[#allocation2 + $0x12a] sm:$0xff]
        %v627 = vld [vmem:[#allocation2 + $0x13a] sm:$0xff]
        %v628 = vld [vmem:[#allocation2 + $0x142] sm:$0xff]
        %v629 = vld [vmem:[#allocation2 + $0x152] sm:$0xff]
        %v630 = vld [vmem:[#allocation2 + $0x15a] sm:$0xff]
        %v631 = vld [vmem:[#allocation2 + $0x16a] sm:$0xff]
        %v632 = vld [vmem:[#allocation2 + $0x172] sm:$0xff]
        %665 = vrot.lane.b32.xlu0 %v601, 2
        %v666 = vpop.permute.xlu0 %665
        %667 = vrot.lane.b32.xlu0 %v602, 2
        %v668 = vpop.permute.xlu0 %667
        %669 = vrot.lane.b32.xlu0 %v603, 2
        %v670 = vpop.permute.xlu0 %669
        %671 = vrot.lane.b32.xlu0 %v604, 2
        %v672 = vpop.permute.xlu0 %671
        %673 = vrot.lane.b32.xlu0 %v605, 2
        %v674 = vpop.permute.xlu0 %673
        %675 = vrot.lane.b32.xlu0 %v606, 2
        %v676 = vpop.permute.xlu0 %675
        %677 = vrot.lane.b32.xlu0 %v607, 2
        %v678 = vpop.permute.xlu0 %677
        %679 = vrot.lane.b32.xlu0 %v608, 2
        %v680 = vpop.permute.xlu0 %679
        %681 = vrot.lane.b32.xlu0 %v609, 2
        %v682 = vpop.permute.xlu0 %681
        %683 = vrot.lane.b32.xlu0 %v610, 2
        %v684 = vpop.permute.xlu0 %683
        %685 = vrot.lane.b32.xlu0 %v611, 2
        %v686 = vpop.permute.xlu0 %685
        %687 = vrot.lane.b32.xlu0 %v612, 2
        %v688 = vpop.permute.xlu0 %687
        %689 = vrot.lane.b32.xlu0 %v613, 2
        %v690 = vpop.permute.xlu0 %689
        %691 = vrot.lane.b32.xlu0 %v614, 2
        %v692 = vpop.permute.xlu0 %691
        %693 = vrot.lane.b32.xlu0 %v615, 2
        %v694 = vpop.permute.xlu0 %693
        %695 = vrot.lane.b32.xlu0 %v616, 2
        %v696 = vpop.permute.xlu0 %695
        %697 = vrot.lane.b32.xlu0 %v617, 2
        %v698 = vpop.permute.xlu0 %697
        %699 = vrot.lane.b32.xlu0 %v618, 2
        %v700 = vpop.permute.xlu0 %699
        %701 = vrot.lane.b32.xlu0 %v619, 2
        %v702 = vpop.permute.xlu0 %701
        %703 = vrot.lane.b32.xlu0 %v620, 2
        %v704 = vpop.permute.xlu0 %703
        %705 = vrot.lane.b32.xlu0 %v621, 2
        %v706 = vpop.permute.xlu0 %705
        %707 = vrot.lane.b32.xlu0 %v622, 2
        %v708 = vpop.permute.xlu0 %707
        %709 = vrot.lane.b32.xlu0 %v623, 2
        %v710 = vpop.permute.xlu0 %709
        %711 = vrot.lane.b32.xlu0 %v624, 2
        %v712 = vpop.permute.xlu0 %711
        %713 = vrot.lane.b32.xlu0 %v625, 2
        %v714 = vpop.permute.xlu0 %713
        %715 = vrot.lane.b32.xlu0 %v626, 2
        %v716 = vpop.permute.xlu0 %715
        %717 = vrot.lane.b32.xlu0 %v627, 2
        %v718 = vpop.permute.xlu0 %717
        %719 = vrot.lane.b32.xlu0 %v628, 2
        %v720 = vpop.permute.xlu0 %719
        %721 = vrot.lane.b32.xlu0 %v629, 2
        %v722 = vpop.permute.xlu0 %721
        %723 = vrot.lane.b32.xlu0 %v630, 2
        %v724 = vpop.permute.xlu0 %723
        %725 = vrot.lane.b32.xlu0 %v631, 2
        %v726 = vpop.permute.xlu0 %725
        %727 = vrot.lane.b32.xlu0 %v632, 2
        %v728 = vpop.permute.xlu0 %727
        %vm761 = vcmask 23568
        %762 = vst.msk [vmem:[#allocation3] sm:$0xff] %vm761, %v666
        %763 = vst.msk [vmem:[#allocation3 + $0x8] sm:$0xff] %vm761, %v668
        %764 = vst.msk [vmem:[#allocation3 + $0x10] sm:$0xff] %vm761, %v670
        %765 = vst.msk [vmem:[#allocation3 + $0x18] sm:$0xff] %vm761, %v672
        %766 = vst.msk [vmem:[#allocation3 + $0x20] sm:$0xff] %vm761, %v674
        %767 = vst.msk [vmem:[#allocation3 + $0x28] sm:$0xff] %vm761, %v676
        %768 = vst.msk [vmem:[#allocation3 + $0x30] sm:$0xff] %vm761, %v678
        %769 = vst.msk [vmem:[#allocation3 + $0x38] sm:$0xff] %vm761, %v680
        %770 = vst.msk [vmem:[#allocation3 + $0x40] sm:$0xff] %vm761, %v682
        %771 = vst.msk [vmem:[#allocation3 + $0x48] sm:$0xff] %vm761, %v684
        %772 = vst.msk [vmem:[#allocation3 + $0x50] sm:$0xff] %vm761, %v686
        %773 = vst.msk [vmem:[#allocation3 + $0x58] sm:$0xff] %vm761, %v688
        %774 = vst.msk [vmem:[#allocation3 + $0x60] sm:$0xff] %vm761, %v690
        %775 = vst.msk [vmem:[#allocation3 + $0x68] sm:$0xff] %vm761, %v692
        %776 = vst.msk [vmem:[#allocation3 + $0x70] sm:$0xff] %vm761, %v694
        %777 = vst.msk [vmem:[#allocation3 + $0x78] sm:$0xff] %vm761, %v696
        %778 = vst.msk [vmem:[#allocation3 + $0x80] sm:$0xff] %vm761, %v698
        %779 = vst.msk [vmem:[#allocation3 + $0x88] sm:$0xff] %vm761, %v700
        %780 = vst.msk [vmem:[#allocation3 + $0x90] sm:$0xff] %vm761, %v702
        %781 = vst.msk [vmem:[#allocation3 + $0x98] sm:$0xff] %vm761, %v704
        %782 = vst.msk [vmem:[#allocation3 + $0xa0] sm:$0xff] %vm761, %v706
        %783 = vst.msk [vmem:[#allocation3 + $0xa8] sm:$0xff] %vm761, %v708
        %784 = vst.msk [vmem:[#allocation3 + $0xb0] sm:$0xff] %vm761, %v710
        %785 = vst.msk [vmem:[#allocation3 + $0xb8] sm:$0xff] %vm761, %v712
        %786 = vst.msk [vmem:[#allocation3 + $0xc0] sm:$0xff] %vm761, %v714
        %787 = vst.msk [vmem:[#allocation3 + $0xc8] sm:$0xff] %vm761, %v716
        %788 = vst.msk [vmem:[#allocation3 + $0xd0] sm:$0xff] %vm761, %v718
        %789 = vst.msk [vmem:[#allocation3 + $0xd8] sm:$0xff] %vm761, %v720
        %790 = vst.msk [vmem:[#allocation3 + $0xe0] sm:$0xff] %vm761, %v722
        %791 = vst.msk [vmem:[#allocation3 + $0xe8] sm:$0xff] %vm761, %v724
        %792 = vst.msk [vmem:[#allocation3 + $0xf0] sm:$0xff] %vm761, %v726
        %793 = vst.msk [vmem:[#allocation3 + $0xf8] sm:$0xff] %vm761, %v728
        %v794 = vld [vmem:[%s311] sm:$0xff]
        %v795 = vld [vmem:[%s311 + $0x8] sm:$0xff]
        %v796 = vld [vmem:[%s311 + $0x18] sm:$0xff]
        %v797 = vld [vmem:[%s311 + $0x20] sm:$0xff]
        %v798 = vld [vmem:[%s311 + $0x30] sm:$0xff]
        %v799 = vld [vmem:[%s311 + $0x38] sm:$0xff]
        %v800 = vld [vmem:[%s311 + $0x48] sm:$0xff]
        %v801 = vld [vmem:[%s311 + $0x50] sm:$0xff]
        %v802 = vld [vmem:[%s311 + $0x60] sm:$0xff]
        %v803 = vld [vmem:[%s311 + $0x68] sm:$0xff]
        %v804 = vld [vmem:[%s311 + $0x78] sm:$0xff]
        %v805 = vld [vmem:[%s311 + $0x80] sm:$0xff]
        %v806 = vld [vmem:[%s311 + $0x90] sm:$0xff]
        %v807 = vld [vmem:[%s311 + $0x98] sm:$0xff]
        %v808 = vld [vmem:[%s311 + $0xa8] sm:$0xff]
        %v809 = vld [vmem:[%s311 + $0xb0] sm:$0xff]
        %v810 = vld [vmem:[%s311 + $0xc0] sm:$0xff]
        %v811 = vld [vmem:[%s311 + $0xc8] sm:$0xff]
        %v812 = vld [vmem:[%s311 + $0xd8] sm:$0xff]
        %v813 = vld [vmem:[%s311 + $0xe0] sm:$0xff]
        %v814 = vld [vmem:[%s311 + $0xf0] sm:$0xff]
        %v815 = vld [vmem:[%s311 + $0xf8] sm:$0xff]
        %v816 = vld [vmem:[%s311 + $0x108] sm:$0xff]
        %v817 = vld [vmem:[%s311 + $0x110] sm:$0xff]
        %v818 = vld [vmem:[%s311 + $0x120] sm:$0xff]
        %v819 = vld [vmem:[%s311 + $0x128] sm:$0xff]
        %v820 = vld [vmem:[%s311 + $0x138] sm:$0xff]
        %v821 = vld [vmem:[%s311 + $0x140] sm:$0xff]
        %v822 = vld [vmem:[%s311 + $0x150] sm:$0xff]
        %v823 = vld [vmem:[%s311 + $0x158] sm:$0xff]
        %v824 = vld [vmem:[%s311 + $0x168] sm:$0xff]
        %v825 = vld [vmem:[%s311 + $0x170] sm:$0xff]
        %858 = vrot.lane.b32.xlu0 %v794, 3
        %v859 = vpop.permute.xlu0 %858
        %860 = vrot.lane.b32.xlu0 %v795, 3
        %v861 = vpop.permute.xlu0 %860
        %862 = vrot.lane.b32.xlu0 %v796, 3
        %v863 = vpop.permute.xlu0 %862
        %864 = vrot.lane.b32.xlu0 %v797, 3
        %v865 = vpop.permute.xlu0 %864
        %866 = vrot.lane.b32.xlu0 %v798, 3
        %v867 = vpop.permute.xlu0 %866
        %868 = vrot.lane.b32.xlu0 %v799, 3
        %v869 = vpop.permute.xlu0 %868
        %870 = vrot.lane.b32.xlu0 %v800, 3
        %v871 = vpop.permute.xlu0 %870
        %872 = vrot.lane.b32.xlu0 %v801, 3
        %v873 = vpop.permute.xlu0 %872
        %874 = vrot.lane.b32.xlu0 %v802, 3
        %v875 = vpop.permute.xlu0 %874
        %876 = vrot.lane.b32.xlu0 %v803, 3
        %v877 = vpop.permute.xlu0 %876
        %878 = vrot.lane.b32.xlu0 %v804, 3
        %v879 = vpop.permute.xlu0 %878
        %880 = vrot.lane.b32.xlu0 %v805, 3
        %v881 = vpop.permute.xlu0 %880
        %882 = vrot.lane.b32.xlu0 %v806, 3
        %v883 = vpop.permute.xlu0 %882
        %884 = vrot.lane.b32.xlu0 %v807, 3
        %v885 = vpop.permute.xlu0 %884
        %886 = vrot.lane.b32.xlu0 %v808, 3
        %v887 = vpop.permute.xlu0 %886
        %888 = vrot.lane.b32.xlu0 %v809, 3
        %v889 = vpop.permute.xlu0 %888
        %890 = vrot.lane.b32.xlu0 %v810, 3
        %v891 = vpop.permute.xlu0 %890
        %892 = vrot.lane.b32.xlu0 %v811, 3
        %v893 = vpop.permute.xlu0 %892
        %894 = vrot.lane.b32.xlu0 %v812, 3
        %v895 = vpop.permute.xlu0 %894
        %896 = vrot.lane.b32.xlu0 %v813, 3
        %v897 = vpop.permute.xlu0 %896
        %898 = vrot.lane.b32.xlu0 %v814, 3
        %v899 = vpop.permute.xlu0 %898
        %900 = vrot.lane.b32.xlu0 %v815, 3
        %v901 = vpop.permute.xlu0 %900
        %902 = vrot.lane.b32.xlu0 %v816, 3
        %v903 = vpop.permute.xlu0 %902
        %904 = vrot.lane.b32.xlu0 %v817, 3
        %v905 = vpop.permute.xlu0 %904
        %906 = vrot.lane.b32.xlu0 %v818, 3
        %v907 = vpop.permute.xlu0 %906
        %908 = vrot.lane.b32.xlu0 %v819, 3
        %v909 = vpop.permute.xlu0 %908
        %910 = vrot.lane.b32.xlu0 %v820, 3
        %v911 = vpop.permute.xlu0 %910
        %912 = vrot.lane.b32.xlu0 %v821, 3
        %v913 = vpop.permute.xlu0 %912
        %914 = vrot.lane.b32.xlu0 %v822, 3
        %v915 = vpop.permute.xlu0 %914
        %916 = vrot.lane.b32.xlu0 %v823, 3
        %v917 = vpop.permute.xlu0 %916
        %918 = vrot.lane.b32.xlu0 %v824, 3
        %v919 = vpop.permute.xlu0 %918
        %920 = vrot.lane.b32.xlu0 %v825, 3
        %v921 = vpop.permute.xlu0 %920
        %vm954 = vcmask 31768
        %955 = vst.msk [vmem:[#allocation3] sm:$0xff] %vm954, %v859
        %956 = vst.msk [vmem:[#allocation3 + $0x8] sm:$0xff] %vm954, %v861
        %957 = vst.msk [vmem:[#allocation3 + $0x10] sm:$0xff] %vm954, %v863
        %958 = vst.msk [vmem:[#allocation3 + $0x18] sm:$0xff] %vm954, %v865
        %959 = vst.msk [vmem:[#allocation3 + $0x20] sm:$0xff] %vm954, %v867
        %960 = vst.msk [vmem:[#allocation3 + $0x28] sm:$0xff] %vm954, %v869
        %961 = vst.msk [vmem:[#allocation3 + $0x30] sm:$0xff] %vm954, %v871
        %962 = vst.msk [vmem:[#allocation3 + $0x38] sm:$0xff] %vm954, %v873
        %963 = vst.msk [vmem:[#allocation3 + $0x40] sm:$0xff] %vm954, %v875
        %964 = vst.msk [vmem:[#allocation3 + $0x48] sm:$0xff] %vm954, %v877
        %965 = vst.msk [vmem:[#allocation3 + $0x50] sm:$0xff] %vm954, %v879
        %966 = vst.msk [vmem:[#allocation3 + $0x58] sm:$0xff] %vm954, %v881
        %967 = vst.msk [vmem:[#allocation3 + $0x60] sm:$0xff] %vm954, %v883
        %968 = vst.msk [vmem:[#allocation3 + $0x68] sm:$0xff] %vm954, %v885
        %969 = vst.msk [vmem:[#allocation3 + $0x70] sm:$0xff] %vm954, %v887
        %970 = vst.msk [vmem:[#allocation3 + $0x78] sm:$0xff] %vm954, %v889
        %971 = vst.msk [vmem:[#allocation3 + $0x80] sm:$0xff] %vm954, %v891
        %972 = vst.msk [vmem:[#allocation3 + $0x88] sm:$0xff] %vm954, %v893
        %973 = vst.msk [vmem:[#allocation3 + $0x90] sm:$0xff] %vm954, %v895
        %974 = vst.msk [vmem:[#allocation3 + $0x98] sm:$0xff] %vm954, %v897
        %975 = vst.msk [vmem:[#allocation3 + $0xa0] sm:$0xff] %vm954, %v899
        %976 = vst.msk [vmem:[#allocation3 + $0xa8] sm:$0xff] %vm954, %v901
        %977 = vst.msk [vmem:[#allocation3 + $0xb0] sm:$0xff] %vm954, %v903
        %978 = vst.msk [vmem:[#allocation3 + $0xb8] sm:$0xff] %vm954, %v905
        %979 = vst.msk [vmem:[#allocation3 + $0xc0] sm:$0xff] %vm954, %v907
        %980 = vst.msk [vmem:[#allocation3 + $0xc8] sm:$0xff] %vm954, %v909
        %981 = vst.msk [vmem:[#allocation3 + $0xd0] sm:$0xff] %vm954, %v911
        %982 = vst.msk [vmem:[#allocation3 + $0xd8] sm:$0xff] %vm954, %v913
        %983 = vst.msk [vmem:[#allocation3 + $0xe0] sm:$0xff] %vm954, %v915
        %984 = vst.msk [vmem:[#allocation3 + $0xe8] sm:$0xff] %vm954, %v917
        %985 = vst.msk [vmem:[#allocation3 + $0xf0] sm:$0xff] %vm954, %v919
        %986 = vst.msk [vmem:[#allocation3 + $0xf8] sm:$0xff] %vm954, %v921
        %v987 = vld [vmem:[%s311 + $0x1] sm:$0xff]
        %v988 = vld [vmem:[%s311 + $0x9] sm:$0xff]
        %v989 = vld [vmem:[%s311 + $0x19] sm:$0xff]
        %v990 = vld [vmem:[%s311 + $0x21] sm:$0xff]
        %v991 = vld [vmem:[%s311 + $0x31] sm:$0xff]
        %v992 = vld [vmem:[%s311 + $0x39] sm:$0xff]
        %v993 = vld [vmem:[%s311 + $0x49] sm:$0xff]
        %v994 = vld [vmem:[%s311 + $0x51] sm:$0xff]
        %v995 = vld [vmem:[%s311 + $0x61] sm:$0xff]
        %v996 = vld [vmem:[%s311 + $0x69] sm:$0xff]
        %v997 = vld [vmem:[%s311 + $0x79] sm:$0xff]
        %v998 = vld [vmem:[%s311 + $0x81] sm:$0xff]
        %v999 = vld [vmem:[%s311 + $0x91] sm:$0xff]
        %v1000 = vld [vmem:[%s311 + $0x99] sm:$0xff]
        %v1001 = vld [vmem:[%s311 + $0xa9] sm:$0xff]
        %v1002 = vld [vmem:[%s311 + $0xb1] sm:$0xff]
        %v1003 = vld [vmem:[%s311 + $0xc1] sm:$0xff]
        %v1004 = vld [vmem:[%s311 + $0xc9] sm:$0xff]
        %v1005 = vld [vmem:[%s311 + $0xd9] sm:$0xff]
        %v1006 = vld [vmem:[%s311 + $0xe1] sm:$0xff]
        %v1007 = vld [vmem:[%s311 + $0xf1] sm:$0xff]
        %v1008 = vld [vmem:[%s311 + $0xf9] sm:$0xff]
        %v1009 = vld [vmem:[%s311 + $0x109] sm:$0xff]
        %v1010 = vld [vmem:[%s311 + $0x111] sm:$0xff]
        %v1011 = vld [vmem:[%s311 + $0x121] sm:$0xff]
        %v1012 = vld [vmem:[%s311 + $0x129] sm:$0xff]
        %v1013 = vld [vmem:[%s311 + $0x139] sm:$0xff]
        %v1014 = vld [vmem:[%s311 + $0x141] sm:$0xff]
        %v1015 = vld [vmem:[%s311 + $0x151] sm:$0xff]
        %v1016 = vld [vmem:[%s311 + $0x159] sm:$0xff]
        %v1017 = vld [vmem:[%s311 + $0x169] sm:$0xff]
        %v1018 = vld [vmem:[%s311 + $0x171] sm:$0xff]
        %1051 = vrot.lane.b32.xlu0 %v987, 4
        %v1052 = vpop.permute.xlu0 %1051
        %1053 = vrot.lane.b32.xlu0 %v988, 4
        %v1054 = vpop.permute.xlu0 %1053
        %1055 = vrot.lane.b32.xlu0 %v989, 4
        %v1056 = vpop.permute.xlu0 %1055
        %1057 = vrot.lane.b32.xlu0 %v990, 4
        %v1058 = vpop.permute.xlu0 %1057
        %1059 = vrot.lane.b32.xlu0 %v991, 4
        %v1060 = vpop.permute.xlu0 %1059
        %1061 = vrot.lane.b32.xlu0 %v992, 4
        %v1062 = vpop.permute.xlu0 %1061
        %1063 = vrot.lane.b32.xlu0 %v993, 4
        %v1064 = vpop.permute.xlu0 %1063
        %1065 = vrot.lane.b32.xlu0 %v994, 4
        %v1066 = vpop.permute.xlu0 %1065
        %1067 = vrot.lane.b32.xlu0 %v995, 4
        %v1068 = vpop.permute.xlu0 %1067
        %1069 = vrot.lane.b32.xlu0 %v996, 4
        %v1070 = vpop.permute.xlu0 %1069
        %1071 = vrot.lane.b32.xlu0 %v997, 4
        %v1072 = vpop.permute.xlu0 %1071
        %1073 = vrot.lane.b32.xlu0 %v998, 4
        %v1074 = vpop.permute.xlu0 %1073
        %1075 = vrot.lane.b32.xlu0 %v999, 4
        %v1076 = vpop.permute.xlu0 %1075
        %1077 = vrot.lane.b32.xlu0 %v1000, 4
        %v1078 = vpop.permute.xlu0 %1077
        %1079 = vrot.lane.b32.xlu0 %v1001, 4
        %v1080 = vpop.permute.xlu0 %1079
        %1081 = vrot.lane.b32.xlu0 %v1002, 4
        %v1082 = vpop.permute.xlu0 %1081
        %1083 = vrot.lane.b32.xlu0 %v1003, 4
        %v1084 = vpop.permute.xlu0 %1083
        %1085 = vrot.lane.b32.xlu0 %v1004, 4
        %v1086 = vpop.permute.xlu0 %1085
        %1087 = vrot.lane.b32.xlu0 %v1005, 4
        %v1088 = vpop.permute.xlu0 %1087
        %1089 = vrot.lane.b32.xlu0 %v1006, 4
        %v1090 = vpop.permute.xlu0 %1089
        %1091 = vrot.lane.b32.xlu0 %v1007, 4
        %v1092 = vpop.permute.xlu0 %1091
        %1093 = vrot.lane.b32.xlu0 %v1008, 4
        %v1094 = vpop.permute.xlu0 %1093
        %1095 = vrot.lane.b32.xlu0 %v1009, 4
        %v1096 = vpop.permute.xlu0 %1095
        %1097 = vrot.lane.b32.xlu0 %v1010, 4
        %v1098 = vpop.permute.xlu0 %1097
        %1099 = vrot.lane.b32.xlu0 %v1011, 4
        %v1100 = vpop.permute.xlu0 %1099
        %1101 = vrot.lane.b32.xlu0 %v1012, 4
        %v1102 = vpop.permute.xlu0 %1101
        %1103 = vrot.lane.b32.xlu0 %v1013, 4
        %v1104 = vpop.permute.xlu0 %1103
        %1105 = vrot.lane.b32.xlu0 %v1014, 4
        %v1106 = vpop.permute.xlu0 %1105
        %1107 = vrot.lane.b32.xlu0 %v1015, 4
        %v1108 = vpop.permute.xlu0 %1107
        %1109 = vrot.lane.b32.xlu0 %v1016, 4
        %v1110 = vpop.permute.xlu0 %1109
        %1111 = vrot.lane.b32.xlu0 %v1017, 4
        %v1112 = vpop.permute.xlu0 %1111
        %1113 = vrot.lane.b32.xlu0 %v1018, 4
        %v1114 = vpop.permute.xlu0 %1113
        %vm1147 = vcmask 39968
        %1148 = vst.msk [vmem:[#allocation3] sm:$0xff] %vm1147, %v1052
        %1149 = vst.msk [vmem:[#allocation3 + $0x8] sm:$0xff] %vm1147, %v1054
        %1150 = vst.msk [vmem:[#allocation3 + $0x10] sm:$0xff] %vm1147, %v1056
        %1151 = vst.msk [vmem:[#allocation3 + $0x18] sm:$0xff] %vm1147, %v1058
        %1152 = vst.msk [vmem:[#allocation3 + $0x20] sm:$0xff] %vm1147, %v1060
        %1153 = vst.msk [vmem:[#allocation3 + $0x28] sm:$0xff] %vm1147, %v1062
        %1154 = vst.msk [vmem:[#allocation3 + $0x30] sm:$0xff] %vm1147, %v1064
        %1155 = vst.msk [vmem:[#allocation3 + $0x38] sm:$0xff] %vm1147, %v1066
        %1156 = vst.msk [vmem:[#allocation3 + $0x40] sm:$0xff] %vm1147, %v1068
        %1157 = vst.msk [vmem:[#allocation3 + $0x48] sm:$0xff] %vm1147, %v1070
        %1158 = vst.msk [vmem:[#allocation3 + $0x50] sm:$0xff] %vm1147, %v1072
        %1159 = vst.msk [vmem:[#allocation3 + $0x58] sm:$0xff] %vm1147, %v1074
        %1160 = vst.msk [vmem:[#allocation3 + $0x60] sm:$0xff] %vm1147, %v1076
        %1161 = vst.msk [vmem:[#allocation3 + $0x68] sm:$0xff] %vm1147, %v1078
        %1162 = vst.msk [vmem:[#allocation3 + $0x70] sm:$0xff] %vm1147, %v1080
        %1163 = vst.msk [vmem:[#allocation3 + $0x78] sm:$0xff] %vm1147, %v1082
        %1164 = vst.msk [vmem:[#allocation3 + $0x80] sm:$0xff] %vm1147, %v1084
        %1165 = vst.msk [vmem:[#allocation3 + $0x88] sm:$0xff] %vm1147, %v1086
        %1166 = vst.msk [vmem:[#allocation3 + $0x90] sm:$0xff] %vm1147, %v1088
        %1167 = vst.msk [vmem:[#allocation3 + $0x98] sm:$0xff] %vm1147, %v1090
        %1168 = vst.msk [vmem:[#allocation3 + $0xa0] sm:$0xff] %vm1147, %v1092
        %1169 = vst.msk [vmem:[#allocation3 + $0xa8] sm:$0xff] %vm1147, %v1094
        %1170 = vst.msk [vmem:[#allocation3 + $0xb0] sm:$0xff] %vm1147, %v1096
        %1171 = vst.msk [vmem:[#allocation3 + $0xb8] sm:$0xff] %vm1147, %v1098
        %1172 = vst.msk [vmem:[#allocation3 + $0xc0] sm:$0xff] %vm1147, %v1100
        %1173 = vst.msk [vmem:[#allocation3 + $0xc8] sm:$0xff] %vm1147, %v1102
        %1174 = vst.msk [vmem:[#allocation3 + $0xd0] sm:$0xff] %vm1147, %v1104
        %1175 = vst.msk [vmem:[#allocation3 + $0xd8] sm:$0xff] %vm1147, %v1106
        %1176 = vst.msk [vmem:[#allocation3 + $0xe0] sm:$0xff] %vm1147, %v1108
        %1177 = vst.msk [vmem:[#allocation3 + $0xe8] sm:$0xff] %vm1147, %v1110
        %1178 = vst.msk [vmem:[#allocation3 + $0xf0] sm:$0xff] %vm1147, %v1112
        %1179 = vst.msk [vmem:[#allocation3 + $0xf8] sm:$0xff] %vm1147, %v1114
        %v1180 = vld [vmem:[%s311 + $0x2] sm:$0xff]
        %v1181 = vld [vmem:[%s311 + $0xa] sm:$0xff]
        %v1182 = vld [vmem:[%s311 + $0x1a] sm:$0xff]
        %v1183 = vld [vmem:[%s311 + $0x22] sm:$0xff]
        %v1184 = vld [vmem:[%s311 + $0x32] sm:$0xff]
        %v1185 = vld [vmem:[%s311 + $0x3a] sm:$0xff]
        %v1186 = vld [vmem:[%s311 + $0x4a] sm:$0xff]
        %v1187 = vld [vmem:[%s311 + $0x52] sm:$0xff]
        %v1188 = vld [vmem:[%s311 + $0x62] sm:$0xff]
        %v1189 = vld [vmem:[%s311 + $0x6a] sm:$0xff]
        %v1190 = vld [vmem:[%s311 + $0x7a] sm:$0xff]
        %v1191 = vld [vmem:[%s311 + $0x82] sm:$0xff]
        %v1192 = vld [vmem:[%s311 + $0x92] sm:$0xff]
        %v1193 = vld [vmem:[%s311 + $0x9a] sm:$0xff]
        %v1194 = vld [vmem:[%s311 + $0xaa] sm:$0xff]
        %v1195 = vld [vmem:[%s311 + $0xb2] sm:$0xff]
        %v1196 = vld [vmem:[%s311 + $0xc2] sm:$0xff]
        %v1197 = vld [vmem:[%s311 + $0xca] sm:$0xff]
        %v1198 = vld [vmem:[%s311 + $0xda] sm:$0xff]
        %v1199 = vld [vmem:[%s311 + $0xe2] sm:$0xff]
        %v1200 = vld [vmem:[%s311 + $0xf2] sm:$0xff]
        %v1201 = vld [vmem:[%s311 + $0xfa] sm:$0xff]
        %v1202 = vld [vmem:[%s311 + $0x10a] sm:$0xff]
        %v1203 = vld [vmem:[%s311 + $0x112] sm:$0xff]
        %v1204 = vld [vmem:[%s311 + $0x122] sm:$0xff]
        %v1205 = vld [vmem:[%s311 + $0x12a] sm:$0xff]
        %v1206 = vld [vmem:[%s311 + $0x13a] sm:$0xff]
        %v1207 = vld [vmem:[%s311 + $0x142] sm:$0xff]
        %v1208 = vld [vmem:[%s311 + $0x152] sm:$0xff]
        %v1209 = vld [vmem:[%s311 + $0x15a] sm:$0xff]
        %v1210 = vld [vmem:[%s311 + $0x16a] sm:$0xff]
        %v1211 = vld [vmem:[%s311 + $0x172] sm:$0xff]
        %1244 = vrot.lane.b32.xlu0 %v1180, 5
        %v1245 = vpop.permute.xlu0 %1244
        %1246 = vrot.lane.b32.xlu0 %v1181, 5
        %v1247 = vpop.permute.xlu0 %1246
        %1248 = vrot.lane.b32.xlu0 %v1182, 5
        %v1249 = vpop.permute.xlu0 %1248
        %1250 = vrot.lane.b32.xlu0 %v1183, 5
        %v1251 = vpop.permute.xlu0 %1250
        %1252 = vrot.lane.b32.xlu0 %v1184, 5
        %v1253 = vpop.permute.xlu0 %1252
        %1254 = vrot.lane.b32.xlu0 %v1185, 5
        %v1255 = vpop.permute.xlu0 %1254
        %1256 = vrot.lane.b32.xlu0 %v1186, 5
        %v1257 = vpop.permute.xlu0 %1256
        %1258 = vrot.lane.b32.xlu0 %v1187, 5
        %v1259 = vpop.permute.xlu0 %1258
        %1260 = vrot.lane.b32.xlu0 %v1188, 5
        %v1261 = vpop.permute.xlu0 %1260
        %1262 = vrot.lane.b32.xlu0 %v1189, 5
        %v1263 = vpop.permute.xlu0 %1262
        %1264 = vrot.lane.b32.xlu0 %v1190, 5
        %v1265 = vpop.permute.xlu0 %1264
        %1266 = vrot.lane.b32.xlu0 %v1191, 5
        %v1267 = vpop.permute.xlu0 %1266
        %1268 = vrot.lane.b32.xlu0 %v1192, 5
        %v1269 = vpop.permute.xlu0 %1268
        %1270 = vrot.lane.b32.xlu0 %v1193, 5
        %v1271 = vpop.permute.xlu0 %1270
        %1272 = vrot.lane.b32.xlu0 %v1194, 5
        %v1273 = vpop.permute.xlu0 %1272
        %1274 = vrot.lane.b32.xlu0 %v1195, 5
        %v1275 = vpop.permute.xlu0 %1274
        %1276 = vrot.lane.b32.xlu0 %v1196, 5
        %v1277 = vpop.permute.xlu0 %1276
        %1278 = vrot.lane.b32.xlu0 %v1197, 5
        %v1279 = vpop.permute.xlu0 %1278
        %1280 = vrot.lane.b32.xlu0 %v1198, 5
        %v1281 = vpop.permute.xlu0 %1280
        %1282 = vrot.lane.b32.xlu0 %v1199, 5
        %v1283 = vpop.permute.xlu0 %1282
        %1284 = vrot.lane.b32.xlu0 %v1200, 5
        %v1285 = vpop.permute.xlu0 %1284
        %1286 = vrot.lane.b32.xlu0 %v1201, 5
        %v1287 = vpop.permute.xlu0 %1286
        %1288 = vrot.lane.b32.xlu0 %v1202, 5
        %v1289 = vpop.permute.xlu0 %1288
        %1290 = vrot.lane.b32.xlu0 %v1203, 5
        %v1291 = vpop.permute.xlu0 %1290
        %1292 = vrot.lane.b32.xlu0 %v1204, 5
        %v1293 = vpop.permute.xlu0 %1292
        %1294 = vrot.lane.b32.xlu0 %v1205, 5
        %v1295 = vpop.permute.xlu0 %1294
        %1296 = vrot.lane.b32.xlu0 %v1206, 5
        %v1297 = vpop.permute.xlu0 %1296
        %1298 = vrot.lane.b32.xlu0 %v1207, 5
        %v1299 = vpop.permute.xlu0 %1298
        %1300 = vrot.lane.b32.xlu0 %v1208, 5
        %v1301 = vpop.permute.xlu0 %1300
        %1302 = vrot.lane.b32.xlu0 %v1209, 5
        %v1303 = vpop.permute.xlu0 %1302
        %1304 = vrot.lane.b32.xlu0 %v1210, 5
        %v1305 = vpop.permute.xlu0 %1304
        %1306 = vrot.lane.b32.xlu0 %v1211, 5
        %v1307 = vpop.permute.xlu0 %1306
        %vm1340 = vcmask 48168
        %1341 = vst.msk [vmem:[#allocation3] sm:$0xff] %vm1340, %v1245
        %1342 = vst.msk [vmem:[#allocation3 + $0x8] sm:$0xff] %vm1340, %v1247
        %1343 = vst.msk [vmem:[#allocation3 + $0x10] sm:$0xff] %vm1340, %v1249
        %1344 = vst.msk [vmem:[#allocation3 + $0x18] sm:$0xff] %vm1340, %v1251
        %1345 = vst.msk [vmem:[#allocation3 + $0x20] sm:$0xff] %vm1340, %v1253
        %1346 = vst.msk [vmem:[#allocation3 + $0x28] sm:$0xff] %vm1340, %v1255
        %1347 = vst.msk [vmem:[#allocation3 + $0x30] sm:$0xff] %vm1340, %v1257
        %1348 = vst.msk [vmem:[#allocation3 + $0x38] sm:$0xff] %vm1340, %v1259
        %1349 = vst.msk [vmem:[#allocation3 + $0x40] sm:$0xff] %vm1340, %v1261
        %1350 = vst.msk [vmem:[#allocation3 + $0x48] sm:$0xff] %vm1340, %v1263
        %1351 = vst.msk [vmem:[#allocation3 + $0x50] sm:$0xff] %vm1340, %v1265
        %1352 = vst.msk [vmem:[#allocation3 + $0x58] sm:$0xff] %vm1340, %v1267
        %1353 = vst.msk [vmem:[#allocation3 + $0x60] sm:$0xff] %vm1340, %v1269
        %1354 = vst.msk [vmem:[#allocation3 + $0x68] sm:$0xff] %vm1340, %v1271
        %1355 = vst.msk [vmem:[#allocation3 + $0x70] sm:$0xff] %vm1340, %v1273
        %1356 = vst.msk [vmem:[#allocation3 + $0x78] sm:$0xff] %vm1340, %v1275
        %1357 = vst.msk [vmem:[#allocation3 + $0x80] sm:$0xff] %vm1340, %v1277
        %1358 = vst.msk [vmem:[#allocation3 + $0x88] sm:$0xff] %vm1340, %v1279
        %1359 = vst.msk [vmem:[#allocation3 + $0x90] sm:$0xff] %vm1340, %v1281
        %1360 = vst.msk [vmem:[#allocation3 + $0x98] sm:$0xff] %vm1340, %v1283
        %1361 = vst.msk [vmem:[#allocation3 + $0xa0] sm:$0xff] %vm1340, %v1285
        %1362 = vst.msk [vmem:[#allocation3 + $0xa8] sm:$0xff] %vm1340, %v1287
        %1363 = vst.msk [vmem:[#allocation3 + $0xb0] sm:$0xff] %vm1340, %v1289
        %1364 = vst.msk [vmem:[#allocation3 + $0xb8] sm:$0xff] %vm1340, %v1291
        %1365 = vst.msk [vmem:[#allocation3 + $0xc0] sm:$0xff] %vm1340, %v1293
        %1366 = vst.msk [vmem:[#allocation3 + $0xc8] sm:$0xff] %vm1340, %v1295
        %1367 = vst.msk [vmem:[#allocation3 + $0xd0] sm:$0xff] %vm1340, %v1297
        %1368 = vst.msk [vmem:[#allocation3 + $0xd8] sm:$0xff] %vm1340, %v1299
        %1369 = vst.msk [vmem:[#allocation3 + $0xe0] sm:$0xff] %vm1340, %v1301
        %1370 = vst.msk [vmem:[#allocation3 + $0xe8] sm:$0xff] %vm1340, %v1303
        %1371 = vst.msk [vmem:[#allocation3 + $0xf0] sm:$0xff] %vm1340, %v1305
        %1372 = vst.msk [vmem:[#allocation3 + $0xf8] sm:$0xff] %vm1340, %v1307
        %s1373 = scalar_lea.vmem [#allocation2], 48
        %v1374 = vld [vmem:[%s1373] sm:$0xff]
        %v1375 = vld [vmem:[%s1373 + $0x8] sm:$0xff]
        %v1376 = vld [vmem:[%s1373 + $0x18] sm:$0xff]
        %v1377 = vld [vmem:[%s1373 + $0x20] sm:$0xff]
        %v1378 = vld [vmem:[%s1373 + $0x30] sm:$0xff]
        %v1379 = vld [vmem:[%s1373 + $0x38] sm:$0xff]
        %v1380 = vld [vmem:[%s1373 + $0x48] sm:$0xff]
        %v1381 = vld [vmem:[%s1373 + $0x50] sm:$0xff]
        %v1382 = vld [vmem:[%s1373 + $0x60] sm:$0xff]
        %v1383 = vld [vmem:[%s1373 + $0x68] sm:$0xff]
        %v1384 = vld [vmem:[%s1373 + $0x78] sm:$0xff]
        %v1385 = vld [vmem:[%s1373 + $0x80] sm:$0xff]
        %v1386 = vld [vmem:[%s1373 + $0x90] sm:$0xff]
        %v1387 = vld [vmem:[%s1373 + $0x98] sm:$0xff]
        %v1388 = vld [vmem:[%s1373 + $0xa8] sm:$0xff]
        %v1389 = vld [vmem:[%s1373 + $0xb0] sm:$0xff]
        %v1390 = vld [vmem:[%s1373 + $0xc0] sm:$0xff]
        %v1391 = vld [vmem:[%s1373 + $0xc8] sm:$0xff]
        %v1392 = vld [vmem:[%s1373 + $0xd8] sm:$0xff]
        %v1393 = vld [vmem:[%s1373 + $0xe0] sm:$0xff]
        %v1394 = vld [vmem:[%s1373 + $0xf0] sm:$0xff]
        %v1395 = vld [vmem:[%s1373 + $0xf8] sm:$0xff]
        %v1396 = vld [vmem:[%s1373 + $0x108] sm:$0xff]
        %v1397 = vld [vmem:[%s1373 + $0x110] sm:$0xff]
        %v1398 = vld [vmem:[%s1373 + $0x120] sm:$0xff]
        %v1399 = vld [vmem:[%s1373 + $0x128] sm:$0xff]
        %v1400 = vld [vmem:[%s1373 + $0x138] sm:$0xff]
        %v1401 = vld [vmem:[%s1373 + $0x140] sm:$0xff]
        %v1402 = vld [vmem:[%s1373 + $0x150] sm:$0xff]
        %v1403 = vld [vmem:[%s1373 + $0x158] sm:$0xff]
        %v1404 = vld [vmem:[%s1373 + $0x168] sm:$0xff]
        %v1405 = vld [vmem:[%s1373 + $0x170] sm:$0xff]
        %1438 = vrot.lane.b32.xlu0 %v1374, 6
        %v1439 = vpop.permute.xlu0 %1438
        %1440 = vrot.lane.b32.xlu0 %v1375, 6
        %v1441 = vpop.permute.xlu0 %1440
        %1442 = vrot.lane.b32.xlu0 %v1376, 6
        %v1443 = vpop.permute.xlu0 %1442
        %1444 = vrot.lane.b32.xlu0 %v1377, 6
        %v1445 = vpop.permute.xlu0 %1444
        %1446 = vrot.lane.b32.xlu0 %v1378, 6
        %v1447 = vpop.permute.xlu0 %1446
        %1448 = vrot.lane.b32.xlu0 %v1379, 6
        %v1449 = vpop.permute.xlu0 %1448
        %1450 = vrot.lane.b32.xlu0 %v1380, 6
        %v1451 = vpop.permute.xlu0 %1450
        %1452 = vrot.lane.b32.xlu0 %v1381, 6
        %v1453 = vpop.permute.xlu0 %1452
        %1454 = vrot.lane.b32.xlu0 %v1382, 6
        %v1455 = vpop.permute.xlu0 %1454
        %1456 = vrot.lane.b32.xlu0 %v1383, 6
        %v1457 = vpop.permute.xlu0 %1456
        %1458 = vrot.lane.b32.xlu0 %v1384, 6
        %v1459 = vpop.permute.xlu0 %1458
        %1460 = vrot.lane.b32.xlu0 %v1385, 6
        %v1461 = vpop.permute.xlu0 %1460
        %1462 = vrot.lane.b32.xlu0 %v1386, 6
        %v1463 = vpop.permute.xlu0 %1462
        %1464 = vrot.lane.b32.xlu0 %v1387, 6
        %v1465 = vpop.permute.xlu0 %1464
        %1466 = vrot.lane.b32.xlu0 %v1388, 6
        %v1467 = vpop.permute.xlu0 %1466
        %1468 = vrot.lane.b32.xlu0 %v1389, 6
        %v1469 = vpop.permute.xlu0 %1468
        %1470 = vrot.lane.b32.xlu0 %v1390, 6
        %v1471 = vpop.permute.xlu0 %1470
        %1472 = vrot.lane.b32.xlu0 %v1391, 6
        %v1473 = vpop.permute.xlu0 %1472
        %1474 = vrot.lane.b32.xlu0 %v1392, 6
        %v1475 = vpop.permute.xlu0 %1474
        %1476 = vrot.lane.b32.xlu0 %v1393, 6
        %v1477 = vpop.permute.xlu0 %1476
        %1478 = vrot.lane.b32.xlu0 %v1394, 6
        %v1479 = vpop.permute.xlu0 %1478
        %1480 = vrot.lane.b32.xlu0 %v1395, 6
        %v1481 = vpop.permute.xlu0 %1480
        %1482 = vrot.lane.b32.xlu0 %v1396, 6
        %v1483 = vpop.permute.xlu0 %1482
        %1484 = vrot.lane.b32.xlu0 %v1397, 6
        %v1485 = vpop.permute.xlu0 %1484
        %1486 = vrot.lane.b32.xlu0 %v1398, 6
        %v1487 = vpop.permute.xlu0 %1486
        %1488 = vrot.lane.b32.xlu0 %v1399, 6
        %v1489 = vpop.permute.xlu0 %1488
        %1490 = vrot.lane.b32.xlu0 %v1400, 6
        %v1491 = vpop.permute.xlu0 %1490
        %1492 = vrot.lane.b32.xlu0 %v1401, 6
        %v1493 = vpop.permute.xlu0 %1492
        %1494 = vrot.lane.b32.xlu0 %v1402, 6
        %v1495 = vpop.permute.xlu0 %1494
        %1496 = vrot.lane.b32.xlu0 %v1403, 6
        %v1497 = vpop.permute.xlu0 %1496
        %1498 = vrot.lane.b32.xlu0 %v1404, 6
        %v1499 = vpop.permute.xlu0 %1498
        %1500 = vrot.lane.b32.xlu0 %v1405, 6
        %v1501 = vpop.permute.xlu0 %1500
        %vm1534 = vcmask 56368
        %1535 = vst.msk [vmem:[#allocation3] sm:$0xff] %vm1534, %v1439
        %1536 = vst.msk [vmem:[#allocation3 + $0x8] sm:$0xff] %vm1534, %v1441
        %1537 = vst.msk [vmem:[#allocation3 + $0x10] sm:$0xff] %vm1534, %v1443
        %1538 = vst.msk [vmem:[#allocation3 + $0x18] sm:$0xff] %vm1534, %v1445
        %1539 = vst.msk [vmem:[#allocation3 + $0x20] sm:$0xff] %vm1534, %v1447
        %1540 = vst.msk [vmem:[#allocation3 + $0x28] sm:$0xff] %vm1534, %v1449
        %1541 = vst.msk [vmem:[#allocation3 + $0x30] sm:$0xff] %vm1534, %v1451
        %1542 = vst.msk [vmem:[#allocation3 + $0x38] sm:$0xff] %vm1534, %v1453
        %1543 = vst.msk [vmem:[#allocation3 + $0x40] sm:$0xff] %vm1534, %v1455
        %1544 = vst.msk [vmem:[#allocation3 + $0x48] sm:$0xff] %vm1534, %v1457
        %1545 = vst.msk [vmem:[#allocation3 + $0x50] sm:$0xff] %vm1534, %v1459
        %1546 = vst.msk [vmem:[#allocation3 + $0x58] sm:$0xff] %vm1534, %v1461
        %1547 = vst.msk [vmem:[#allocation3 + $0x60] sm:$0xff] %vm1534, %v1463
        %1548 = vst.msk [vmem:[#allocation3 + $0x68] sm:$0xff] %vm1534, %v1465
        %1549 = vst.msk [vmem:[#allocation3 + $0x70] sm:$0xff] %vm1534, %v1467
        %1550 = vst.msk [vmem:[#allocation3 + $0x78] sm:$0xff] %vm1534, %v1469
        %1551 = vst.msk [vmem:[#allocation3 + $0x80] sm:$0xff] %vm1534, %v1471
        %1552 = vst.msk [vmem:[#allocation3 + $0x88] sm:$0xff] %vm1534, %v1473
        %1553 = vst.msk [vmem:[#allocation3 + $0x90] sm:$0xff] %vm1534, %v1475
        %1554 = vst.msk [vmem:[#allocation3 + $0x98] sm:$0xff] %vm1534, %v1477
        %1555 = vst.msk [vmem:[#allocation3 + $0xa0] sm:$0xff] %vm1534, %v1479
        %1556 = vst.msk [vmem:[#allocation3 + $0xa8] sm:$0xff] %vm1534, %v1481
        %1557 = vst.msk [vmem:[#allocation3 + $0xb0] sm:$0xff] %vm1534, %v1483
        %1558 = vst.msk [vmem:[#allocation3 + $0xb8] sm:$0xff] %vm1534, %v1485
        %1559 = vst.msk [vmem:[#allocation3 + $0xc0] sm:$0xff] %vm1534, %v1487
        %1560 = vst.msk [vmem:[#allocation3 + $0xc8] sm:$0xff] %vm1534, %v1489
        %1561 = vst.msk [vmem:[#allocation3 + $0xd0] sm:$0xff] %vm1534, %v1491
        %1562 = vst.msk [vmem:[#allocation3 + $0xd8] sm:$0xff] %vm1534, %v1493
        %1563 = vst.msk [vmem:[#allocation3 + $0xe0] sm:$0xff] %vm1534, %v1495
        %1564 = vst.msk [vmem:[#allocation3 + $0xe8] sm:$0xff] %vm1534, %v1497
        %1565 = vst.msk [vmem:[#allocation3 + $0xf0] sm:$0xff] %vm1534, %v1499
        %1566 = vst.msk [vmem:[#allocation3 + $0xf8] sm:$0xff] %vm1534, %v1501
        %v1567 = vld [vmem:[%s1373 + $0x1] sm:$0xff]
        %v1568 = vld [vmem:[%s1373 + $0x9] sm:$0xff]
        %v1569 = vld [vmem:[%s1373 + $0x19] sm:$0xff]
        %v1570 = vld [vmem:[%s1373 + $0x21] sm:$0xff]
        %v1571 = vld [vmem:[%s1373 + $0x31] sm:$0xff]
        %v1572 = vld [vmem:[%s1373 + $0x39] sm:$0xff]
        %v1573 = vld [vmem:[%s1373 + $0x49] sm:$0xff]
        %v1574 = vld [vmem:[%s1373 + $0x51] sm:$0xff]
        %v1575 = vld [vmem:[%s1373 + $0x61] sm:$0xff]
        %v1576 = vld [vmem:[%s1373 + $0x69] sm:$0xff]
        %v1577 = vld [vmem:[%s1373 + $0x79] sm:$0xff]
        %v1578 = vld [vmem:[%s1373 + $0x81] sm:$0xff]
        %v1579 = vld [vmem:[%s1373 + $0x91] sm:$0xff]
        %v1580 = vld [vmem:[%s1373 + $0x99] sm:$0xff]
        %v1581 = vld [vmem:[%s1373 + $0xa9] sm:$0xff]
        %v1582 = vld [vmem:[%s1373 + $0xb1] sm:$0xff]
        %v1583 = vld [vmem:[%s1373 + $0xc1] sm:$0xff]
        %v1584 = vld [vmem:[%s1373 + $0xc9] sm:$0xff]
        %v1585 = vld [vmem:[%s1373 + $0xd9] sm:$0xff]
        %v1586 = vld [vmem:[%s1373 + $0xe1] sm:$0xff]
        %v1587 = vld [vmem:[%s1373 + $0xf1] sm:$0xff]
        %v1588 = vld [vmem:[%s1373 + $0xf9] sm:$0xff]
        %v1589 = vld [vmem:[%s1373 + $0x109] sm:$0xff]
        %v1590 = vld [vmem:[%s1373 + $0x111] sm:$0xff]
        %v1591 = vld [vmem:[%s1373 + $0x121] sm:$0xff]
        %v1592 = vld [vmem:[%s1373 + $0x129] sm:$0xff]
        %v1593 = vld [vmem:[%s1373 + $0x139] sm:$0xff]
        %v1594 = vld [vmem:[%s1373 + $0x141] sm:$0xff]
        %v1595 = vld [vmem:[%s1373 + $0x151] sm:$0xff]
        %v1596 = vld [vmem:[%s1373 + $0x159] sm:$0xff]
        %v1597 = vld [vmem:[%s1373 + $0x169] sm:$0xff]
        %v1598 = vld [vmem:[%s1373 + $0x171] sm:$0xff]
        %1631 = vrot.lane.b32.xlu0 %v1567, 7
        %v1632 = vpop.permute.xlu0 %1631
        %1633 = vrot.lane.b32.xlu0 %v1568, 7
        %v1634 = vpop.permute.xlu0 %1633
        %1635 = vrot.lane.b32.xlu0 %v1569, 7
        %v1636 = vpop.permute.xlu0 %1635
        %1637 = vrot.lane.b32.xlu0 %v1570, 7
        %v1638 = vpop.permute.xlu0 %1637
        %1639 = vrot.lane.b32.xlu0 %v1571, 7
        %v1640 = vpop.permute.xlu0 %1639
        %1641 = vrot.lane.b32.xlu0 %v1572, 7
        %v1642 = vpop.permute.xlu0 %1641
        %1643 = vrot.lane.b32.xlu0 %v1573, 7
        %v1644 = vpop.permute.xlu0 %1643
        %1645 = vrot.lane.b32.xlu0 %v1574, 7
        %v1646 = vpop.permute.xlu0 %1645
        %1647 = vrot.lane.b32.xlu0 %v1575, 7
        %v1648 = vpop.permute.xlu0 %1647
        %1649 = vrot.lane.b32.xlu0 %v1576, 7
        %v1650 = vpop.permute.xlu0 %1649
        %1651 = vrot.lane.b32.xlu0 %v1577, 7
        %v1652 = vpop.permute.xlu0 %1651
        %1653 = vrot.lane.b32.xlu0 %v1578, 7
        %v1654 = vpop.permute.xlu0 %1653
        %1655 = vrot.lane.b32.xlu0 %v1579, 7
        %v1656 = vpop.permute.xlu0 %1655
        %1657 = vrot.lane.b32.xlu0 %v1580, 7
        %v1658 = vpop.permute.xlu0 %1657
        %1659 = vrot.lane.b32.xlu0 %v1581, 7
        %v1660 = vpop.permute.xlu0 %1659
        %1661 = vrot.lane.b32.xlu0 %v1582, 7
        %v1662 = vpop.permute.xlu0 %1661
        %1663 = vrot.lane.b32.xlu0 %v1583, 7
        %v1664 = vpop.permute.xlu0 %1663
        %1665 = vrot.lane.b32.xlu0 %v1584, 7
        %v1666 = vpop.permute.xlu0 %1665
        %1667 = vrot.lane.b32.xlu0 %v1585, 7
        %v1668 = vpop.permute.xlu0 %1667
        %1669 = vrot.lane.b32.xlu0 %v1586, 7
        %v1670 = vpop.permute.xlu0 %1669
        %1671 = vrot.lane.b32.xlu0 %v1587, 7
        %v1672 = vpop.permute.xlu0 %1671
        %1673 = vrot.lane.b32.xlu0 %v1588, 7
        %v1674 = vpop.permute.xlu0 %1673
        %1675 = vrot.lane.b32.xlu0 %v1589, 7
        %v1676 = vpop.permute.xlu0 %1675
        %1677 = vrot.lane.b32.xlu0 %v1590, 7
        %v1678 = vpop.permute.xlu0 %1677
        %1679 = vrot.lane.b32.xlu0 %v1591, 7
        %v1680 = vpop.permute.xlu0 %1679
        %1681 = vrot.lane.b32.xlu0 %v1592, 7
        %v1682 = vpop.permute.xlu0 %1681
        %1683 = vrot.lane.b32.xlu0 %v1593, 7
        %v1684 = vpop.permute.xlu0 %1683
        %1685 = vrot.lane.b32.xlu0 %v1594, 7
        %v1686 = vpop.permute.xlu0 %1685
        %1687 = vrot.lane.b32.xlu0 %v1595, 7
        %v1688 = vpop.permute.xlu0 %1687
        %1689 = vrot.lane.b32.xlu0 %v1596, 7
        %v1690 = vpop.permute.xlu0 %1689
        %1691 = vrot.lane.b32.xlu0 %v1597, 7
        %v1692 = vpop.permute.xlu0 %1691
        %1693 = vrot.lane.b32.xlu0 %v1598, 7
        %v1694 = vpop.permute.xlu0 %1693
        %vm1727 = vcmask 64568
        %1728 = vst.msk [vmem:[#allocation3] sm:$0xff] %vm1727, %v1632
        %1729 = vst.msk [vmem:[#allocation3 + $0x8] sm:$0xff] %vm1727, %v1634
        %1730 = vst.msk [vmem:[#allocation3 + $0x10] sm:$0xff] %vm1727, %v1636
        %1731 = vst.msk [vmem:[#allocation3 + $0x18] sm:$0xff] %vm1727, %v1638
        %1732 = vst.msk [vmem:[#allocation3 + $0x20] sm:$0xff] %vm1727, %v1640
        %1733 = vst.msk [vmem:[#allocation3 + $0x28] sm:$0xff] %vm1727, %v1642
        %1734 = vst.msk [vmem:[#allocation3 + $0x30] sm:$0xff] %vm1727, %v1644
        %1735 = vst.msk [vmem:[#allocation3 + $0x38] sm:$0xff] %vm1727, %v1646
        %1736 = vst.msk [vmem:[#allocation3 + $0x40] sm:$0xff] %vm1727, %v1648
        %1737 = vst.msk [vmem:[#allocation3 + $0x48] sm:$0xff] %vm1727, %v1650
        %1738 = vst.msk [vmem:[#allocation3 + $0x50] sm:$0xff] %vm1727, %v1652
        %1739 = vst.msk [vmem:[#allocation3 + $0x58] sm:$0xff] %vm1727, %v1654
        %1740 = vst.msk [vmem:[#allocation3 + $0x60] sm:$0xff] %vm1727, %v1656
        %1741 = vst.msk [vmem:[#allocation3 + $0x68] sm:$0xff] %vm1727, %v1658
        %1742 = vst.msk [vmem:[#allocation3 + $0x70] sm:$0xff] %vm1727, %v1660
        %1743 = vst.msk [vmem:[#allocation3 + $0x78] sm:$0xff] %vm1727, %v1662
        %1744 = vst.msk [vmem:[#allocation3 + $0x80] sm:$0xff] %vm1727, %v1664
        %1745 = vst.msk [vmem:[#allocation3 + $0x88] sm:$0xff] %vm1727, %v1666
        %1746 = vst.msk [vmem:[#allocation3 + $0x90] sm:$0xff] %vm1727, %v1668
        %1747 = vst.msk [vmem:[#allocation3 + $0x98] sm:$0xff] %vm1727, %v1670
        %1748 = vst.msk [vmem:[#allocation3 + $0xa0] sm:$0xff] %vm1727, %v1672
        %1749 = vst.msk [vmem:[#allocation3 + $0xa8] sm:$0xff] %vm1727, %v1674
        %1750 = vst.msk [vmem:[#allocation3 + $0xb0] sm:$0xff] %vm1727, %v1676
        %1751 = vst.msk [vmem:[#allocation3 + $0xb8] sm:$0xff] %vm1727, %v1678
        %1752 = vst.msk [vmem:[#allocation3 + $0xc0] sm:$0xff] %vm1727, %v1680
        %1753 = vst.msk [vmem:[#allocation3 + $0xc8] sm:$0xff] %vm1727, %v1682
        %1754 = vst.msk [vmem:[#allocation3 + $0xd0] sm:$0xff] %vm1727, %v1684
        %1755 = vst.msk [vmem:[#allocation3 + $0xd8] sm:$0xff] %vm1727, %v1686
        %1756 = vst.msk [vmem:[#allocation3 + $0xe0] sm:$0xff] %vm1727, %v1688
        %1757 = vst.msk [vmem:[#allocation3 + $0xe8] sm:$0xff] %vm1727, %v1690
        %1758 = vst.msk [vmem:[#allocation3 + $0xf0] sm:$0xff] %vm1727, %v1692
        %1759 = vst.msk [vmem:[#allocation3 + $0xf8] sm:$0xff] %vm1727, %v1694
        %v1760 = vld [vmem:[%s1373 + $0x2] sm:$0xff]
        %v1761 = vld [vmem:[%s1373 + $0xa] sm:$0xff]
        %v1762 = vld [vmem:[%s1373 + $0x1a] sm:$0xff]
        %v1763 = vld [vmem:[%s1373 + $0x22] sm:$0xff]
        %v1764 = vld [vmem:[%s1373 + $0x32] sm:$0xff]
        %v1765 = vld [vmem:[%s1373 + $0x3a] sm:$0xff]
        %v1766 = vld [vmem:[%s1373 + $0x4a] sm:$0xff]
        %v1767 = vld [vmem:[%s1373 + $0x52] sm:$0xff]
        %v1768 = vld [vmem:[%s1373 + $0x62] sm:$0xff]
        %v1769 = vld [vmem:[%s1373 + $0x6a] sm:$0xff]
        %v1770 = vld [vmem:[%s1373 + $0x7a] sm:$0xff]
        %v1771 = vld [vmem:[%s1373 + $0x82] sm:$0xff]
        %v1772 = vld [vmem:[%s1373 + $0x92] sm:$0xff]
        %v1773 = vld [vmem:[%s1373 + $0x9a] sm:$0xff]
        %v1774 = vld [vmem:[%s1373 + $0xaa] sm:$0xff]
        %v1775 = vld [vmem:[%s1373 + $0xb2] sm:$0xff]
        %v1776 = vld [vmem:[%s1373 + $0xc2] sm:$0xff]
        %v1777 = vld [vmem:[%s1373 + $0xca] sm:$0xff]
        %v1778 = vld [vmem:[%s1373 + $0xda] sm:$0xff]
        %v1779 = vld [vmem:[%s1373 + $0xe2] sm:$0xff]
        %v1780 = vld [vmem:[%s1373 + $0xf2] sm:$0xff]
        %v1781 = vld [vmem:[%s1373 + $0xfa] sm:$0xff]
        %v1782 = vld [vmem:[%s1373 + $0x10a] sm:$0xff]
        %v1783 = vld [vmem:[%s1373 + $0x112] sm:$0xff]
        %v1784 = vld [vmem:[%s1373 + $0x122] sm:$0xff]
        %v1785 = vld [vmem:[%s1373 + $0x12a] sm:$0xff]
        %v1786 = vld [vmem:[%s1373 + $0x13a] sm:$0xff]
        %v1787 = vld [vmem:[%s1373 + $0x142] sm:$0xff]
        %v1788 = vld [vmem:[%s1373 + $0x152] sm:$0xff]
        %v1789 = vld [vmem:[%s1373 + $0x15a] sm:$0xff]
        %v1790 = vld [vmem:[%s1373 + $0x16a] sm:$0xff]
        %v1791 = vld [vmem:[%s1373 + $0x172] sm:$0xff]
        %1824 = vrot.lane.b32.xlu0 %v1760, 8
        %v1825 = vpop.permute.xlu0 %1824
        %1826 = vrot.lane.b32.xlu0 %v1761, 8
        %v1827 = vpop.permute.xlu0 %1826
        %1828 = vrot.lane.b32.xlu0 %v1762, 8
        %v1829 = vpop.permute.xlu0 %1828
        %1830 = vrot.lane.b32.xlu0 %v1763, 8
        %v1831 = vpop.permute.xlu0 %1830
        %1832 = vrot.lane.b32.xlu0 %v1764, 8
        %v1833 = vpop.permute.xlu0 %1832
        %1834 = vrot.lane.b32.xlu0 %v1765, 8
        %v1835 = vpop.permute.xlu0 %1834
        %1836 = vrot.lane.b32.xlu0 %v1766, 8
        %v1837 = vpop.permute.xlu0 %1836
        %1838 = vrot.lane.b32.xlu0 %v1767, 8
        %v1839 = vpop.permute.xlu0 %1838
        %1840 = vrot.lane.b32.xlu0 %v1768, 8
        %v1841 = vpop.permute.xlu0 %1840
        %1842 = vrot.lane.b32.xlu0 %v1769, 8
        %v1843 = vpop.permute.xlu0 %1842
        %1844 = vrot.lane.b32.xlu0 %v1770, 8
        %v1845 = vpop.permute.xlu0 %1844
        %1846 = vrot.lane.b32.xlu0 %v1771, 8
        %v1847 = vpop.permute.xlu0 %1846
        %1848 = vrot.lane.b32.xlu0 %v1772, 8
        %v1849 = vpop.permute.xlu0 %1848
        %1850 = vrot.lane.b32.xlu0 %v1773, 8
        %v1851 = vpop.permute.xlu0 %1850
        %1852 = vrot.lane.b32.xlu0 %v1774, 8
        %v1853 = vpop.permute.xlu0 %1852
        %1854 = vrot.lane.b32.xlu0 %v1775, 8
        %v1855 = vpop.permute.xlu0 %1854
        %1856 = vrot.lane.b32.xlu0 %v1776, 8
        %v1857 = vpop.permute.xlu0 %1856
        %1858 = vrot.lane.b32.xlu0 %v1777, 8
        %v1859 = vpop.permute.xlu0 %1858
        %1860 = vrot.lane.b32.xlu0 %v1778, 8
        %v1861 = vpop.permute.xlu0 %1860
        %1862 = vrot.lane.b32.xlu0 %v1779, 8
        %v1863 = vpop.permute.xlu0 %1862
        %1864 = vrot.lane.b32.xlu0 %v1780, 8
        %v1865 = vpop.permute.xlu0 %1864
        %1866 = vrot.lane.b32.xlu0 %v1781, 8
        %v1867 = vpop.permute.xlu0 %1866
        %1868 = vrot.lane.b32.xlu0 %v1782, 8
        %v1869 = vpop.permute.xlu0 %1868
        %1870 = vrot.lane.b32.xlu0 %v1783, 8
        %v1871 = vpop.permute.xlu0 %1870
        %1872 = vrot.lane.b32.xlu0 %v1784, 8
        %v1873 = vpop.permute.xlu0 %1872
        %1874 = vrot.lane.b32.xlu0 %v1785, 8
        %v1875 = vpop.permute.xlu0 %1874
        %1876 = vrot.lane.b32.xlu0 %v1786, 8
        %v1877 = vpop.permute.xlu0 %1876
        %1878 = vrot.lane.b32.xlu0 %v1787, 8
        %v1879 = vpop.permute.xlu0 %1878
        %1880 = vrot.lane.b32.xlu0 %v1788, 8
        %v1881 = vpop.permute.xlu0 %1880
        %1882 = vrot.lane.b32.xlu0 %v1789, 8
        %v1883 = vpop.permute.xlu0 %1882
        %1884 = vrot.lane.b32.xlu0 %v1790, 8
        %v1885 = vpop.permute.xlu0 %1884
        %1886 = vrot.lane.b32.xlu0 %v1791, 8
        %v1887 = vpop.permute.xlu0 %1886
        %vm1920 = vcmask 72768
        %1921 = vst.msk [vmem:[#allocation3] sm:$0xff] %vm1920, %v1825
        %1922 = vst.msk [vmem:[#allocation3 + $0x8] sm:$0xff] %vm1920, %v1827
        %1923 = vst.msk [vmem:[#allocation3 + $0x10] sm:$0xff] %vm1920, %v1829
        %1924 = vst.msk [vmem:[#allocation3 + $0x18] sm:$0xff] %vm1920, %v1831
        %1925 = vst.msk [vmem:[#allocation3 + $0x20] sm:$0xff] %vm1920, %v1833
        %1926 = vst.msk [vmem:[#allocation3 + $0x28] sm:$0xff] %vm1920, %v1835
        %1927 = vst.msk [vmem:[#allocation3 + $0x30] sm:$0xff] %vm1920, %v1837
        %1928 = vst.msk [vmem:[#allocation3 + $0x38] sm:$0xff] %vm1920, %v1839
        %1929 = vst.msk [vmem:[#allocation3 + $0x40] sm:$0xff] %vm1920, %v1841
        %1930 = vst.msk [vmem:[#allocation3 + $0x48] sm:$0xff] %vm1920, %v1843
        %1931 = vst.msk [vmem:[#allocation3 + $0x50] sm:$0xff] %vm1920, %v1845
        %1932 = vst.msk [vmem:[#allocation3 + $0x58] sm:$0xff] %vm1920, %v1847
        %1933 = vst.msk [vmem:[#allocation3 + $0x60] sm:$0xff] %vm1920, %v1849
        %1934 = vst.msk [vmem:[#allocation3 + $0x68] sm:$0xff] %vm1920, %v1851
        %1935 = vst.msk [vmem:[#allocation3 + $0x70] sm:$0xff] %vm1920, %v1853
        %1936 = vst.msk [vmem:[#allocation3 + $0x78] sm:$0xff] %vm1920, %v1855
        %1937 = vst.msk [vmem:[#allocation3 + $0x80] sm:$0xff] %vm1920, %v1857
        %1938 = vst.msk [vmem:[#allocation3 + $0x88] sm:$0xff] %vm1920, %v1859
        %1939 = vst.msk [vmem:[#allocation3 + $0x90] sm:$0xff] %vm1920, %v1861
        %1940 = vst.msk [vmem:[#allocation3 + $0x98] sm:$0xff] %vm1920, %v1863
        %1941 = vst.msk [vmem:[#allocation3 + $0xa0] sm:$0xff] %vm1920, %v1865
        %1942 = vst.msk [vmem:[#allocation3 + $0xa8] sm:$0xff] %vm1920, %v1867
        %1943 = vst.msk [vmem:[#allocation3 + $0xb0] sm:$0xff] %vm1920, %v1869
        %1944 = vst.msk [vmem:[#allocation3 + $0xb8] sm:$0xff] %vm1920, %v1871
        %1945 = vst.msk [vmem:[#allocation3 + $0xc0] sm:$0xff] %vm1920, %v1873
        %1946 = vst.msk [vmem:[#allocation3 + $0xc8] sm:$0xff] %vm1920, %v1875
        %1947 = vst.msk [vmem:[#allocation3 + $0xd0] sm:$0xff] %vm1920, %v1877
        %1948 = vst.msk [vmem:[#allocation3 + $0xd8] sm:$0xff] %vm1920, %v1879
        %1949 = vst.msk [vmem:[#allocation3 + $0xe0] sm:$0xff] %vm1920, %v1881
        %1950 = vst.msk [vmem:[#allocation3 + $0xe8] sm:$0xff] %vm1920, %v1883
        %1951 = vst.msk [vmem:[#allocation3 + $0xf0] sm:$0xff] %vm1920, %v1885
        %1952 = vst.msk [vmem:[#allocation3 + $0xf8] sm:$0xff] %vm1920, %v1887
        %v1953 = vld [vmem:[#allocation3] sm:$0xff]
        %v1954 = vld [vmem:[#allocation3 + $0x8] sm:$0xff]
        %v1955 = vld [vmem:[#allocation3 + $0x10] sm:$0xff]
        %v1956 = vld [vmem:[#allocation3 + $0x18] sm:$0xff]
        %v1957 = vld [vmem:[#allocation3 + $0x20] sm:$0xff]
        %v1958 = vld [vmem:[#allocation3 + $0x28] sm:$0xff]
        %v1959 = vld [vmem:[#allocation3 + $0x30] sm:$0xff]
        %v1960 = vld [vmem:[#allocation3 + $0x38] sm:$0xff]
        %v1961 = vld [vmem:[#allocation3 + $0x40] sm:$0xff]
        %v1962 = vld [vmem:[#allocation3 + $0x48] sm:$0xff]
        %v1963 = vld [vmem:[#allocation3 + $0x50] sm:$0xff]
        %v1964 = vld [vmem:[#allocation3 + $0x58] sm:$0xff]
        %v1965 = vld [vmem:[#allocation3 + $0x60] sm:$0xff]
        %v1966 = vld [vmem:[#allocation3 + $0x68] sm:$0xff]
        %v1967 = vld [vmem:[#allocation3 + $0x70] sm:$0xff]
        %v1968 = vld [vmem:[#allocation3 + $0x78] sm:$0xff]
        %v1969 = vld [vmem:[#allocation3 + $0x80] sm:$0xff]
        %v1970 = vld [vmem:[#allocation3 + $0x88] sm:$0xff]
        %v1971 = vld [vmem:[#allocation3 + $0x90] sm:$0xff]
        %v1972 = vld [vmem:[#allocation3 + $0x98] sm:$0xff]
        %v1973 = vld [vmem:[#allocation3 + $0xa0] sm:$0xff]
        %v1974 = vld [vmem:[#allocation3 + $0xa8] sm:$0xff]
        %v1975 = vld [vmem:[#allocation3 + $0xb0] sm:$0xff]
        %v1976 = vld [vmem:[#allocation3 + $0xb8] sm:$0xff]
        %v1977 = vld [vmem:[#allocation3 + $0xc0] sm:$0xff]
        %v1978 = vld [vmem:[#allocation3 + $0xc8] sm:$0xff]
        %v1979 = vld [vmem:[#allocation3 + $0xd0] sm:$0xff]
        %v1980 = vld [vmem:[#allocation3 + $0xd8] sm:$0xff]
        %v1981 = vld [vmem:[#allocation3 + $0xe0] sm:$0xff]
        %v1982 = vld [vmem:[#allocation3 + $0xe8] sm:$0xff]
        %v1983 = vld [vmem:[#allocation3 + $0xf0] sm:$0xff]
        %v1984 = vld [vmem:[#allocation3 + $0xf8] sm:$0xff]
        %v1985 = vld [vmem:[%s1] sm:$0xff]
        %v1986 = vld [vmem:[%s1 + $0x8] sm:$0x1]
        %v1987 = vld [vmem:[%s2] sm:$0x1]
        %v1989 = vlaneseq
        %v1990 = vshrl.u32 %v1989, 7
        %v1991 = vsub.s32 0, %v1990
        %v1992 = vrot.slane %v1987, %v1991
        %vm1994 = vcmask 72704
        %v1996 = vsel %vm1994, %v1953, 0
        %v1999 = vsel %vm1994, %v1954, 0
        %v2002 = vsel %vm1994, %v1955, 0
        %v2005 = vsel %vm1994, %v1956, 0
        %v2008 = vsel %vm1994, %v1957, 0
        %v2011 = vsel %vm1994, %v1958, 0
        %v2014 = vsel %vm1994, %v1959, 0
        %v2017 = vsel %vm1994, %v1960, 0
        %v2020 = vsel %vm1994, %v1961, 0
        %v2023 = vsel %vm1994, %v1962, 0
        %v2026 = vsel %vm1994, %v1963, 0
        %v2029 = vsel %vm1994, %v1964, 0
        %v2032 = vsel %vm1994, %v1965, 0
        %v2035 = vsel %vm1994, %v1966, 0
        %v2038 = vsel %vm1994, %v1967, 0
        %v2041 = vsel %vm1994, %v1968, 0
        %v2044 = vsel %vm1994, %v1969, 0
        %v2047 = vsel %vm1994, %v1970, 0
        %v2050 = vsel %vm1994, %v1971, 0
        %v2053 = vsel %vm1994, %v1972, 0
        %v2056 = vsel %vm1994, %v1973, 0
        %v2059 = vsel %vm1994, %v1974, 0
        %v2062 = vsel %vm1994, %v1975, 0
        %v2065 = vsel %vm1994, %v1976, 0
        %v2068 = vsel %vm1994, %v1977, 0
        %v2071 = vsel %vm1994, %v1978, 0
        %v2074 = vsel %vm1994, %v1979, 0
        %v2077 = vsel %vm1994, %v1980, 0
        %v2080 = vsel %vm1994, %v1981, 0
        %v2083 = vsel %vm1994, %v1982, 0
        %v2086 = vsel %vm1994, %v1983, 0
        %v2089 = vsel %vm1994, %v1984, 0
        %vm2091 = vcmask 1040384
        %v2093 = vsel %vm2091, %v1986, 0
        %2095 = vmatprep.subr.mxu0 0.0
        %2096 = vmatpush1.msra.mxu0 0.0
        %2097 = vmatprep.subr.mxu0 0.0
        %2098 = vmatpush1.msra.mxu0 0.0
        %2099 = vmatprep.subr.mxu0 0.0
        %2100 = vmatpush1.msra.mxu0 0.0
        %2101 = vmatprep.subr.mxu0 0.0
        %2102 = vmatpush1.msra.mxu0 0.0
        %2103 = vmatprep.subr.mxu0 0.0
        %2104 = vmatpush1.msra.mxu0 0.0
        %2105 = vmatprep.subr.mxu0 0.0
        %2106 = vmatpush1.msra.mxu0 0.0
        %2107 = vmatprep.subr.mxu0 0.0
        %2108 = vmatpush1.msra.mxu0 0.0
        %2109 = vmatprep.subr.mxu0 0.0
        %2110 = vmatpush1.msra.mxu0 0.0
        %2111 = vmatprep.subr.mxu0 0.0
        %2112 = vmatpush1.msra.mxu0 0.0
        %2113 = vmatprep.subr.mxu0 0.0
        %2114 = vmatpush1.msra.mxu0 0.0
        %2115 = vmatprep.subr.mxu0 0.0
        %2116 = vmatpush1.msra.mxu0 0.0
        %2117 = vmatprep.subr.mxu0 0.0
        %2118 = vmatpush1.msra.mxu0 0.0
        %2119 = vmatprep.subr.mxu0 0.0
        %2120 = vmatpush1.msra.mxu0 0.0
        %2121 = vmatprep.subr.mxu0 0.0
        %2122 = vmatpush1.msra.mxu0 0.0
        %2123 = vmatprep.subr.mxu0 0.0
        %2124 = vmatpush1.msra.mxu0 %v2093
        %2125 = vmatprep.subr.mxu0 0.0
        %2126 = vmatpush1.msra.mxu0 %v1985
        %2127 = vmatprep.subr.mxu0 0.0
        %2128 = vmatpush2.msra.mxu0 0.0
        %2129 = vmatprep.subr.mxu0 0.0
        %2130 = vmatpush2.msra.mxu0 0.0
        %2131 = vmatprep.subr.mxu0 0.0
        %2132 = vmatpush2.msra.mxu0 0.0
        %2133 = vmatprep.subr.mxu0 0.0
        %2134 = vmatpush2.msra.mxu0 0.0
        %2135 = vmatprep.subr.mxu0 0.0
        %2136 = vmatpush2.msra.mxu0 0.0
        %2137 = vmatprep.subr.mxu0 0.0
        %2138 = vmatpush2.msra.mxu0 0.0
        %2139 = vmatprep.subr.mxu0 0.0
        %2140 = vmatpush2.msra.mxu0 0.0
        %2141 = vmatprep.subr.mxu0 0.0
        %2142 = vmatpush2.msra.mxu0 0.0
        %2143 = vmatprep.subr.mxu0 0.0
        %2144 = vmatpush2.msra.mxu0 0.0
        %2145 = vmatprep.subr.mxu0 0.0
        %2146 = vmatpush2.msra.mxu0 0.0
        %2147 = vmatprep.subr.mxu0 0.0
        %2148 = vmatpush2.msra.mxu0 0.0
        %2149 = vmatprep.subr.mxu0 0.0
        %2150 = vmatpush2.msra.mxu0 0.0
        %2151 = vmatprep.subr.mxu0 0.0
        %2152 = vmatpush2.msra.mxu0 0.0
        %2153 = vmatprep.subr.mxu0 0.0
        %2154 = vmatpush2.msra.mxu0 0.0
        %2155 = vmatprep.subr.mxu0 0.0
        %2156 = vmatpush2.msra.mxu0 0.0
        %2157 = vmatprep.subr.mxu0 0.0
        %2158 = vmatpush2.msra.mxu0 0.0
        %2159 = vmatprep.mubr.f32.mxu0 0.0
        %2160 = vmatmul.mubr.f32.gmra.mxu0 %v1996
        %v2161 = vpop.f32.mrf.mxu0
        %v2162 = vadd.f32 %v1992, %v2161
        %v2163 = vpop.f32.mrf.mxu0
        %2164 = vmatprep.mubr.f32.mxu0 0.0
        %2165 = vmatmul.mubr.f32.gmra.mxu0 %v1999
        %v2166 = vpop.f32.mrf.mxu0
        %v2167 = vadd.f32 %v1992, %v2166
        %v2168 = vpop.f32.mrf.mxu0
        %2169 = vmatprep.mubr.f32.mxu0 0.0
        %2170 = vmatmul.mubr.f32.gmra.mxu0 %v2002
        %v2171 = vpop.f32.mrf.mxu0
        %v2172 = vadd.f32 %v1992, %v2171
        %v2173 = vpop.f32.mrf.mxu0
        %2174 = vmatprep.mubr.f32.mxu0 0.0
        %2175 = vmatmul.mubr.f32.gmra.mxu0 %v2005
        %v2176 = vpop.f32.mrf.mxu0
        %v2177 = vadd.f32 %v1992, %v2176
        %v2178 = vpop.f32.mrf.mxu0
        %2179 = vmatprep.mubr.f32.mxu0 0.0
        %2180 = vmatmul.mubr.f32.gmra.mxu0 %v2008
        %v2181 = vpop.f32.mrf.mxu0
        %v2182 = vadd.f32 %v1992, %v2181
        %v2183 = vpop.f32.mrf.mxu0
        %2184 = vmatprep.mubr.f32.mxu0 0.0
        %2185 = vmatmul.mubr.f32.gmra.mxu0 %v2011
        %v2186 = vpop.f32.mrf.mxu0
        %v2187 = vadd.f32 %v1992, %v2186
        %v2188 = vpop.f32.mrf.mxu0
        %2189 = vmatprep.mubr.f32.mxu0 0.0
        %2190 = vmatmul.mubr.f32.gmra.mxu0 %v2014
        %v2191 = vpop.f32.mrf.mxu0
        %v2192 = vadd.f32 %v1992, %v2191
        %v2193 = vpop.f32.mrf.mxu0
        %2194 = vmatprep.mubr.f32.mxu0 0.0
        %2195 = vmatmul.mubr.f32.gmra.mxu0 %v2017
        %v2196 = vpop.f32.mrf.mxu0
        %v2197 = vadd.f32 %v1992, %v2196
        %v2198 = vpop.f32.mrf.mxu0
        %2199 = vmatprep.mubr.f32.mxu0 0.0
        %2200 = vmatmul.mubr.f32.gmra.mxu0 %v2020
        %v2201 = vpop.f32.mrf.mxu0
        %v2202 = vadd.f32 %v1992, %v2201
        %v2203 = vpop.f32.mrf.mxu0
        %2204 = vmatprep.mubr.f32.mxu0 0.0
        %2205 = vmatmul.mubr.f32.gmra.mxu0 %v2023
        %v2206 = vpop.f32.mrf.mxu0
        %v2207 = vadd.f32 %v1992, %v2206
        %v2208 = vpop.f32.mrf.mxu0
        %2209 = vmatprep.mubr.f32.mxu0 0.0
        %2210 = vmatmul.mubr.f32.gmra.mxu0 %v2026
        %v2211 = vpop.f32.mrf.mxu0
        %v2212 = vadd.f32 %v1992, %v2211
        %v2213 = vpop.f32.mrf.mxu0
        %2214 = vmatprep.mubr.f32.mxu0 0.0
        %2215 = vmatmul.mubr.f32.gmra.mxu0 %v2029
        %v2216 = vpop.f32.mrf.mxu0
        %v2217 = vadd.f32 %v1992, %v2216
        %v2218 = vpop.f32.mrf.mxu0
        %2219 = vmatprep.mubr.f32.mxu0 0.0
        %2220 = vmatmul.mubr.f32.gmra.mxu0 %v2032
        %v2221 = vpop.f32.mrf.mxu0
        %v2222 = vadd.f32 %v1992, %v2221
        %v2223 = vpop.f32.mrf.mxu0
        %2224 = vmatprep.mubr.f32.mxu0 0.0
        %2225 = vmatmul.mubr.f32.gmra.mxu0 %v2035
        %v2226 = vpop.f32.mrf.mxu0
        %v2227 = vadd.f32 %v1992, %v2226
        %v2228 = vpop.f32.mrf.mxu0
        %2229 = vmatprep.mubr.f32.mxu0 0.0
        %2230 = vmatmul.mubr.f32.gmra.mxu0 %v2038
        %v2231 = vpop.f32.mrf.mxu0
        %v2232 = vadd.f32 %v1992, %v2231
        %v2233 = vpop.f32.mrf.mxu0
        %2234 = vmatprep.mubr.f32.mxu0 0.0
        %2235 = vmatmul.mubr.f32.gmra.mxu0 %v2041
        %v2236 = vpop.f32.mrf.mxu0
        %v2237 = vadd.f32 %v1992, %v2236
        %v2238 = vpop.f32.mrf.mxu0
        %2239 = vmatprep.mubr.f32.mxu0 0.0
        %2240 = vmatmul.mubr.f32.gmra.mxu0 %v2044
        %v2241 = vpop.f32.mrf.mxu0
        %v2242 = vadd.f32 %v1992, %v2241
        %v2243 = vpop.f32.mrf.mxu0
        %2244 = vmatprep.mubr.f32.mxu0 0.0
        %2245 = vmatmul.mubr.f32.gmra.mxu0 %v2047
        %v2246 = vpop.f32.mrf.mxu0
        %v2247 = vadd.f32 %v1992, %v2246
        %v2248 = vpop.f32.mrf.mxu0
        %2249 = vmatprep.mubr.f32.mxu0 0.0
        %2250 = vmatmul.mubr.f32.gmra.mxu0 %v2050
        %v2251 = vpop.f32.mrf.mxu0
        %v2252 = vadd.f32 %v1992, %v2251
        %v2253 = vpop.f32.mrf.mxu0
        %2254 = vmatprep.mubr.f32.mxu0 0.0
        %2255 = vmatmul.mubr.f32.gmra.mxu0 %v2053
        %v2256 = vpop.f32.mrf.mxu0
        %v2257 = vadd.f32 %v1992, %v2256
        %v2258 = vpop.f32.mrf.mxu0
        %2259 = vmatprep.mubr.f32.mxu0 0.0
        %2260 = vmatmul.mubr.f32.gmra.mxu0 %v2056
        %v2261 = vpop.f32.mrf.mxu0
        %v2262 = vadd.f32 %v1992, %v2261
        %v2263 = vpop.f32.mrf.mxu0
        %2264 = vmatprep.mubr.f32.mxu0 0.0
        %2265 = vmatmul.mubr.f32.gmra.mxu0 %v2059
        %v2266 = vpop.f32.mrf.mxu0
        %v2267 = vadd.f32 %v1992, %v2266
        %v2268 = vpop.f32.mrf.mxu0
        %2269 = vmatprep.mubr.f32.mxu0 0.0
        %2270 = vmatmul.mubr.f32.gmra.mxu0 %v2062
        %v2271 = vpop.f32.mrf.mxu0
        %v2272 = vadd.f32 %v1992, %v2271
        %v2273 = vpop.f32.mrf.mxu0
        %2274 = vmatprep.mubr.f32.mxu0 0.0
        %2275 = vmatmul.mubr.f32.gmra.mxu0 %v2065
        %v2276 = vpop.f32.mrf.mxu0
        %v2277 = vadd.f32 %v1992, %v2276
        %v2278 = vpop.f32.mrf.mxu0
        %2279 = vmatprep.mubr.f32.mxu0 0.0
        %2280 = vmatmul.mubr.f32.gmra.mxu0 %v2068
        %v2281 = vpop.f32.mrf.mxu0
        %v2282 = vadd.f32 %v1992, %v2281
        %v2283 = vpop.f32.mrf.mxu0
        %2284 = vmatprep.mubr.f32.mxu0 0.0
        %2285 = vmatmul.mubr.f32.gmra.mxu0 %v2071
        %v2286 = vpop.f32.mrf.mxu0
        %v2287 = vadd.f32 %v1992, %v2286
        %v2288 = vpop.f32.mrf.mxu0
        %2289 = vmatprep.mubr.f32.mxu0 0.0
        %2290 = vmatmul.mubr.f32.gmra.mxu0 %v2074
        %v2291 = vpop.f32.mrf.mxu0
        %v2292 = vadd.f32 %v1992, %v2291
        %v2293 = vpop.f32.mrf.mxu0
        %2294 = vmatprep.mubr.f32.mxu0 0.0
        %2295 = vmatmul.mubr.f32.gmra.mxu0 %v2077
        %v2296 = vpop.f32.mrf.mxu0
        %v2297 = vadd.f32 %v1992, %v2296
        %v2298 = vpop.f32.mrf.mxu0
        %2299 = vmatprep.mubr.f32.mxu0 0.0
        %2300 = vmatmul.mubr.f32.gmra.mxu0 %v2080
        %v2301 = vpop.f32.mrf.mxu0
        %v2302 = vadd.f32 %v1992, %v2301
        %v2303 = vpop.f32.mrf.mxu0
        %2304 = vmatprep.mubr.f32.mxu0 0.0
        %2305 = vmatmul.mubr.f32.gmra.mxu0 %v2083
        %v2306 = vpop.f32.mrf.mxu0
        %v2307 = vadd.f32 %v1992, %v2306
        %v2308 = vpop.f32.mrf.mxu0
        %2309 = vmatprep.mubr.f32.mxu0 0.0
        %2310 = vmatmul.mubr.f32.gmra.mxu0 %v2086
        %v2311 = vpop.f32.mrf.mxu0
        %v2312 = vadd.f32 %v1992, %v2311
        %v2313 = vpop.f32.mrf.mxu0
        %2314 = vmatprep.mubr.f32.mxu0 0.0
        %2315 = vmatmul.mubr.f32.gmra.mxu0 %v2089
        %v2316 = vpop.f32.mrf.mxu0
        %v2317 = vadd.f32 %v1992, %v2316
        %v2318 = vpop.f32.mrf.mxu0
        %2319 = vdwg.mxu0
        %v2320 = vmax.f32 %v2162, 0.0
        %v2321 = vmax.f32 %v2167, 0.0
        %v2322 = vmax.f32 %v2172, 0.0
        %v2323 = vmax.f32 %v2177, 0.0
        %v2324 = vmax.f32 %v2182, 0.0
        %v2325 = vmax.f32 %v2187, 0.0
        %v2326 = vmax.f32 %v2192, 0.0
        %v2327 = vmax.f32 %v2197, 0.0
        %v2328 = vmax.f32 %v2202, 0.0
        %v2329 = vmax.f32 %v2207, 0.0
        %v2330 = vmax.f32 %v2212, 0.0
        %v2331 = vmax.f32 %v2217, 0.0
        %v2332 = vmax.f32 %v2222, 0.0
        %v2333 = vmax.f32 %v2227, 0.0
        %v2334 = vmax.f32 %v2232, 0.0
        %v2335 = vmax.f32 %v2237, 0.0
        %v2336 = vmax.f32 %v2242, 0.0
        %v2337 = vmax.f32 %v2247, 0.0
        %v2338 = vmax.f32 %v2252, 0.0
        %v2339 = vmax.f32 %v2257, 0.0
        %v2340 = vmax.f32 %v2262, 0.0
        %v2341 = vmax.f32 %v2267, 0.0
        %v2342 = vmax.f32 %v2272, 0.0
        %v2343 = vmax.f32 %v2277, 0.0
        %v2344 = vmax.f32 %v2282, 0.0
        %v2345 = vmax.f32 %v2287, 0.0
        %v2346 = vmax.f32 %v2292, 0.0
        %v2347 = vmax.f32 %v2297, 0.0
        %v2348 = vmax.f32 %v2302, 0.0
        %v2349 = vmax.f32 %v2307, 0.0
        %v2350 = vmax.f32 %v2312, 0.0
        %v2351 = vmax.f32 %v2317, 0.0
        %vm2352 = vcmask 130048
        %v2353 = vsel %vm2352, %v2320, -inf
        %v2354 = vsel %vm2352, %v2322, -inf
        %v2355 = vmax.f32 %v2353, %v2354
        %v2356 = vsel %vm2352, %v2321, -inf
        %v2357 = vsel %vm2352, %v2323, -inf
        %v2358 = vmax.f32 %v2356, %v2357
        %v2359 = vsel %vm2352, %v2324, -inf
        %v2360 = vsel %vm2352, %v2326, -inf
        %v2361 = vmax.f32 %v2359, %v2360
        %v2362 = vsel %vm2352, %v2325, -inf
        %v2363 = vsel %vm2352, %v2327, -inf
        %v2364 = vmax.f32 %v2362, %v2363
        %v2365 = vsel %vm2352, %v2328, -inf
        %v2366 = vsel %vm2352, %v2330, -inf
        %v2367 = vmax.f32 %v2365, %v2366
        %v2368 = vsel %vm2352, %v2329, -inf
        %v2369 = vsel %vm2352, %v2331, -inf
        %v2370 = vmax.f32 %v2368, %v2369
        %v2371 = vsel %vm2352, %v2332, -inf
        %v2372 = vsel %vm2352, %v2334, -inf
        %v2373 = vmax.f32 %v2371, %v2372
        %v2374 = vsel %vm2352, %v2333, -inf
        %v2375 = vsel %vm2352, %v2335, -inf
        %v2376 = vmax.f32 %v2374, %v2375
        %v2377 = vsel %vm2352, %v2336, -inf
        %v2378 = vsel %vm2352, %v2338, -inf
        %v2379 = vmax.f32 %v2377, %v2378
        %v2380 = vsel %vm2352, %v2337, -inf
        %v2381 = vsel %vm2352, %v2339, -inf
        %v2382 = vmax.f32 %v2380, %v2381
        %v2383 = vsel %vm2352, %v2340, -inf
        %v2384 = vsel %vm2352, %v2342, -inf
        %v2385 = vmax.f32 %v2383, %v2384
        %v2386 = vsel %vm2352, %v2341, -inf
        %v2387 = vsel %vm2352, %v2343, -inf
        %v2388 = vmax.f32 %v2386, %v2387
        %v2389 = vsel %vm2352, %v2344, -inf
        %v2390 = vsel %vm2352, %v2346, -inf
        %v2391 = vmax.f32 %v2389, %v2390
        %v2392 = vsel %vm2352, %v2345, -inf
        %v2393 = vsel %vm2352, %v2347, -inf
        %v2394 = vmax.f32 %v2392, %v2393
        %v2395 = vsel %vm2352, %v2348, -inf
        %v2396 = vsel %vm2352, %v2350, -inf
        %v2397 = vmax.f32 %v2395, %v2396
        %v2398 = vsel %vm2352, %v2349, -inf
        %v2399 = vsel %vm2352, %v2351, -inf
        %v2400 = vmax.f32 %v2398, %v2399
        %v2417 = vcombine.high %v2355, %v2355
        %v2419 = vunpack.c.l.s4 1983009808
        %v2420 = vunpack.c.0.s8 %v2419
        %v2421 = vlaneseq
        %v2422 = vshrl.u32 %v2421, 7
        %v2423 = vsub.s32 %v2420, %v2422
        %v2424 = vrot.slane %v2355, %v2423
        %v2426 = vunpack.c.l.s4 1983009808
        %v2427 = vunpack.c.0.s8 %v2426
        %v2428 = vlaneseq
        %v2429 = vshrl.u32 %v2428, 7
        %v2430 = vsub.s32 %v2427, %v2429
        %v2431 = vrot.slane %v2417, %v2430
        %v2432 = vcombine.high %v2424, %v2424
        %v2433 = vcombine.high %v2431, %v2431
        %v2434 = vcombine.high %v2358, %v2358
        %v2436 = vunpack.c.l.s4 1983009808
        %v2437 = vunpack.c.0.s8 %v2436
        %v2438 = vlaneseq
        %v2439 = vshrl.u32 %v2438, 7
        %v2440 = vsub.s32 %v2437, %v2439
        %v2441 = vrot.slane %v2358, %v2440
        %v2443 = vunpack.c.l.s4 1983009808
        %v2444 = vunpack.c.0.s8 %v2443
        %v2445 = vlaneseq
        %v2446 = vshrl.u32 %v2445, 7
        %v2447 = vsub.s32 %v2444, %v2446
        %v2448 = vrot.slane %v2434, %v2447
        %v2449 = vcombine.high %v2441, %v2441
        %v2450 = vcombine.high %v2448, %v2448
        %v2451 = vcombine.high %v2361, %v2361
        %v2453 = vunpack.c.l.s4 1983009808
        %v2454 = vunpack.c.0.s8 %v2453
        %v2455 = vlaneseq
        %v2456 = vshrl.u32 %v2455, 7
        %v2457 = vsub.s32 %v2454, %v2456
        %v2458 = vrot.slane %v2361, %v2457
        %v2460 = vunpack.c.l.s4 1983009808
        %v2461 = vunpack.c.0.s8 %v2460
        %v2462 = vlaneseq
        %v2463 = vshrl.u32 %v2462, 7
        %v2464 = vsub.s32 %v2461, %v2463
        %v2465 = vrot.slane %v2451, %v2464
        %v2466 = vcombine.high %v2458, %v2458
        %v2467 = vcombine.high %v2465, %v2465
        %v2468 = vcombine.high %v2364, %v2364
        %v2470 = vunpack.c.l.s4 1983009808
        %v2471 = vunpack.c.0.s8 %v2470
        %v2472 = vlaneseq
        %v2473 = vshrl.u32 %v2472, 7
        %v2474 = vsub.s32 %v2471, %v2473
        %v2475 = vrot.slane %v2364, %v2474
        %v2477 = vunpack.c.l.s4 1983009808
        %v2478 = vunpack.c.0.s8 %v2477
        %v2479 = vlaneseq
        %v2480 = vshrl.u32 %v2479, 7
        %v2481 = vsub.s32 %v2478, %v2480
        %v2482 = vrot.slane %v2468, %v2481
        %v2483 = vcombine.high %v2475, %v2475
        %v2484 = vcombine.high %v2482, %v2482
        %v2485 = vcombine.high %v2367, %v2367
        %v2487 = vunpack.c.l.s4 1983009808
        %v2488 = vunpack.c.0.s8 %v2487
        %v2489 = vlaneseq
        %v2490 = vshrl.u32 %v2489, 7
        %v2491 = vsub.s32 %v2488, %v2490
        %v2492 = vrot.slane %v2367, %v2491
        %v2494 = vunpack.c.l.s4 1983009808
        %v2495 = vunpack.c.0.s8 %v2494
        %v2496 = vlaneseq
        %v2497 = vshrl.u32 %v2496, 7
        %v2498 = vsub.s32 %v2495, %v2497
        %v2499 = vrot.slane %v2485, %v2498
        %v2500 = vcombine.high %v2492, %v2492
        %v2501 = vcombine.high %v2499, %v2499
        %v2502 = vcombine.high %v2370, %v2370
        %v2504 = vunpack.c.l.s4 1983009808
        %v2505 = vunpack.c.0.s8 %v2504
        %v2506 = vlaneseq
        %v2507 = vshrl.u32 %v2506, 7
        %v2508 = vsub.s32 %v2505, %v2507
        %v2509 = vrot.slane %v2370, %v2508
        %v2511 = vunpack.c.l.s4 1983009808
        %v2512 = vunpack.c.0.s8 %v2511
        %v2513 = vlaneseq
        %v2514 = vshrl.u32 %v2513, 7
        %v2515 = vsub.s32 %v2512, %v2514
        %v2516 = vrot.slane %v2502, %v2515
        %v2517 = vcombine.high %v2509, %v2509
        %v2518 = vcombine.high %v2516, %v2516
        %v2519 = vcombine.high %v2373, %v2373
        %v2521 = vunpack.c.l.s4 1983009808
        %v2522 = vunpack.c.0.s8 %v2521
        %v2523 = vlaneseq
        %v2524 = vshrl.u32 %v2523, 7
        %v2525 = vsub.s32 %v2522, %v2524
        %v2526 = vrot.slane %v2373, %v2525
        %v2528 = vunpack.c.l.s4 1983009808
        %v2529 = vunpack.c.0.s8 %v2528
        %v2530 = vlaneseq
        %v2531 = vshrl.u32 %v2530, 7
        %v2532 = vsub.s32 %v2529, %v2531
        %v2533 = vrot.slane %v2519, %v2532
        %v2534 = vcombine.high %v2526, %v2526
        %v2535 = vcombine.high %v2533, %v2533
        %v2536 = vcombine.high %v2376, %v2376
        %v2538 = vunpack.c.l.s4 1983009808
        %v2539 = vunpack.c.0.s8 %v2538
        %v2540 = vlaneseq
        %v2541 = vshrl.u32 %v2540, 7
        %v2542 = vsub.s32 %v2539, %v2541
        %v2543 = vrot.slane %v2376, %v2542
        %v2545 = vunpack.c.l.s4 1983009808
        %v2546 = vunpack.c.0.s8 %v2545
        %v2547 = vlaneseq
        %v2548 = vshrl.u32 %v2547, 7
        %v2549 = vsub.s32 %v2546, %v2548
        %v2550 = vrot.slane %v2536, %v2549
        %v2551 = vcombine.high %v2543, %v2543
        %v2552 = vcombine.high %v2550, %v2550
        %v2553 = vcombine.high %v2379, %v2379
        %v2555 = vunpack.c.l.s4 1983009808
        %v2556 = vunpack.c.0.s8 %v2555
        %v2557 = vlaneseq
        %v2558 = vshrl.u32 %v2557, 7
        %v2559 = vsub.s32 %v2556, %v2558
        %v2560 = vrot.slane %v2379, %v2559
        %v2562 = vunpack.c.l.s4 1983009808
        %v2563 = vunpack.c.0.s8 %v2562
        %v2564 = vlaneseq
        %v2565 = vshrl.u32 %v2564, 7
        %v2566 = vsub.s32 %v2563, %v2565
        %v2567 = vrot.slane %v2553, %v2566
        %v2568 = vcombine.high %v2560, %v2560
        %v2569 = vcombine.high %v2567, %v2567
        %v2570 = vcombine.high %v2382, %v2382
        %v2572 = vunpack.c.l.s4 1983009808
        %v2573 = vunpack.c.0.s8 %v2572
        %v2574 = vlaneseq
        %v2575 = vshrl.u32 %v2574, 7
        %v2576 = vsub.s32 %v2573, %v2575
        %v2577 = vrot.slane %v2382, %v2576
        %v2579 = vunpack.c.l.s4 1983009808
        %v2580 = vunpack.c.0.s8 %v2579
        %v2581 = vlaneseq
        %v2582 = vshrl.u32 %v2581, 7
        %v2583 = vsub.s32 %v2580, %v2582
        %v2584 = vrot.slane %v2570, %v2583
        %v2585 = vcombine.high %v2577, %v2577
        %v2586 = vcombine.high %v2584, %v2584
        %v2587 = vcombine.high %v2385, %v2385
        %v2589 = vunpack.c.l.s4 1983009808
        %v2590 = vunpack.c.0.s8 %v2589
        %v2591 = vlaneseq
        %v2592 = vshrl.u32 %v2591, 7
        %v2593 = vsub.s32 %v2590, %v2592
        %v2594 = vrot.slane %v2385, %v2593
        %v2596 = vunpack.c.l.s4 1983009808
        %v2597 = vunpack.c.0.s8 %v2596
        %v2598 = vlaneseq
        %v2599 = vshrl.u32 %v2598, 7
        %v2600 = vsub.s32 %v2597, %v2599
        %v2601 = vrot.slane %v2587, %v2600
        %v2602 = vcombine.high %v2594, %v2594
        %v2603 = vcombine.high %v2601, %v2601
        %v2604 = vcombine.high %v2388, %v2388
        %v2606 = vunpack.c.l.s4 1983009808
        %v2607 = vunpack.c.0.s8 %v2606
        %v2608 = vlaneseq
        %v2609 = vshrl.u32 %v2608, 7
        %v2610 = vsub.s32 %v2607, %v2609
        %v2611 = vrot.slane %v2388, %v2610
        %v2613 = vunpack.c.l.s4 1983009808
        %v2614 = vunpack.c.0.s8 %v2613
        %v2615 = vlaneseq
        %v2616 = vshrl.u32 %v2615, 7
        %v2617 = vsub.s32 %v2614, %v2616
        %v2618 = vrot.slane %v2604, %v2617
        %v2619 = vcombine.high %v2611, %v2611
        %v2620 = vcombine.high %v2618, %v2618
        %v2621 = vcombine.high %v2391, %v2391
        %v2623 = vunpack.c.l.s4 1983009808
        %v2624 = vunpack.c.0.s8 %v2623
        %v2625 = vlaneseq
        %v2626 = vshrl.u32 %v2625, 7
        %v2627 = vsub.s32 %v2624, %v2626
        %v2628 = vrot.slane %v2391, %v2627
        %v2630 = vunpack.c.l.s4 1983009808
        %v2631 = vunpack.c.0.s8 %v2630
        %v2632 = vlaneseq
        %v2633 = vshrl.u32 %v2632, 7
        %v2634 = vsub.s32 %v2631, %v2633
        %v2635 = vrot.slane %v2621, %v2634
        %v2636 = vcombine.high %v2628, %v2628
        %v2637 = vcombine.high %v2635, %v2635
        %v2638 = vcombine.high %v2394, %v2394
        %v2640 = vunpack.c.l.s4 1983009808
        %v2641 = vunpack.c.0.s8 %v2640
        %v2642 = vlaneseq
        %v2643 = vshrl.u32 %v2642, 7
        %v2644 = vsub.s32 %v2641, %v2643
        %v2645 = vrot.slane %v2394, %v2644
        %v2647 = vunpack.c.l.s4 1983009808
        %v2648 = vunpack.c.0.s8 %v2647
        %v2649 = vlaneseq
        %v2650 = vshrl.u32 %v2649, 7
        %v2651 = vsub.s32 %v2648, %v2650
        %v2652 = vrot.slane %v2638, %v2651
        %v2653 = vcombine.high %v2645, %v2645
        %v2654 = vcombine.high %v2652, %v2652
        %v2655 = vcombine.high %v2397, %v2397
        %v2657 = vunpack.c.l.s4 1983009808
        %v2658 = vunpack.c.0.s8 %v2657
        %v2659 = vlaneseq
        %v2660 = vshrl.u32 %v2659, 7
        %v2661 = vsub.s32 %v2658, %v2660
        %v2662 = vrot.slane %v2397, %v2661
        %v2664 = vunpack.c.l.s4 1983009808
        %v2665 = vunpack.c.0.s8 %v2664
        %v2666 = vlaneseq
        %v2667 = vshrl.u32 %v2666, 7
        %v2668 = vsub.s32 %v2665, %v2667
        %v2669 = vrot.slane %v2655, %v2668
        %v2670 = vcombine.high %v2662, %v2662
        %v2671 = vcombine.high %v2669, %v2669
        %v2672 = vcombine.high %v2400, %v2400
        %v2674 = vunpack.c.l.s4 1983009808
        %v2675 = vunpack.c.0.s8 %v2674
        %v2676 = vlaneseq
        %v2677 = vshrl.u32 %v2676, 7
        %v2678 = vsub.s32 %v2675, %v2677
        %v2679 = vrot.slane %v2400, %v2678
        %v2681 = vunpack.c.l.s4 1983009808
        %v2682 = vunpack.c.0.s8 %v2681
        %v2683 = vlaneseq
        %v2684 = vshrl.u32 %v2683, 7
        %v2685 = vsub.s32 %v2682, %v2684
        %v2686 = vrot.slane %v2672, %v2685
        %v2687 = vcombine.high %v2679, %v2679
        %v2688 = vcombine.high %v2686, %v2686
        %vm2753 = vcmask 123904
        %v2754 = vsel %vm2753, %v2424, -inf
        %v2755 = vrot.slane %v2754, 4
        %v2756 = vmax.f32 %v2754, %v2755
        %v2757 = vrot.slane %v2756, 2
        %v2758 = vmax.f32 %v2756, %v2757
        %v2759 = vrot.slane %v2758, 1
        %v2760 = vmax.f32 %v2758, %v2759
        %v2761 = vsel %vm2753, %v2432, -inf
        %v2762 = vrot.slane %v2761, 4
        %v2763 = vmax.f32 %v2761, %v2762
        %v2764 = vrot.slane %v2763, 2
        %v2765 = vmax.f32 %v2763, %v2764
        %v2766 = vrot.slane %v2765, 1
        %v2767 = vmax.f32 %v2765, %v2766
        %v2768 = vsel %vm2753, %v2431, -inf
        %v2769 = vrot.slane %v2768, 4
        %v2770 = vmax.f32 %v2768, %v2769
        %v2771 = vrot.slane %v2770, 2
        %v2772 = vmax.f32 %v2770, %v2771
        %v2773 = vrot.slane %v2772, 1
        %v2774 = vmax.f32 %v2772, %v2773
        %v2775 = vsel %vm2753, %v2433, -inf
        %v2776 = vrot.slane %v2775, 4
        %v2777 = vmax.f32 %v2775, %v2776
        %v2778 = vrot.slane %v2777, 2
        %v2779 = vmax.f32 %v2777, %v2778
        %v2780 = vrot.slane %v2779, 1
        %v2781 = vmax.f32 %v2779, %v2780
        %v2782 = vsel %vm2753, %v2441, -inf
        %v2783 = vrot.slane %v2782, 4
        %v2784 = vmax.f32 %v2782, %v2783
        %v2785 = vrot.slane %v2784, 2
        %v2786 = vmax.f32 %v2784, %v2785
        %v2787 = vrot.slane %v2786, 1
        %v2788 = vmax.f32 %v2786, %v2787
        %v2789 = vsel %vm2753, %v2449, -inf
        %v2790 = vrot.slane %v2789, 4
        %v2791 = vmax.f32 %v2789, %v2790
        %v2792 = vrot.slane %v2791, 2
        %v2793 = vmax.f32 %v2791, %v2792
        %v2794 = vrot.slane %v2793, 1
        %v2795 = vmax.f32 %v2793, %v2794
        %v2796 = vsel %vm2753, %v2448, -inf
        %v2797 = vrot.slane %v2796, 4
        %v2798 = vmax.f32 %v2796, %v2797
        %v2799 = vrot.slane %v2798, 2
        %v2800 = vmax.f32 %v2798, %v2799
        %v2801 = vrot.slane %v2800, 1
        %v2802 = vmax.f32 %v2800, %v2801
        %v2803 = vsel %vm2753, %v2450, -inf
        %v2804 = vrot.slane %v2803, 4
        %v2805 = vmax.f32 %v2803, %v2804
        %v2806 = vrot.slane %v2805, 2
        %v2807 = vmax.f32 %v2805, %v2806
        %v2808 = vrot.slane %v2807, 1
        %v2809 = vmax.f32 %v2807, %v2808
        %v2810 = vsel %vm2753, %v2458, -inf
        %v2811 = vrot.slane %v2810, 4
        %v2812 = vmax.f32 %v2810, %v2811
        %v2813 = vrot.slane %v2812, 2
        %v2814 = vmax.f32 %v2812, %v2813
        %v2815 = vrot.slane %v2814, 1
        %v2816 = vmax.f32 %v2814, %v2815
        %v2817 = vsel %vm2753, %v2466, -inf
        %v2818 = vrot.slane %v2817, 4
        %v2819 = vmax.f32 %v2817, %v2818
        %v2820 = vrot.slane %v2819, 2
        %v2821 = vmax.f32 %v2819, %v2820
        %v2822 = vrot.slane %v2821, 1
        %v2823 = vmax.f32 %v2821, %v2822
        %v2824 = vsel %vm2753, %v2465, -inf
        %v2825 = vrot.slane %v2824, 4
        %v2826 = vmax.f32 %v2824, %v2825
        %v2827 = vrot.slane %v2826, 2
        %v2828 = vmax.f32 %v2826, %v2827
        %v2829 = vrot.slane %v2828, 1
        %v2830 = vmax.f32 %v2828, %v2829
        %v2831 = vsel %vm2753, %v2467, -inf
        %v2832 = vrot.slane %v2831, 4
        %v2833 = vmax.f32 %v2831, %v2832
        %v2834 = vrot.slane %v2833, 2
        %v2835 = vmax.f32 %v2833, %v2834
        %v2836 = vrot.slane %v2835, 1
        %v2837 = vmax.f32 %v2835, %v2836
        %v2838 = vsel %vm2753, %v2475, -inf
        %v2839 = vrot.slane %v2838, 4
        %v2840 = vmax.f32 %v2838, %v2839
        %v2841 = vrot.slane %v2840, 2
        %v2842 = vmax.f32 %v2840, %v2841
        %v2843 = vrot.slane %v2842, 1
        %v2844 = vmax.f32 %v2842, %v2843
        %v2845 = vsel %vm2753, %v2483, -inf
        %v2846 = vrot.slane %v2845, 4
        %v2847 = vmax.f32 %v2845, %v2846
        %v2848 = vrot.slane %v2847, 2
        %v2849 = vmax.f32 %v2847, %v2848
        %v2850 = vrot.slane %v2849, 1
        %v2851 = vmax.f32 %v2849, %v2850
        %v2852 = vsel %vm2753, %v2482, -inf
        %v2853 = vrot.slane %v2852, 4
        %v2854 = vmax.f32 %v2852, %v2853
        %v2855 = vrot.slane %v2854, 2
        %v2856 = vmax.f32 %v2854, %v2855
        %v2857 = vrot.slane %v2856, 1
        %v2858 = vmax.f32 %v2856, %v2857
        %v2859 = vsel %vm2753, %v2484, -inf
        %v2860 = vrot.slane %v2859, 4
        %v2861 = vmax.f32 %v2859, %v2860
        %v2862 = vrot.slane %v2861, 2
        %v2863 = vmax.f32 %v2861, %v2862
        %v2864 = vrot.slane %v2863, 1
        %v2865 = vmax.f32 %v2863, %v2864
        %v2866 = vsel %vm2753, %v2492, -inf
        %v2867 = vrot.slane %v2866, 4
        %v2868 = vmax.f32 %v2866, %v2867
        %v2869 = vrot.slane %v2868, 2
        %v2870 = vmax.f32 %v2868, %v2869
        %v2871 = vrot.slane %v2870, 1
        %v2872 = vmax.f32 %v2870, %v2871
        %v2873 = vsel %vm2753, %v2500, -inf
        %v2874 = vrot.slane %v2873, 4
        %v2875 = vmax.f32 %v2873, %v2874
        %v2876 = vrot.slane %v2875, 2
        %v2877 = vmax.f32 %v2875, %v2876
        %v2878 = vrot.slane %v2877, 1
        %v2879 = vmax.f32 %v2877, %v2878
        %v2880 = vsel %vm2753, %v2499, -inf
        %v2881 = vrot.slane %v2880, 4
        %v2882 = vmax.f32 %v2880, %v2881
        %v2883 = vrot.slane %v2882, 2
        %v2884 = vmax.f32 %v2882, %v2883
        %v2885 = vrot.slane %v2884, 1
        %v2886 = vmax.f32 %v2884, %v2885
        %v2887 = vsel %vm2753, %v2501, -inf
        %v2888 = vrot.slane %v2887, 4
        %v2889 = vmax.f32 %v2887, %v2888
        %v2890 = vrot.slane %v2889, 2
        %v2891 = vmax.f32 %v2889, %v2890
        %v2892 = vrot.slane %v2891, 1
        %v2893 = vmax.f32 %v2891, %v2892
        %v2894 = vsel %vm2753, %v2509, -inf
        %v2895 = vrot.slane %v2894, 4
        %v2896 = vmax.f32 %v2894, %v2895
        %v2897 = vrot.slane %v2896, 2
        %v2898 = vmax.f32 %v2896, %v2897
        %v2899 = vrot.slane %v2898, 1
        %v2900 = vmax.f32 %v2898, %v2899
        %v2901 = vsel %vm2753, %v2517, -inf
        %v2902 = vrot.slane %v2901, 4
        %v2903 = vmax.f32 %v2901, %v2902
        %v2904 = vrot.slane %v2903, 2
        %v2905 = vmax.f32 %v2903, %v2904
        %v2906 = vrot.slane %v2905, 1
        %v2907 = vmax.f32 %v2905, %v2906
        %v2908 = vsel %vm2753, %v2516, -inf
        %v2909 = vrot.slane %v2908, 4
        %v2910 = vmax.f32 %v2908, %v2909
        %v2911 = vrot.slane %v2910, 2
        %v2912 = vmax.f32 %v2910, %v2911
        %v2913 = vrot.slane %v2912, 1
        %v2914 = vmax.f32 %v2912, %v2913
        %v2915 = vsel %vm2753, %v2518, -inf
        %v2916 = vrot.slane %v2915, 4
        %v2917 = vmax.f32 %v2915, %v2916
        %v2918 = vrot.slane %v2917, 2
        %v2919 = vmax.f32 %v2917, %v2918
        %v2920 = vrot.slane %v2919, 1
        %v2921 = vmax.f32 %v2919, %v2920
        %v2922 = vsel %vm2753, %v2526, -inf
        %v2923 = vrot.slane %v2922, 4
        %v2924 = vmax.f32 %v2922, %v2923
        %v2925 = vrot.slane %v2924, 2
        %v2926 = vmax.f32 %v2924, %v2925
        %v2927 = vrot.slane %v2926, 1
        %v2928 = vmax.f32 %v2926, %v2927
        %v2929 = vsel %vm2753, %v2534, -inf
        %v2930 = vrot.slane %v2929, 4
        %v2931 = vmax.f32 %v2929, %v2930
        %v2932 = vrot.slane %v2931, 2
        %v2933 = vmax.f32 %v2931, %v2932
        %v2934 = vrot.slane %v2933, 1
        %v2935 = vmax.f32 %v2933, %v2934
        %v2936 = vsel %vm2753, %v2533, -inf
        %v2937 = vrot.slane %v2936, 4
        %v2938 = vmax.f32 %v2936, %v2937
        %v2939 = vrot.slane %v2938, 2
        %v2940 = vmax.f32 %v2938, %v2939
        %v2941 = vrot.slane %v2940, 1
        %v2942 = vmax.f32 %v2940, %v2941
        %v2943 = vsel %vm2753, %v2535, -inf
        %v2944 = vrot.slane %v2943, 4
        %v2945 = vmax.f32 %v2943, %v2944
        %v2946 = vrot.slane %v2945, 2
        %v2947 = vmax.f32 %v2945, %v2946
        %v2948 = vrot.slane %v2947, 1
        %v2949 = vmax.f32 %v2947, %v2948
        %v2950 = vsel %vm2753, %v2543, -inf
        %v2951 = vrot.slane %v2950, 4
        %v2952 = vmax.f32 %v2950, %v2951
        %v2953 = vrot.slane %v2952, 2
        %v2954 = vmax.f32 %v2952, %v2953
        %v2955 = vrot.slane %v2954, 1
        %v2956 = vmax.f32 %v2954, %v2955
        %v2957 = vsel %vm2753, %v2551, -inf
        %v2958 = vrot.slane %v2957, 4
        %v2959 = vmax.f32 %v2957, %v2958
        %v2960 = vrot.slane %v2959, 2
        %v2961 = vmax.f32 %v2959, %v2960
        %v2962 = vrot.slane %v2961, 1
        %v2963 = vmax.f32 %v2961, %v2962
        %v2964 = vsel %vm2753, %v2550, -inf
        %v2965 = vrot.slane %v2964, 4
        %v2966 = vmax.f32 %v2964, %v2965
        %v2967 = vrot.slane %v2966, 2
        %v2968 = vmax.f32 %v2966, %v2967
        %v2969 = vrot.slane %v2968, 1
        %v2970 = vmax.f32 %v2968, %v2969
        %v2971 = vsel %vm2753, %v2552, -inf
        %v2972 = vrot.slane %v2971, 4
        %v2973 = vmax.f32 %v2971, %v2972
        %v2974 = vrot.slane %v2973, 2
        %v2975 = vmax.f32 %v2973, %v2974
        %v2976 = vrot.slane %v2975, 1
        %v2977 = vmax.f32 %v2975, %v2976
        %v2978 = vsel %vm2753, %v2560, -inf
        %v2979 = vrot.slane %v2978, 4
        %v2980 = vmax.f32 %v2978, %v2979
        %v2981 = vrot.slane %v2980, 2
        %v2982 = vmax.f32 %v2980, %v2981
        %v2983 = vrot.slane %v2982, 1
        %v2984 = vmax.f32 %v2982, %v2983
        %v2985 = vsel %vm2753, %v2568, -inf
        %v2986 = vrot.slane %v2985, 4
        %v2987 = vmax.f32 %v2985, %v2986
        %v2988 = vrot.slane %v2987, 2
        %v2989 = vmax.f32 %v2987, %v2988
        %v2990 = vrot.slane %v2989, 1
        %v2991 = vmax.f32 %v2989, %v2990
        %v2992 = vsel %vm2753, %v2567, -inf
        %v2993 = vrot.slane %v2992, 4
        %v2994 = vmax.f32 %v2992, %v2993
        %v2995 = vrot.slane %v2994, 2
        %v2996 = vmax.f32 %v2994, %v2995
        %v2997 = vrot.slane %v2996, 1
        %v2998 = vmax.f32 %v2996, %v2997
        %v2999 = vsel %vm2753, %v2569, -inf
        %v3000 = vrot.slane %v2999, 4
        %v3001 = vmax.f32 %v2999, %v3000
        %v3002 = vrot.slane %v3001, 2
        %v3003 = vmax.f32 %v3001, %v3002
        %v3004 = vrot.slane %v3003, 1
        %v3005 = vmax.f32 %v3003, %v3004
        %v3006 = vsel %vm2753, %v2577, -inf
        %v3007 = vrot.slane %v3006, 4
        %v3008 = vmax.f32 %v3006, %v3007
        %v3009 = vrot.slane %v3008, 2
        %v3010 = vmax.f32 %v3008, %v3009
        %v3011 = vrot.slane %v3010, 1
        %v3012 = vmax.f32 %v3010, %v3011
        %v3013 = vsel %vm2753, %v2585, -inf
        %v3014 = vrot.slane %v3013, 4
        %v3015 = vmax.f32 %v3013, %v3014
        %v3016 = vrot.slane %v3015, 2
        %v3017 = vmax.f32 %v3015, %v3016
        %v3018 = vrot.slane %v3017, 1
        %v3019 = vmax.f32 %v3017, %v3018
        %v3020 = vsel %vm2753, %v2584, -inf
        %v3021 = vrot.slane %v3020, 4
        %v3022 = vmax.f32 %v3020, %v3021
        %v3023 = vrot.slane %v3022, 2
        %v3024 = vmax.f32 %v3022, %v3023
        %v3025 = vrot.slane %v3024, 1
        %v3026 = vmax.f32 %v3024, %v3025
        %v3027 = vsel %vm2753, %v2586, -inf
        %v3028 = vrot.slane %v3027, 4
        %v3029 = vmax.f32 %v3027, %v3028
        %v3030 = vrot.slane %v3029, 2
        %v3031 = vmax.f32 %v3029, %v3030
        %v3032 = vrot.slane %v3031, 1
        %v3033 = vmax.f32 %v3031, %v3032
        %v3034 = vsel %vm2753, %v2594, -inf
        %v3035 = vrot.slane %v3034, 4
        %v3036 = vmax.f32 %v3034, %v3035
        %v3037 = vrot.slane %v3036, 2
        %v3038 = vmax.f32 %v3036, %v3037
        %v3039 = vrot.slane %v3038, 1
        %v3040 = vmax.f32 %v3038, %v3039
        %v3041 = vsel %vm2753, %v2602, -inf
        %v3042 = vrot.slane %v3041, 4
        %v3043 = vmax.f32 %v3041, %v3042
        %v3044 = vrot.slane %v3043, 2
        %v3045 = vmax.f32 %v3043, %v3044
        %v3046 = vrot.slane %v3045, 1
        %v3047 = vmax.f32 %v3045, %v3046
        %v3048 = vsel %vm2753, %v2601, -inf
        %v3049 = vrot.slane %v3048, 4
        %v3050 = vmax.f32 %v3048, %v3049
        %v3051 = vrot.slane %v3050, 2
        %v3052 = vmax.f32 %v3050, %v3051
        %v3053 = vrot.slane %v3052, 1
        %v3054 = vmax.f32 %v3052, %v3053
        %v3055 = vsel %vm2753, %v2603, -inf
        %v3056 = vrot.slane %v3055, 4
        %v3057 = vmax.f32 %v3055, %v3056
        %v3058 = vrot.slane %v3057, 2
        %v3059 = vmax.f32 %v3057, %v3058
        %v3060 = vrot.slane %v3059, 1
        %v3061 = vmax.f32 %v3059, %v3060
        %v3062 = vsel %vm2753, %v2611, -inf
        %v3063 = vrot.slane %v3062, 4
        %v3064 = vmax.f32 %v3062, %v3063
        %v3065 = vrot.slane %v3064, 2
        %v3066 = vmax.f32 %v3064, %v3065
        %v3067 = vrot.slane %v3066, 1
        %v3068 = vmax.f32 %v3066, %v3067
        %v3069 = vsel %vm2753, %v2619, -inf
        %v3070 = vrot.slane %v3069, 4
        %v3071 = vmax.f32 %v3069, %v3070
        %v3072 = vrot.slane %v3071, 2
        %v3073 = vmax.f32 %v3071, %v3072
        %v3074 = vrot.slane %v3073, 1
        %v3075 = vmax.f32 %v3073, %v3074
        %v3076 = vsel %vm2753, %v2618, -inf
        %v3077 = vrot.slane %v3076, 4
        %v3078 = vmax.f32 %v3076, %v3077
        %v3079 = vrot.slane %v3078, 2
        %v3080 = vmax.f32 %v3078, %v3079
        %v3081 = vrot.slane %v3080, 1
        %v3082 = vmax.f32 %v3080, %v3081
        %v3083 = vsel %vm2753, %v2620, -inf
        %v3084 = vrot.slane %v3083, 4
        %v3085 = vmax.f32 %v3083, %v3084
        %v3086 = vrot.slane %v3085, 2
        %v3087 = vmax.f32 %v3085, %v3086
        %v3088 = vrot.slane %v3087, 1
        %v3089 = vmax.f32 %v3087, %v3088
        %v3090 = vsel %vm2753, %v2628, -inf
        %v3091 = vrot.slane %v3090, 4
        %v3092 = vmax.f32 %v3090, %v3091
        %v3093 = vrot.slane %v3092, 2
        %v3094 = vmax.f32 %v3092, %v3093
        %v3095 = vrot.slane %v3094, 1
        %v3096 = vmax.f32 %v3094, %v3095
        %v3097 = vsel %vm2753, %v2636, -inf
        %v3098 = vrot.slane %v3097, 4
        %v3099 = vmax.f32 %v3097, %v3098
        %v3100 = vrot.slane %v3099, 2
        %v3101 = vmax.f32 %v3099, %v3100
        %v3102 = vrot.slane %v3101, 1
        %v3103 = vmax.f32 %v3101, %v3102
        %v3104 = vsel %vm2753, %v2635, -inf
        %v3105 = vrot.slane %v3104, 4
        %v3106 = vmax.f32 %v3104, %v3105
        %v3107 = vrot.slane %v3106, 2
        %v3108 = vmax.f32 %v3106, %v3107
        %v3109 = vrot.slane %v3108, 1
        %v3110 = vmax.f32 %v3108, %v3109
        %v3111 = vsel %vm2753, %v2637, -inf
        %v3112 = vrot.slane %v3111, 4
        %v3113 = vmax.f32 %v3111, %v3112
        %v3114 = vrot.slane %v3113, 2
        %v3115 = vmax.f32 %v3113, %v3114
        %v3116 = vrot.slane %v3115, 1
        %v3117 = vmax.f32 %v3115, %v3116
        %v3118 = vsel %vm2753, %v2645, -inf
        %v3119 = vrot.slane %v3118, 4
        %v3120 = vmax.f32 %v3118, %v3119
        %v3121 = vrot.slane %v3120, 2
        %v3122 = vmax.f32 %v3120, %v3121
        %v3123 = vrot.slane %v3122, 1
        %v3124 = vmax.f32 %v3122, %v3123
        %v3125 = vsel %vm2753, %v2653, -inf
        %v3126 = vrot.slane %v3125, 4
        %v3127 = vmax.f32 %v3125, %v3126
        %v3128 = vrot.slane %v3127, 2
        %v3129 = vmax.f32 %v3127, %v3128
        %v3130 = vrot.slane %v3129, 1
        %v3131 = vmax.f32 %v3129, %v3130
        %v3132 = vsel %vm2753, %v2652, -inf
        %v3133 = vrot.slane %v3132, 4
        %v3134 = vmax.f32 %v3132, %v3133
        %v3135 = vrot.slane %v3134, 2
        %v3136 = vmax.f32 %v3134, %v3135
        %v3137 = vrot.slane %v3136, 1
        %v3138 = vmax.f32 %v3136, %v3137
        %v3139 = vsel %vm2753, %v2654, -inf
        %v3140 = vrot.slane %v3139, 4
        %v3141 = vmax.f32 %v3139, %v3140
        %v3142 = vrot.slane %v3141, 2
        %v3143 = vmax.f32 %v3141, %v3142
        %v3144 = vrot.slane %v3143, 1
        %v3145 = vmax.f32 %v3143, %v3144
        %v3146 = vsel %vm2753, %v2662, -inf
        %v3147 = vrot.slane %v3146, 4
        %v3148 = vmax.f32 %v3146, %v3147
        %v3149 = vrot.slane %v3148, 2
        %v3150 = vmax.f32 %v3148, %v3149
        %v3151 = vrot.slane %v3150, 1
        %v3152 = vmax.f32 %v3150, %v3151
        %v3153 = vsel %vm2753, %v2670, -inf
        %v3154 = vrot.slane %v3153, 4
        %v3155 = vmax.f32 %v3153, %v3154
        %v3156 = vrot.slane %v3155, 2
        %v3157 = vmax.f32 %v3155, %v3156
        %v3158 = vrot.slane %v3157, 1
        %v3159 = vmax.f32 %v3157, %v3158
        %v3160 = vsel %vm2753, %v2669, -inf
        %v3161 = vrot.slane %v3160, 4
        %v3162 = vmax.f32 %v3160, %v3161
        %v3163 = vrot.slane %v3162, 2
        %v3164 = vmax.f32 %v3162, %v3163
        %v3165 = vrot.slane %v3164, 1
        %v3166 = vmax.f32 %v3164, %v3165
        %v3167 = vsel %vm2753, %v2671, -inf
        %v3168 = vrot.slane %v3167, 4
        %v3169 = vmax.f32 %v3167, %v3168
        %v3170 = vrot.slane %v3169, 2
        %v3171 = vmax.f32 %v3169, %v3170
        %v3172 = vrot.slane %v3171, 1
        %v3173 = vmax.f32 %v3171, %v3172
        %v3174 = vsel %vm2753, %v2679, -inf
        %v3175 = vrot.slane %v3174, 4
        %v3176 = vmax.f32 %v3174, %v3175
        %v3177 = vrot.slane %v3176, 2
        %v3178 = vmax.f32 %v3176, %v3177
        %v3179 = vrot.slane %v3178, 1
        %v3180 = vmax.f32 %v3178, %v3179
        %v3181 = vsel %vm2753, %v2687, -inf
        %v3182 = vrot.slane %v3181, 4
        %v3183 = vmax.f32 %v3181, %v3182
        %v3184 = vrot.slane %v3183, 2
        %v3185 = vmax.f32 %v3183, %v3184
        %v3186 = vrot.slane %v3185, 1
        %v3187 = vmax.f32 %v3185, %v3186
        %v3188 = vsel %vm2753, %v2686, -inf
        %v3189 = vrot.slane %v3188, 4
        %v3190 = vmax.f32 %v3188, %v3189
        %v3191 = vrot.slane %v3190, 2
        %v3192 = vmax.f32 %v3190, %v3191
        %v3193 = vrot.slane %v3192, 1
        %v3194 = vmax.f32 %v3192, %v3193
        %v3195 = vsel %vm2753, %v2688, -inf
        %v3196 = vrot.slane %v3195, 4
        %v3197 = vmax.f32 %v3195, %v3196
        %v3198 = vrot.slane %v3197, 2
        %v3199 = vmax.f32 %v3197, %v3198
        %v3200 = vrot.slane %v3199, 1
        %v3201 = vmax.f32 %v3199, %v3200
        %3202 = vst.msk [vmem:[#allocation4] sm:$0xff] %vm2352, 0.0
        %3203 = vst.msk [vmem:[#allocation4 + $0x8] sm:$0x3] %vm2753, 0.0
        %3204 = vst.msk [vmem:[#allocation4 + $0x10] sm:$0xff] %vm2352, 0.0
        %3205 = vst.msk [vmem:[#allocation4 + $0x18] sm:$0x3] %vm2753, 0.0
        %3206 = vst.msk [vmem:[#allocation4 + $0x20] sm:$0xff] %vm2352, 0.0
        %3207 = vst.msk [vmem:[#allocation4 + $0x28] sm:$0x3] %vm2753, 0.0
        %3208 = vst.msk [vmem:[#allocation4 + $0x30] sm:$0xff] %vm2352, 0.0
        %3209 = vst.msk [vmem:[#allocation4 + $0x38] sm:$0x3] %vm2753, 0.0
        %3210 = vst.msk [vmem:[#allocation4 + $0x40] sm:$0xff] %vm2352, 0.0
        %3211 = vst.msk [vmem:[#allocation4 + $0x48] sm:$0x3] %vm2753, 0.0
        %3212 = vst.msk [vmem:[#allocation4 + $0x50] sm:$0xff] %vm2352, 0.0
        %3213 = vst.msk [vmem:[#allocation4 + $0x58] sm:$0x3] %vm2753, 0.0
        %3214 = vst.msk [vmem:[#allocation4 + $0x60] sm:$0xff] %vm2352, 0.0
        %3215 = vst.msk [vmem:[#allocation4 + $0x68] sm:$0x3] %vm2753, 0.0
        %3216 = vst.msk [vmem:[#allocation4 + $0x70] sm:$0xff] %vm2352, 0.0
        %3217 = vst.msk [vmem:[#allocation4 + $0x78] sm:$0x3] %vm2753, 0.0
        %3218 = vst.msk [vmem:[#allocation4 + $0x80] sm:$0xff] %vm2352, 0.0
        %3219 = vst.msk [vmem:[#allocation4 + $0x88] sm:$0x3] %vm2753, 0.0
        %3220 = vst.msk [vmem:[#allocation4 + $0x90] sm:$0xff] %vm2352, 0.0
        %3221 = vst.msk [vmem:[#allocation4 + $0x98] sm:$0x3] %vm2753, 0.0
        %vm3286 = vcmask 1041409
        %v3287 = vsel %vm3286, %v2767, %v2760
        %vm3288 = vcmask 1042434
        %v3289 = vsel %vm3288, %v2774, %v3287
        %vm3290 = vcmask 1043459
        %v3291 = vsel %vm3290, %v2781, %v3289
        %vm3292 = vcmask 1044484
        %v3293 = vsel %vm3292, %v2788, %v3291
        %vm3294 = vcmask 1045509
        %v3295 = vsel %vm3294, %v2795, %v3293
        %vm3296 = vcmask 1046534
        %v3297 = vsel %vm3296, %v2802, %v3295
        %vm3298 = vcmask 1047559
        %v3299 = vsel %vm3298, %v2809, %v3297
        %v3300 = vsel %vm3286, %v2823, %v2816
        %v3301 = vsel %vm3288, %v2830, %v3300
        %v3302 = vsel %vm3290, %v2837, %v3301
        %v3303 = vsel %vm3292, %v2844, %v3302
        %v3304 = vsel %vm3294, %v2851, %v3303
        %v3305 = vsel %vm3296, %v2858, %v3304
        %v3306 = vsel %vm3298, %v2865, %v3305
        %v3307 = vsel %vm3286, %v2879, %v2872
        %v3308 = vsel %vm3288, %v2886, %v3307
        %v3309 = vsel %vm3290, %v2893, %v3308
        %v3310 = vsel %vm3292, %v2900, %v3309
        %v3311 = vsel %vm3294, %v2907, %v3310
        %v3312 = vsel %vm3296, %v2914, %v3311
        %v3313 = vsel %vm3298, %v2921, %v3312
        %v3314 = vsel %vm3286, %v2935, %v2928
        %v3315 = vsel %vm3288, %v2942, %v3314
        %v3316 = vsel %vm3290, %v2949, %v3315
        %v3317 = vsel %vm3292, %v2956, %v3316
        %v3318 = vsel %vm3294, %v2963, %v3317
        %v3319 = vsel %vm3296, %v2970, %v3318
        %v3320 = vsel %vm3298, %v2977, %v3319
        %v3321 = vsel %vm3286, %v2991, %v2984
        %v3322 = vsel %vm3288, %v2998, %v3321
        %v3323 = vsel %vm3290, %v3005, %v3322
        %v3324 = vsel %vm3292, %v3012, %v3323
        %v3325 = vsel %vm3294, %v3019, %v3324
        %v3326 = vsel %vm3296, %v3026, %v3325
        %v3327 = vsel %vm3298, %v3033, %v3326
        %v3328 = vsel %vm3286, %v3047, %v3040
        %v3329 = vsel %vm3288, %v3054, %v3328
        %v3330 = vsel %vm3290, %v3061, %v3329
        %v3331 = vsel %vm3292, %v3068, %v3330
        %v3332 = vsel %vm3294, %v3075, %v3331
        %v3333 = vsel %vm3296, %v3082, %v3332
        %v3334 = vsel %vm3298, %v3089, %v3333
        %v3335 = vsel %vm3286, %v3103, %v3096
        %v3336 = vsel %vm3288, %v3110, %v3335
        %v3337 = vsel %vm3290, %v3117, %v3336
        %v3338 = vsel %vm3292, %v3124, %v3337
        %v3339 = vsel %vm3294, %v3131, %v3338
        %v3340 = vsel %vm3296, %v3138, %v3339
        %v3341 = vsel %vm3298, %v3145, %v3340
        %v3342 = vsel %vm3286, %v3159, %v3152
        %v3343 = vsel %vm3288, %v3166, %v3342
        %v3344 = vsel %vm3290, %v3173, %v3343
        %v3345 = vsel %vm3292, %v3180, %v3344
        %v3346 = vsel %vm3294, %v3187, %v3345
        %v3347 = vsel %vm3296, %v3194, %v3346
        %v3348 = vsel %vm3298, %v3201, %v3347
        %s3357 = scalar_lea.vmem [#allocation4], 16
        %3358 = vst.msk [vmem:[%s3357 + $0x1] sm:$0xff] %vm2352, %v3299
        %3359 = vst.msk [vmem:[%s3357 + $0x11] sm:$0xff] %vm2352, %v3306
        %3360 = vst.msk [vmem:[%s3357 + $0x21] sm:$0xff] %vm2352, %v3313
        %3361 = vst.msk [vmem:[%s3357 + $0x31] sm:$0xff] %vm2352, %v3320
        %3362 = vst.msk [vmem:[%s3357 + $0x41] sm:$0xff] %vm2352, %v3327
        %3363 = vst.msk [vmem:[%s3357 + $0x51] sm:$0xff] %vm2352, %v3334
        %3364 = vst.msk [vmem:[%s3357 + $0x61] sm:$0xff] %vm2352, %v3341
        %3365 = vst.msk [vmem:[%s3357 + $0x71] sm:$0xff] %vm2352, %v3348
        %v3366 = vld [vmem:[#allocation4] sm:$0xff]
        %v3367 = vld [vmem:[#allocation4 + $0x10] sm:$0xff]
        %v3368 = vld [vmem:[#allocation4 + $0x20] sm:$0xff]
        %v3369 = vld [vmem:[#allocation4 + $0x30] sm:$0xff]
        %v3370 = vld [vmem:[#allocation4 + $0x40] sm:$0xff]
        %v3371 = vld [vmem:[#allocation4 + $0x50] sm:$0xff]
        %v3372 = vld [vmem:[#allocation4 + $0x60] sm:$0xff]
        %v3373 = vld [vmem:[#allocation4 + $0x70] sm:$0xff]
        %3374 = vst.msk [vmem:[#allocation5] sm:$0xff] %vm2352, %v3366
        %3375 = vst.msk [vmem:[#allocation5 + $0x10] sm:$0xff] %vm2352, %v3367
        %3376 = vst.msk [vmem:[#allocation5 + $0x20] sm:$0xff] %vm2352, %v3368
        %3377 = vst.msk [vmem:[#allocation5 + $0x30] sm:$0xff] %vm2352, %v3369
        %3378 = vst.msk [vmem:[#allocation5 + $0x40] sm:$0xff] %vm2352, %v3370
        %3379 = vst.msk [vmem:[#allocation5 + $0x50] sm:$0xff] %vm2352, %v3371
        %3380 = vst.msk [vmem:[#allocation5 + $0x60] sm:$0xff] %vm2352, %v3372
        %3381 = vst.msk [vmem:[#allocation5 + $0x70] sm:$0xff] %vm2352, %v3373
        %v3382 = vld [vmem:[#allocation4 + $0x1] sm:$0xff]
        %v3383 = vld [vmem:[#allocation4 + $0x11] sm:$0xff]
        %v3384 = vld [vmem:[#allocation4 + $0x21] sm:$0xff]
        %v3385 = vld [vmem:[#allocation4 + $0x31] sm:$0xff]
        %v3386 = vld [vmem:[#allocation4 + $0x41] sm:$0xff]
        %v3387 = vld [vmem:[#allocation4 + $0x51] sm:$0xff]
        %v3388 = vld [vmem:[#allocation4 + $0x61] sm:$0xff]
        %v3389 = vld [vmem:[#allocation4 + $0x71] sm:$0xff]
        %3398 = vrot.lane.b32.xlu0 %v3382, 16
        %v3399 = vpop.permute.xlu0 %3398
        %3400 = vrot.lane.b32.xlu0 %v3383, 16
        %v3401 = vpop.permute.xlu0 %3400
        %3402 = vrot.lane.b32.xlu0 %v3384, 16
        %v3403 = vpop.permute.xlu0 %3402
        %3404 = vrot.lane.b32.xlu0 %v3385, 16
        %v3405 = vpop.permute.xlu0 %3404
        %3406 = vrot.lane.b32.xlu0 %v3386, 16
        %v3407 = vpop.permute.xlu0 %3406
        %3408 = vrot.lane.b32.xlu0 %v3387, 16
        %v3409 = vpop.permute.xlu0 %3408
        %3410 = vrot.lane.b32.xlu0 %v3388, 16
        %v3411 = vpop.permute.xlu0 %3410
        %3412 = vrot.lane.b32.xlu0 %v3389, 16
        %v3413 = vpop.permute.xlu0 %3412
        %vm3422 = vcmask 261248
        %3423 = vst.msk [vmem:[#allocation5] sm:$0xff] %vm3422, %v3399
        %3424 = vst.msk [vmem:[#allocation5 + $0x10] sm:$0xff] %vm3422, %v3401
        %3425 = vst.msk [vmem:[#allocation5 + $0x20] sm:$0xff] %vm3422, %v3403
        %3426 = vst.msk [vmem:[#allocation5 + $0x30] sm:$0xff] %vm3422, %v3405
        %3427 = vst.msk [vmem:[#allocation5 + $0x40] sm:$0xff] %vm3422, %v3407
        %3428 = vst.msk [vmem:[#allocation5 + $0x50] sm:$0xff] %vm3422, %v3409
        %3429 = vst.msk [vmem:[#allocation5 + $0x60] sm:$0xff] %vm3422, %v3411
        %3430 = vst.msk [vmem:[#allocation5 + $0x70] sm:$0xff] %vm3422, %v3413
        %v3431 = vld [vmem:[#allocation4 + $0x2] sm:$0xff]
        %v3432 = vld [vmem:[#allocation4 + $0x12] sm:$0xff]
        %v3433 = vld [vmem:[#allocation4 + $0x22] sm:$0xff]
        %v3434 = vld [vmem:[#allocation4 + $0x32] sm:$0xff]
        %v3435 = vld [vmem:[#allocation4 + $0x42] sm:$0xff]
        %v3436 = vld [vmem:[#allocation4 + $0x52] sm:$0xff]
        %v3437 = vld [vmem:[#allocation4 + $0x62] sm:$0xff]
        %v3438 = vld [vmem:[#allocation4 + $0x72] sm:$0xff]
        %3447 = vrot.lane.b32.xlu0 %v3431, 32
        %v3448 = vpop.permute.xlu0 %3447
        %3449 = vrot.lane.b32.xlu0 %v3432, 32
        %v3450 = vpop.permute.xlu0 %3449
        %3451 = vrot.lane.b32.xlu0 %v3433, 32
        %v3452 = vpop.permute.xlu0 %3451
        %3453 = vrot.lane.b32.xlu0 %v3434, 32
        %v3454 = vpop.permute.xlu0 %3453
        %3455 = vrot.lane.b32.xlu0 %v3435, 32
        %v3456 = vpop.permute.xlu0 %3455
        %3457 = vrot.lane.b32.xlu0 %v3436, 32
        %v3458 = vpop.permute.xlu0 %3457
        %3459 = vrot.lane.b32.xlu0 %v3437, 32
        %v3460 = vpop.permute.xlu0 %3459
        %3461 = vrot.lane.b32.xlu0 %v3438, 32
        %v3462 = vpop.permute.xlu0 %3461
        %vm3471 = vcmask 392448
        %3472 = vst.msk [vmem:[#allocation5] sm:$0xff] %vm3471, %v3448
        %3473 = vst.msk [vmem:[#allocation5 + $0x10] sm:$0xff] %vm3471, %v3450
        %3474 = vst.msk [vmem:[#allocation5 + $0x20] sm:$0xff] %vm3471, %v3452
        %3475 = vst.msk [vmem:[#allocation5 + $0x30] sm:$0xff] %vm3471, %v3454
        %3476 = vst.msk [vmem:[#allocation5 + $0x40] sm:$0xff] %vm3471, %v3456
        %3477 = vst.msk [vmem:[#allocation5 + $0x50] sm:$0xff] %vm3471, %v3458
        %3478 = vst.msk [vmem:[#allocation5 + $0x60] sm:$0xff] %vm3471, %v3460
        %3479 = vst.msk [vmem:[#allocation5 + $0x70] sm:$0xff] %vm3471, %v3462
        %v3480 = vld [vmem:[%s3357] sm:$0xff]
        %v3481 = vld [vmem:[%s3357 + $0x10] sm:$0xff]
        %v3482 = vld [vmem:[%s3357 + $0x20] sm:$0xff]
        %v3483 = vld [vmem:[%s3357 + $0x30] sm:$0xff]
        %v3484 = vld [vmem:[%s3357 + $0x40] sm:$0xff]
        %v3485 = vld [vmem:[%s3357 + $0x50] sm:$0xff]
        %v3486 = vld [vmem:[%s3357 + $0x60] sm:$0xff]
        %v3487 = vld [vmem:[%s3357 + $0x70] sm:$0xff]
        %3496 = vrot.lane.b32.xlu0 %v3480, 48
        %v3497 = vpop.permute.xlu0 %3496
        %3498 = vrot.lane.b32.xlu0 %v3481, 48
        %v3499 = vpop.permute.xlu0 %3498
        %3500 = vrot.lane.b32.xlu0 %v3482, 48
        %v3501 = vpop.permute.xlu0 %3500
        %3502 = vrot.lane.b32.xlu0 %v3483, 48
        %v3503 = vpop.permute.xlu0 %3502
        %3504 = vrot.lane.b32.xlu0 %v3484, 48
        %v3505 = vpop.permute.xlu0 %3504
        %3506 = vrot.lane.b32.xlu0 %v3485, 48
        %v3507 = vpop.permute.xlu0 %3506
        %3508 = vrot.lane.b32.xlu0 %v3486, 48
        %v3509 = vpop.permute.xlu0 %3508
        %3510 = vrot.lane.b32.xlu0 %v3487, 48
        %v3511 = vpop.permute.xlu0 %3510
        %vm3520 = vcmask 523648
        %3521 = vst.msk [vmem:[#allocation5] sm:$0xff] %vm3520, %v3497
        %3522 = vst.msk [vmem:[#allocation5 + $0x10] sm:$0xff] %vm3520, %v3499
        %3523 = vst.msk [vmem:[#allocation5 + $0x20] sm:$0xff] %vm3520, %v3501
        %3524 = vst.msk [vmem:[#allocation5 + $0x30] sm:$0xff] %vm3520, %v3503
        %3525 = vst.msk [vmem:[#allocation5 + $0x40] sm:$0xff] %vm3520, %v3505
        %3526 = vst.msk [vmem:[#allocation5 + $0x50] sm:$0xff] %vm3520, %v3507
        %3527 = vst.msk [vmem:[#allocation5 + $0x60] sm:$0xff] %vm3520, %v3509
        %3528 = vst.msk [vmem:[#allocation5 + $0x70] sm:$0xff] %vm3520, %v3511
        %v3529 = vld [vmem:[%s3357 + $0x1] sm:$0xff]
        %v3530 = vld [vmem:[%s3357 + $0x11] sm:$0xff]
        %v3531 = vld [vmem:[%s3357 + $0x21] sm:$0xff]
        %v3532 = vld [vmem:[%s3357 + $0x31] sm:$0xff]
        %v3533 = vld [vmem:[%s3357 + $0x41] sm:$0xff]
        %v3534 = vld [vmem:[%s3357 + $0x51] sm:$0xff]
        %v3535 = vld [vmem:[%s3357 + $0x61] sm:$0xff]
        %v3536 = vld [vmem:[%s3357 + $0x71] sm:$0xff]
        %3545 = vrot.lane.b32.xlu0 %v3529, 64
        %v3546 = vpop.permute.xlu0 %3545
        %3547 = vrot.lane.b32.xlu0 %v3530, 64
        %v3548 = vpop.permute.xlu0 %3547
        %3549 = vrot.lane.b32.xlu0 %v3531, 64
        %v3550 = vpop.permute.xlu0 %3549
        %3551 = vrot.lane.b32.xlu0 %v3532, 64
        %v3552 = vpop.permute.xlu0 %3551
        %3553 = vrot.lane.b32.xlu0 %v3533, 64
        %v3554 = vpop.permute.xlu0 %3553
        %3555 = vrot.lane.b32.xlu0 %v3534, 64
        %v3556 = vpop.permute.xlu0 %3555
        %3557 = vrot.lane.b32.xlu0 %v3535, 64
        %v3558 = vpop.permute.xlu0 %3557
        %3559 = vrot.lane.b32.xlu0 %v3536, 64
        %v3560 = vpop.permute.xlu0 %3559
        %vm3569 = vcmask 654848
        %3570 = vst.msk [vmem:[#allocation5] sm:$0xff] %vm3569, %v3546
        %3571 = vst.msk [vmem:[#allocation5 + $0x10] sm:$0xff] %vm3569, %v3548
        %3572 = vst.msk [vmem:[#allocation5 + $0x20] sm:$0xff] %vm3569, %v3550
        %3573 = vst.msk [vmem:[#allocation5 + $0x30] sm:$0xff] %vm3569, %v3552
        %3574 = vst.msk [vmem:[#allocation5 + $0x40] sm:$0xff] %vm3569, %v3554
        %3575 = vst.msk [vmem:[#allocation5 + $0x50] sm:$0xff] %vm3569, %v3556
        %3576 = vst.msk [vmem:[#allocation5 + $0x60] sm:$0xff] %vm3569, %v3558
        %3577 = vst.msk [vmem:[#allocation5 + $0x70] sm:$0xff] %vm3569, %v3560
        %v3578 = vld [vmem:[%s3357 + $0x2] sm:$0xff]
        %v3579 = vld [vmem:[%s3357 + $0x12] sm:$0xff]
        %v3580 = vld [vmem:[%s3357 + $0x22] sm:$0xff]
        %v3581 = vld [vmem:[%s3357 + $0x32] sm:$0xff]
        %v3582 = vld [vmem:[%s3357 + $0x42] sm:$0xff]
        %v3583 = vld [vmem:[%s3357 + $0x52] sm:$0xff]
        %v3584 = vld [vmem:[%s3357 + $0x62] sm:$0xff]
        %v3585 = vld [vmem:[%s3357 + $0x72] sm:$0xff]
        %3594 = vrot.lane.b32.xlu0 %v3578, 80
        %v3595 = vpop.permute.xlu0 %3594
        %3596 = vrot.lane.b32.xlu0 %v3579, 80
        %v3597 = vpop.permute.xlu0 %3596
        %3598 = vrot.lane.b32.xlu0 %v3580, 80
        %v3599 = vpop.permute.xlu0 %3598
        %3600 = vrot.lane.b32.xlu0 %v3581, 80
        %v3601 = vpop.permute.xlu0 %3600
        %3602 = vrot.lane.b32.xlu0 %v3582, 80
        %v3603 = vpop.permute.xlu0 %3602
        %3604 = vrot.lane.b32.xlu0 %v3583, 80
        %v3605 = vpop.permute.xlu0 %3604
        %3606 = vrot.lane.b32.xlu0 %v3584, 80
        %v3607 = vpop.permute.xlu0 %3606
        %3608 = vrot.lane.b32.xlu0 %v3585, 80
        %v3609 = vpop.permute.xlu0 %3608
        %vm3618 = vcmask 786048
        %3619 = vst.msk [vmem:[#allocation5] sm:$0xff] %vm3618, %v3595
        %3620 = vst.msk [vmem:[#allocation5 + $0x10] sm:$0xff] %vm3618, %v3597
        %3621 = vst.msk [vmem:[#allocation5 + $0x20] sm:$0xff] %vm3618, %v3599
        %3622 = vst.msk [vmem:[#allocation5 + $0x30] sm:$0xff] %vm3618, %v3601
        %3623 = vst.msk [vmem:[#allocation5 + $0x40] sm:$0xff] %vm3618, %v3603
        %3624 = vst.msk [vmem:[#allocation5 + $0x50] sm:$0xff] %vm3618, %v3605
        %3625 = vst.msk [vmem:[#allocation5 + $0x60] sm:$0xff] %vm3618, %v3607
        %3626 = vst.msk [vmem:[#allocation5 + $0x70] sm:$0xff] %vm3618, %v3609
        %s3627 = scalar_lea.vmem [#allocation4], 32
        %v3628 = vld [vmem:[%s3627] sm:$0xff]
        %v3629 = vld [vmem:[%s3627 + $0x10] sm:$0xff]
        %v3630 = vld [vmem:[%s3627 + $0x20] sm:$0xff]
        %v3631 = vld [vmem:[%s3627 + $0x30] sm:$0xff]
        %v3632 = vld [vmem:[%s3627 + $0x40] sm:$0xff]
        %v3633 = vld [vmem:[%s3627 + $0x50] sm:$0xff]
        %v3634 = vld [vmem:[%s3627 + $0x60] sm:$0xff]
        %v3635 = vld [vmem:[%s3627 + $0x70] sm:$0xff]
        %3644 = vrot.lane.b32.xlu0 %v3628, 96
        %v3645 = vpop.permute.xlu0 %3644
        %3646 = vrot.lane.b32.xlu0 %v3629, 96
        %v3647 = vpop.permute.xlu0 %3646
        %3648 = vrot.lane.b32.xlu0 %v3630, 96
        %v3649 = vpop.permute.xlu0 %3648
        %3650 = vrot.lane.b32.xlu0 %v3631, 96
        %v3651 = vpop.permute.xlu0 %3650
        %3652 = vrot.lane.b32.xlu0 %v3632, 96
        %v3653 = vpop.permute.xlu0 %3652
        %3654 = vrot.lane.b32.xlu0 %v3633, 96
        %v3655 = vpop.permute.xlu0 %3654
        %3656 = vrot.lane.b32.xlu0 %v3634, 96
        %v3657 = vpop.permute.xlu0 %3656
        %3658 = vrot.lane.b32.xlu0 %v3635, 96
        %v3659 = vpop.permute.xlu0 %3658
        %vm3668 = vcmask 917248
        %3669 = vst.msk [vmem:[#allocation5] sm:$0xff] %vm3668, %v3645
        %3670 = vst.msk [vmem:[#allocation5 + $0x10] sm:$0xff] %vm3668, %v3647
        %3671 = vst.msk [vmem:[#allocation5 + $0x20] sm:$0xff] %vm3668, %v3649
        %3672 = vst.msk [vmem:[#allocation5 + $0x30] sm:$0xff] %vm3668, %v3651
        %3673 = vst.msk [vmem:[#allocation5 + $0x40] sm:$0xff] %vm3668, %v3653
        %3674 = vst.msk [vmem:[#allocation5 + $0x50] sm:$0xff] %vm3668, %v3655
        %3675 = vst.msk [vmem:[#allocation5 + $0x60] sm:$0xff] %vm3668, %v3657
        %3676 = vst.msk [vmem:[#allocation5 + $0x70] sm:$0xff] %vm3668, %v3659
        %v3677 = vld [vmem:[%s3627 + $0x1] sm:$0xff]
        %v3678 = vld [vmem:[%s3627 + $0x11] sm:$0xff]
        %v3679 = vld [vmem:[%s3627 + $0x21] sm:$0xff]
        %v3680 = vld [vmem:[%s3627 + $0x31] sm:$0xff]
        %v3681 = vld [vmem:[%s3627 + $0x41] sm:$0xff]
        %v3682 = vld [vmem:[%s3627 + $0x51] sm:$0xff]
        %v3683 = vld [vmem:[%s3627 + $0x61] sm:$0xff]
        %v3684 = vld [vmem:[%s3627 + $0x71] sm:$0xff]
        %3693 = vrot.lane.b32.xlu0 %v3677, 112
        %v3694 = vpop.permute.xlu0 %3693
        %3695 = vrot.lane.b32.xlu0 %v3678, 112
        %v3696 = vpop.permute.xlu0 %3695
        %3697 = vrot.lane.b32.xlu0 %v3679, 112
        %v3698 = vpop.permute.xlu0 %3697
        %3699 = vrot.lane.b32.xlu0 %v3680, 112
        %v3700 = vpop.permute.xlu0 %3699
        %3701 = vrot.lane.b32.xlu0 %v3681, 112
        %v3702 = vpop.permute.xlu0 %3701
        %3703 = vrot.lane.b32.xlu0 %v3682, 112
        %v3704 = vpop.permute.xlu0 %3703
        %3705 = vrot.lane.b32.xlu0 %v3683, 112
        %v3706 = vpop.permute.xlu0 %3705
        %3707 = vrot.lane.b32.xlu0 %v3684, 112
        %v3708 = vpop.permute.xlu0 %3707
        %vm3717 = vcmask 1048448
        %3718 = vst.msk [vmem:[#allocation5] sm:$0xff] %vm3717, %v3694
        %3719 = vst.msk [vmem:[#allocation5 + $0x10] sm:$0xff] %vm3717, %v3696
        %3720 = vst.msk [vmem:[#allocation5 + $0x20] sm:$0xff] %vm3717, %v3698
        %3721 = vst.msk [vmem:[#allocation5 + $0x30] sm:$0xff] %vm3717, %v3700
        %3722 = vst.msk [vmem:[#allocation5 + $0x40] sm:$0xff] %vm3717, %v3702
        %3723 = vst.msk [vmem:[#allocation5 + $0x50] sm:$0xff] %vm3717, %v3704
        %3724 = vst.msk [vmem:[#allocation5 + $0x60] sm:$0xff] %vm3717, %v3706
        %3725 = vst.msk [vmem:[#allocation5 + $0x70] sm:$0xff] %vm3717, %v3708
        %v3726 = vld [vmem:[%s3627 + $0x2] sm:$0xff]
        %v3727 = vld [vmem:[%s3627 + $0x12] sm:$0xff]
        %v3728 = vld [vmem:[%s3627 + $0x22] sm:$0xff]
        %v3729 = vld [vmem:[%s3627 + $0x32] sm:$0xff]
        %v3730 = vld [vmem:[%s3627 + $0x42] sm:$0xff]
        %v3731 = vld [vmem:[%s3627 + $0x52] sm:$0xff]
        %v3732 = vld [vmem:[%s3627 + $0x62] sm:$0xff]
        %v3733 = vld [vmem:[%s3627 + $0x72] sm:$0xff]
        %3734 = vst.msk [vmem:[#allocation5 + $0x8] sm:$0xff] %vm2352, %v3726
        %3735 = vst.msk [vmem:[#allocation5 + $0x18] sm:$0xff] %vm2352, %v3727
        %3736 = vst.msk [vmem:[#allocation5 + $0x28] sm:$0xff] %vm2352, %v3728
        %3737 = vst.msk [vmem:[#allocation5 + $0x38] sm:$0xff] %vm2352, %v3729
        %3738 = vst.msk [vmem:[#allocation5 + $0x48] sm:$0xff] %vm2352, %v3730
        %3739 = vst.msk [vmem:[#allocation5 + $0x58] sm:$0xff] %vm2352, %v3731
        %3740 = vst.msk [vmem:[#allocation5 + $0x68] sm:$0xff] %vm2352, %v3732
        %3741 = vst.msk [vmem:[#allocation5 + $0x78] sm:$0xff] %vm2352, %v3733
        %v3742 = vld [vmem:[#allocation5] sm:$0xff]
        %v3743 = vld [vmem:[#allocation5 + $0x8] sm:$0xff]
        %v3744 = vld [vmem:[#allocation5 + $0x10] sm:$0xff]
        %v3745 = vld [vmem:[#allocation5 + $0x18] sm:$0xff]
        %v3746 = vld [vmem:[#allocation5 + $0x20] sm:$0xff]
        %v3747 = vld [vmem:[#allocation5 + $0x28] sm:$0xff]
        %v3748 = vld [vmem:[#allocation5 + $0x30] sm:$0xff]
        %v3749 = vld [vmem:[#allocation5 + $0x38] sm:$0xff]
        %v3750 = vld [vmem:[#allocation5 + $0x40] sm:$0xff]
        %v3751 = vld [vmem:[#allocation5 + $0x48] sm:$0xff]
        %v3752 = vld [vmem:[#allocation5 + $0x50] sm:$0xff]
        %v3753 = vld [vmem:[#allocation5 + $0x58] sm:$0xff]
        %v3754 = vld [vmem:[#allocation5 + $0x60] sm:$0xff]
        %v3755 = vld [vmem:[#allocation5 + $0x68] sm:$0xff]
        %v3756 = vld [vmem:[#allocation5 + $0x70] sm:$0xff]
        %v3757 = vld [vmem:[#allocation5 + $0x78] sm:$0xff]
        %v3758 = vld [vmem:[%s3] sm:$0xff]
        %v3759 = vld [vmem:[%s3 + $0x8] sm:$0xff]
        %v3760 = vld [vmem:[%s3 + $0x10] sm:$0xff]
        %v3761 = vld [vmem:[%s3 + $0x18] sm:$0xff]
        %v3762 = vld [vmem:[%s3 + $0x20] sm:$0xff]
        %v3763 = vld [vmem:[%s3 + $0x28] sm:$0xff]
        %v3764 = vld [vmem:[%s3 + $0x30] sm:$0xff]
        %v3765 = vld [vmem:[%s3 + $0x38] sm:$0xff]
        %v3766 = vld [vmem:[%s3 + $0x40] sm:$0xff]
        %v3767 = vld [vmem:[%s3 + $0x48] sm:$0xff]
        %v3768 = vld [vmem:[%s3 + $0x50] sm:$0xff]
        %v3769 = vld [vmem:[%s3 + $0x58] sm:$0xff]
        %v3770 = vld [vmem:[%s3 + $0x60] sm:$0xff]
        %v3771 = vld [vmem:[%s3 + $0x68] sm:$0xff]
        %v3772 = vld [vmem:[%s3 + $0x70] sm:$0xff]
        %v3773 = vld [vmem:[%s3 + $0x78] sm:$0xff]
        %v3774 = vld [vmem:[%s3 + $0x80] sm:$0xff]
        %v3775 = vld [vmem:[%s3 + $0x88] sm:$0xff]
        %v3776 = vld [vmem:[%s4] sm:$0x1]
        %v3778 = vlaneseq
        %v3779 = vshrl.u32 %v3778, 7
        %v3780 = vsub.s32 0, %v3779
        %v3781 = vrot.slane %v3776, %v3780
        %v3784 = vsel %vm2352, %v3743, 0
        %v3787 = vsel %vm2352, %v3745, 0
        %v3790 = vsel %vm2352, %v3747, 0
        %v3793 = vsel %vm2352, %v3749, 0
        %v3796 = vsel %vm2352, %v3751, 0
        %v3799 = vsel %vm2352, %v3753, 0
        %v3802 = vsel %vm2352, %v3755, 0
        %v3805 = vsel %vm2352, %v3757, 0
        %3807 = vmatprep.subr.mxu0 0.0
        %3808 = vmatpush1.msra.mxu0 %v3773
        %3809 = vmatprep.subr.mxu0 0.0
        %3810 = vmatpush1.msra.mxu0 %v3772
        %3811 = vmatprep.subr.mxu0 0.0
        %3812 = vmatpush1.msra.mxu0 %v3771
        %3813 = vmatprep.subr.mxu0 0.0
        %3814 = vmatpush1.msra.mxu0 %v3770
        %3815 = vmatprep.subr.mxu0 0.0
        %3816 = vmatpush1.msra.mxu0 %v3769
        %3817 = vmatprep.subr.mxu0 0.0
        %3818 = vmatpush1.msra.mxu0 %v3768
        %3819 = vmatprep.subr.mxu0 0.0
        %3820 = vmatpush1.msra.mxu0 %v3767
        %3821 = vmatprep.subr.mxu0 0.0
        %3822 = vmatpush1.msra.mxu0 %v3766
        %3823 = vmatprep.subr.mxu0 0.0
        %3824 = vmatpush1.msra.mxu0 %v3765
        %3825 = vmatprep.subr.mxu0 0.0
        %3826 = vmatpush1.msra.mxu0 %v3764
        %3827 = vmatprep.subr.mxu0 0.0
        %3828 = vmatpush1.msra.mxu0 %v3763
        %3829 = vmatprep.subr.mxu0 0.0
        %3830 = vmatpush1.msra.mxu0 %v3762
        %3831 = vmatprep.subr.mxu0 0.0
        %3832 = vmatpush1.msra.mxu0 %v3761
        %3833 = vmatprep.subr.mxu0 0.0
        %3834 = vmatpush1.msra.mxu0 %v3760
        %3835 = vmatprep.subr.mxu0 0.0
        %3836 = vmatpush1.msra.mxu0 %v3759
        %3837 = vmatprep.subr.mxu0 0.0
        %3838 = vmatpush1.msra.mxu0 %v3758
        %3839 = vmatprep.subr.mxu0 0.0
        %3840 = vmatpush2.msra.mxu0 0.0
        %3841 = vmatprep.subr.mxu0 0.0
        %3842 = vmatpush2.msra.mxu0 0.0
        %3843 = vmatprep.subr.mxu0 0.0
        %3844 = vmatpush2.msra.mxu0 0.0
        %3845 = vmatprep.subr.mxu0 0.0
        %3846 = vmatpush2.msra.mxu0 0.0
        %3847 = vmatprep.subr.mxu0 0.0
        %3848 = vmatpush2.msra.mxu0 0.0
        %3849 = vmatprep.subr.mxu0 0.0
        %3850 = vmatpush2.msra.mxu0 0.0
        %3851 = vmatprep.subr.mxu0 0.0
        %3852 = vmatpush2.msra.mxu0 0.0
        %3853 = vmatprep.subr.mxu0 0.0
        %3854 = vmatpush2.msra.mxu0 0.0
        %3855 = vmatprep.subr.mxu0 0.0
        %3856 = vmatpush2.msra.mxu0 0.0
        %3857 = vmatprep.subr.mxu0 0.0
        %3858 = vmatpush2.msra.mxu0 0.0
        %3859 = vmatprep.subr.mxu0 0.0
        %3860 = vmatpush2.msra.mxu0 0.0
        %3861 = vmatprep.subr.mxu0 0.0
        %3862 = vmatpush2.msra.mxu0 0.0
        %3863 = vmatprep.subr.mxu0 0.0
        %3864 = vmatpush2.msra.mxu0 0.0
        %3865 = vmatprep.subr.mxu0 0.0
        %3866 = vmatpush2.msra.mxu0 0.0
        %3867 = vmatprep.subr.mxu0 0.0
        %3868 = vmatpush2.msra.mxu0 %v3775
        %3869 = vmatprep.subr.mxu0 0.0
        %3870 = vmatpush2.msra.mxu0 %v3774
        %3871 = vmatprep.mubr.f32.mxu0 %v3784
        %3872 = vmatmul.mubr.f32.gmra.mxu0 %v3742
        %v3873 = vpop.f32.mrf.mxu0
        %v3874 = vadd.f32 %v3781, %v3873
        %v3875 = vpop.f32.mrf.mxu0
        %3876 = vmatprep.mubr.f32.mxu0 %v3787
        %3877 = vmatmul.mubr.f32.gmra.mxu0 %v3744
        %v3878 = vpop.f32.mrf.mxu0
        %v3879 = vadd.f32 %v3781, %v3878
        %v3880 = vpop.f32.mrf.mxu0
        %3881 = vmatprep.mubr.f32.mxu0 %v3790
        %3882 = vmatmul.mubr.f32.gmra.mxu0 %v3746
        %v3883 = vpop.f32.mrf.mxu0
        %v3884 = vadd.f32 %v3781, %v3883
        %v3885 = vpop.f32.mrf.mxu0
        %3886 = vmatprep.mubr.f32.mxu0 %v3793
        %3887 = vmatmul.mubr.f32.gmra.mxu0 %v3748
        %v3888 = vpop.f32.mrf.mxu0
        %v3889 = vadd.f32 %v3781, %v3888
        %v3890 = vpop.f32.mrf.mxu0
        %3891 = vmatprep.mubr.f32.mxu0 %v3796
        %3892 = vmatmul.mubr.f32.gmra.mxu0 %v3750
        %v3893 = vpop.f32.mrf.mxu0
        %v3894 = vadd.f32 %v3781, %v3893
        %v3895 = vpop.f32.mrf.mxu0
        %3896 = vmatprep.mubr.f32.mxu0 %v3799
        %3897 = vmatmul.mubr.f32.gmra.mxu0 %v3752
        %v3898 = vpop.f32.mrf.mxu0
        %v3899 = vadd.f32 %v3781, %v3898
        %v3900 = vpop.f32.mrf.mxu0
        %3901 = vmatprep.mubr.f32.mxu0 %v3802
        %3902 = vmatmul.mubr.f32.gmra.mxu0 %v3754
        %v3903 = vpop.f32.mrf.mxu0
        %v3904 = vadd.f32 %v3781, %v3903
        %v3905 = vpop.f32.mrf.mxu0
        %3906 = vmatprep.mubr.f32.mxu0 %v3805
        %3907 = vmatmul.mubr.f32.gmra.mxu0 %v3756
        %v3908 = vpop.f32.mrf.mxu0
        %v3909 = vadd.f32 %v3781, %v3908
        %v3910 = vpop.f32.mrf.mxu0
        %3911 = vdwg.mxu0
        %v3912 = vmax.f32 %v3874, 0.0
        %v3913 = vmax.f32 %v3879, 0.0
        %v3914 = vmax.f32 %v3884, 0.0
        %v3915 = vmax.f32 %v3889, 0.0
        %v3916 = vmax.f32 %v3894, 0.0
        %v3917 = vmax.f32 %v3899, 0.0
        %v3918 = vmax.f32 %v3904, 0.0
        %v3919 = vmax.f32 %v3909, 0.0
        %vm3920 = vcmask 523264
        %v3921 = vsel %vm3920, %v3912, -inf
        %v3922 = vsel %vm3920, %v3913, -inf
        %v3923 = vmax.f32 %v3921, %v3922
        %v3924 = vsel %vm3920, %v3914, -inf
        %v3925 = vsel %vm3920, %v3915, -inf
        %v3926 = vmax.f32 %v3924, %v3925
        %v3927 = vsel %vm3920, %v3916, -inf
        %v3928 = vsel %vm3920, %v3917, -inf
        %v3929 = vmax.f32 %v3927, %v3928
        %v3930 = vsel %vm3920, %v3918, -inf
        %v3931 = vsel %vm3920, %v3919, -inf
        %v3932 = vmax.f32 %v3930, %v3931
        %v3937 = vcombine.high %v3923, %v3923
        %v3939 = vunpack.c.l.s4 1983009808
        %v3940 = vunpack.c.0.s8 %v3939
        %v3941 = vlaneseq
        %v3942 = vshrl.u32 %v3941, 7
        %v3943 = vsub.s32 %v3940, %v3942
        %v3944 = vrot.slane %v3923, %v3943
        %v3946 = vunpack.c.l.s4 1983009808
        %v3947 = vunpack.c.0.s8 %v3946
        %v3948 = vlaneseq
        %v3949 = vshrl.u32 %v3948, 7
        %v3950 = vsub.s32 %v3947, %v3949
        %v3951 = vrot.slane %v3937, %v3950
        %v3952 = vcombine.high %v3944, %v3944
        %v3953 = vcombine.high %v3951, %v3951
        %v3954 = vcombine.high %v3926, %v3926
        %v3956 = vunpack.c.l.s4 1983009808
        %v3957 = vunpack.c.0.s8 %v3956
        %v3958 = vlaneseq
        %v3959 = vshrl.u32 %v3958, 7
        %v3960 = vsub.s32 %v3957, %v3959
        %v3961 = vrot.slane %v3926, %v3960
        %v3963 = vunpack.c.l.s4 1983009808
        %v3964 = vunpack.c.0.s8 %v3963
        %v3965 = vlaneseq
        %v3966 = vshrl.u32 %v3965, 7
        %v3967 = vsub.s32 %v3964, %v3966
        %v3968 = vrot.slane %v3954, %v3967
        %v3969 = vcombine.high %v3961, %v3961
        %v3970 = vcombine.high %v3968, %v3968
        %v3971 = vcombine.high %v3929, %v3929
        %v3973 = vunpack.c.l.s4 1983009808
        %v3974 = vunpack.c.0.s8 %v3973
        %v3975 = vlaneseq
        %v3976 = vshrl.u32 %v3975, 7
        %v3977 = vsub.s32 %v3974, %v3976
        %v3978 = vrot.slane %v3929, %v3977
        %v3980 = vunpack.c.l.s4 1983009808
        %v3981 = vunpack.c.0.s8 %v3980
        %v3982 = vlaneseq
        %v3983 = vshrl.u32 %v3982, 7
        %v3984 = vsub.s32 %v3981, %v3983
        %v3985 = vrot.slane %v3971, %v3984
        %v3986 = vcombine.high %v3978, %v3978
        %v3987 = vcombine.high %v3985, %v3985
        %v3988 = vcombine.high %v3932, %v3932
        %v3990 = vunpack.c.l.s4 1983009808
        %v3991 = vunpack.c.0.s8 %v3990
        %v3992 = vlaneseq
        %v3993 = vshrl.u32 %v3992, 7
        %v3994 = vsub.s32 %v3991, %v3993
        %v3995 = vrot.slane %v3932, %v3994
        %v3997 = vunpack.c.l.s4 1983009808
        %v3998 = vunpack.c.0.s8 %v3997
        %v3999 = vlaneseq
        %v4000 = vshrl.u32 %v3999, 7
        %v4001 = vsub.s32 %v3998, %v4000
        %v4002 = vrot.slane %v3988, %v4001
        %v4003 = vcombine.high %v3995, %v3995
        %v4004 = vcombine.high %v4002, %v4002
        %vm4021 = vcmask 517120
        %v4022 = vsel %vm4021, %v3944, -inf
        %v4023 = vrot.slane %v4022, 4
        %v4024 = vmax.f32 %v4022, %v4023
        %v4025 = vrot.slane %v4024, 2
        %v4026 = vmax.f32 %v4024, %v4025
        %v4027 = vrot.slane %v4026, 1
        %v4028 = vmax.f32 %v4026, %v4027
        %v4029 = vsel %vm4021, %v3952, -inf
        %v4030 = vrot.slane %v4029, 4
        %v4031 = vmax.f32 %v4029, %v4030
        %v4032 = vrot.slane %v4031, 2
        %v4033 = vmax.f32 %v4031, %v4032
        %v4034 = vrot.slane %v4033, 1
        %v4035 = vmax.f32 %v4033, %v4034
        %v4036 = vsel %vm4021, %v3951, -inf
        %v4037 = vrot.slane %v4036, 4
        %v4038 = vmax.f32 %v4036, %v4037
        %v4039 = vrot.slane %v4038, 2
        %v4040 = vmax.f32 %v4038, %v4039
        %v4041 = vrot.slane %v4040, 1
        %v4042 = vmax.f32 %v4040, %v4041
        %v4043 = vsel %vm4021, %v3953, -inf
        %v4044 = vrot.slane %v4043, 4
        %v4045 = vmax.f32 %v4043, %v4044
        %v4046 = vrot.slane %v4045, 2
        %v4047 = vmax.f32 %v4045, %v4046
        %v4048 = vrot.slane %v4047, 1
        %v4049 = vmax.f32 %v4047, %v4048
        %v4050 = vsel %vm4021, %v3961, -inf
        %v4051 = vrot.slane %v4050, 4
        %v4052 = vmax.f32 %v4050, %v4051
        %v4053 = vrot.slane %v4052, 2
        %v4054 = vmax.f32 %v4052, %v4053
        %v4055 = vrot.slane %v4054, 1
        %v4056 = vmax.f32 %v4054, %v4055
        %v4057 = vsel %vm4021, %v3969, -inf
        %v4058 = vrot.slane %v4057, 4
        %v4059 = vmax.f32 %v4057, %v4058
        %v4060 = vrot.slane %v4059, 2
        %v4061 = vmax.f32 %v4059, %v4060
        %v4062 = vrot.slane %v4061, 1
        %v4063 = vmax.f32 %v4061, %v4062
        %v4064 = vsel %vm4021, %v3968, -inf
        %v4065 = vrot.slane %v4064, 4
        %v4066 = vmax.f32 %v4064, %v4065
        %v4067 = vrot.slane %v4066, 2
        %v4068 = vmax.f32 %v4066, %v4067
        %v4069 = vrot.slane %v4068, 1
        %v4070 = vmax.f32 %v4068, %v4069
        %v4071 = vsel %vm4021, %v3970, -inf
        %v4072 = vrot.slane %v4071, 4
        %v4073 = vmax.f32 %v4071, %v4072
        %v4074 = vrot.slane %v4073, 2
        %v4075 = vmax.f32 %v4073, %v4074
        %v4076 = vrot.slane %v4075, 1
        %v4077 = vmax.f32 %v4075, %v4076
        %v4078 = vsel %vm4021, %v3978, -inf
        %v4079 = vrot.slane %v4078, 4
        %v4080 = vmax.f32 %v4078, %v4079
        %v4081 = vrot.slane %v4080, 2
        %v4082 = vmax.f32 %v4080, %v4081
        %v4083 = vrot.slane %v4082, 1
        %v4084 = vmax.f32 %v4082, %v4083
        %v4085 = vsel %vm4021, %v3986, -inf
        %v4086 = vrot.slane %v4085, 4
        %v4087 = vmax.f32 %v4085, %v4086
        %v4088 = vrot.slane %v4087, 2
        %v4089 = vmax.f32 %v4087, %v4088
        %v4090 = vrot.slane %v4089, 1
        %v4091 = vmax.f32 %v4089, %v4090
        %v4092 = vsel %vm4021, %v3985, -inf
        %v4093 = vrot.slane %v4092, 4
        %v4094 = vmax.f32 %v4092, %v4093
        %v4095 = vrot.slane %v4094, 2
        %v4096 = vmax.f32 %v4094, %v4095
        %v4097 = vrot.slane %v4096, 1
        %v4098 = vmax.f32 %v4096, %v4097
        %v4099 = vsel %vm4021, %v3987, -inf
        %v4100 = vrot.slane %v4099, 4
        %v4101 = vmax.f32 %v4099, %v4100
        %v4102 = vrot.slane %v4101, 2
        %v4103 = vmax.f32 %v4101, %v4102
        %v4104 = vrot.slane %v4103, 1
        %v4105 = vmax.f32 %v4103, %v4104
        %v4106 = vsel %vm4021, %v3995, -inf
        %v4107 = vrot.slane %v4106, 4
        %v4108 = vmax.f32 %v4106, %v4107
        %v4109 = vrot.slane %v4108, 2
        %v4110 = vmax.f32 %v4108, %v4109
        %v4111 = vrot.slane %v4110, 1
        %v4112 = vmax.f32 %v4110, %v4111
        %v4113 = vsel %vm4021, %v4003, -inf
        %v4114 = vrot.slane %v4113, 4
        %v4115 = vmax.f32 %v4113, %v4114
        %v4116 = vrot.slane %v4115, 2
        %v4117 = vmax.f32 %v4115, %v4116
        %v4118 = vrot.slane %v4117, 1
        %v4119 = vmax.f32 %v4117, %v4118
        %v4120 = vsel %vm4021, %v4002, -inf
        %v4121 = vrot.slane %v4120, 4
        %v4122 = vmax.f32 %v4120, %v4121
        %v4123 = vrot.slane %v4122, 2
        %v4124 = vmax.f32 %v4122, %v4123
        %v4125 = vrot.slane %v4124, 1
        %v4126 = vmax.f32 %v4124, %v4125
        %v4127 = vsel %vm4021, %v4004, -inf
        %v4128 = vrot.slane %v4127, 4
        %v4129 = vmax.f32 %v4127, %v4128
        %v4130 = vrot.slane %v4129, 2
        %v4131 = vmax.f32 %v4129, %v4130
        %v4132 = vrot.slane %v4131, 1
        %v4133 = vmax.f32 %v4131, %v4132
        %v4150 = vsel %vm3286, %v4035, %v4028
        %v4151 = vsel %vm3288, %v4042, %v4150
        %v4152 = vsel %vm3290, %v4049, %v4151
        %v4153 = vsel %vm3292, %v4056, %v4152
        %v4154 = vsel %vm3294, %v4063, %v4153
        %v4155 = vsel %vm3296, %v4070, %v4154
        %v4156 = vsel %vm3298, %v4077, %v4155
        %v4157 = vsel %vm3286, %v4091, %v4084
        %v4158 = vsel %vm3288, %v4098, %v4157
        %v4159 = vsel %vm3290, %v4105, %v4158
        %v4160 = vsel %vm3292, %v4112, %v4159
        %v4161 = vsel %vm3294, %v4119, %v4160
        %v4162 = vsel %vm3296, %v4126, %v4161
        %v4163 = vsel %vm3298, %v4133, %v4162
        %4166 = vst.msk [vmem:[%s217] sm:$0xff] %vm3920, %v4156
        %4167 = vst.msk [vmem:[%s217 + $0x8] sm:$0xff] %vm3920, %v4163
        %s4168 = sand.u32 %s137, 1
        %s4169 = scalar_lea.sflag [#allocation7], %s4168
        %s4170 = sand.u32 %s137, 1
        %s4171 = smul.addr %s4170, 16
        %s4172 = scalar_lea.vmem [#allocation6], %s4171
        // Predicated region
        $region41: #{structure_encoder.1} parent=39 // pred_check
          %p4173 = pneg %p147
        $region42: #{structure_encoder.1} parent=39 // pred_check_branch
          %4175 = sbr.rel (%p4173) target = $region44
        $region43: #{structure_encoder.1} parent=39 // pred_region
          %s4177 = ssub.s32 256, 256
          %4178 = vsyncadd %s4169, %s4177
          %s4179 = smul.addr %s19, 2
          %s4180 = smul.addr %s4179, 128
          %s4181 = scalar_lea.hbm %s5, %s4180
          %s4182 = sshll.u32 %s4172, 4
          %s4183 = int_to_ptr.vmem [resolvable:$true] %s4182
          %4188 = dma.vmem_to_hbm [thread:$0]  %s4183, 256, %s4181, %s4169, 128, 128, 8
        $region44: #{structure_encoder.1} parent=39 // pred_fallthru
          _
      $region40: #{structure_encoder.1} parent=5 // pred_fallthru
        _
      %p4189 = scmp.le.s32.totalorder 2, %s14
      // Predicated region
      $region45: #{structure_encoder.1} parent=5 // pred_check
        %p4190 = pneg %p4189
      $region46: #{structure_encoder.1} parent=5 // pred_check_branch
        %4192 = sbr.rel (%p4190) target = $region48
      $region47: #{structure_encoder.1} parent=5 // pred_region
        %s4193 = ssub.s32 %s14, 2
        // Predicated region
        $region49: #{structure_encoder.1} parent=47 // pred_check
          %p4194 = pneg %p153
        $region50: #{structure_encoder.1} parent=47 // pred_check_branch
          %4196 = sbr.rel (%p4194) target = $region52
        $region51: #{structure_encoder.1} parent=47 // pred_region
          %s4197 = sand.u32 %s138, 1
          %s4198 = scalar_lea.sflag [#allocation7], %s4197
          %s4199 = sand.u32 %s138, 1
          %s4200 = smul.addr %s4199, 16
          %s4201 = scalar_lea.vmem [#allocation6], %s4200
          %4202 = dma.done %s4198, 256
        $region52: #{structure_encoder.1} parent=47 // pred_fallthru
          _
      $region48: #{structure_encoder.1} parent=5 // pred_fallthru
        _
    $region6: #{structure_encoder.1} parent=1 // loop_footer
      %s18 = sadd.s32 1, %s14
    $region7: #{structure_encoder.1} parent=1 // loop_footer_branch
      %13 = sbr.rel target = $region3
    $region8: #{structure_encoder.1} parent=1 // loop_exit
      _
    %4203 = vsyncpa [#allocation7], 1
    %s4204 = scalar_lea.sflag [#allocation7], 1
    %4205 = vsyncpa %s4204, 1

</llo_original>
